<compile_context>
chip_gen: v6e
topology: v6e:2x2x1
jax: 0.10.0
libtpu: 0.0.40
codegen_flags: <defaults>
</compile_context>

<pallas_src>
import jax
import jax.numpy as jnp
from jax import lax
from jax.experimental import pallas as pl
from jax.experimental.pallas import tpu as pltpu

PAD_ID = 1            # attention_mask = ids.ne(1)
BATCH_TILE = 128      # rows per encoder grid step (raise to 256 on v6e/v7x if VMEM allows)
_NEG = -1.0e30


def _round_up(x, m):
    return ((x + m - 1) // m) * m


def _pick_tile(n):
    """Batch-tile: as close to BATCH_TILE as possible, but keep >=2 grid steps when
    the batch allows so v7x's two TensorCores both get 'parallel' work."""
    half = _round_up(max(1, -(-n // 2)), 8)
    return max(8, min(BATCH_TILE, half))


def _sigmoid(x):
    # one EUP transcendental (tanh) instead of exp + f32 divide
    return 0.5 * (jnp.tanh(0.5 * x) + 1.0)


def _gru_cell(x_gates, h, w_hh, b_hh, r):
    """PyTorch GRU cell, gate order (r, z, n). x_gates/h: f32, w_hh: bf16 (R, 3R)."""
    hh = jnp.dot(h.astype(jnp.bfloat16), w_hh,
                 preferred_element_type=jnp.float32) + b_hh
    rg = _sigmoid(x_gates[:, 0:r] + hh[:, 0:r])
    zg = _sigmoid(x_gates[:, r:2 * r] + hh[:, r:2 * r])
    ng = jnp.tanh(x_gates[:, 2 * r:3 * r] + rg * hh[:, 2 * r:3 * r])
    return (1.0 - zg) * ng + zg * h


# ---------------------------------------------------------------------------
# Kernel 1: embedding lookup + 2-layer GRU + length-based mean pooling
# ---------------------------------------------------------------------------
def _encoder_kernel(ids_ref, emb_w0_ref, b_ih0_ref, w_hh0_ref, b_hh0_ref,
                    w_ih1_ref, w_hh1_ref, b_ih1_ref, b_hh1_ref,
                    out_ref, x0_sc):
    tn, s = ids_ref.shape
    vpad = emb_w0_ref.shape[0]
    r = w_hh0_ref.shape[0]

    ids_i = ids_ref[...]                                          # (TN, S) int32
    # valid-token count per row; pooling = mean over first `length` GRU outputs,
    # exactly PyTorch's `mean(padded[0][i][:ln])` (trailing-pad assumption as in ref)
    lengths = jnp.sum((ids_i != PAD_ID).astype(jnp.int32),
                      axis=1, keepdims=True)                      # (TN, 1) int32

    ids_tm = jnp.transpose(ids_i)                                 # (S, TN) time-major
    # lane-dense one-hot over the 128-padded vocab, built from an int32 compare
    onehot = (ids_tm[:, :, None] ==
              lax.broadcasted_iota(jnp.int32, (s, tn, vpad), 2)
              ).astype(jnp.bfloat16).reshape(s * tn, vpad)
    # fused embedding gather + layer-0 input projection: onehot @ (E @ W_ih0)
    x0 = jnp.dot(onehot, emb_w0_ref[...],
                 preferred_element_type=jnp.float32) + b_ih0_ref[...]
    x0_sc[...] = x0.reshape(s, tn, 3 * r).astype(jnp.bfloat16)    # bf16 scratch

    w_hh0 = w_hh0_ref[...]
    b_hh0 = b_hh0_ref[...]
    w_ih1 = w_ih1_ref[...]
    w_hh1 = w_hh1_ref[...]
    b_ih1 = b_ih1_ref[...]
    b_hh1 = b_hh1_ref[...]

    def step(t, carry):
        h0, h1, acc = carry
        x0_t = x0_sc[t].astype(jnp.float32)
        h0 = _gru_cell(x0_t, h0, w_hh0, b_hh0, r)
        x1 = jnp.dot(h0.astype(jnp.bfloat16), w_ih1,
                     preferred_element_type=jnp.float32) + b_ih1
        h1 = _gru_cell(x1, h1, w_hh1, b_hh1, r)
        acc = acc + jnp.where(lengths > t, h1, 0.0)               # t < length pooling
        return (h0, h1, acc)

    zeros = jnp.zeros((tn, r), jnp.float32)
    _, _, acc = lax.fori_loop(0, s, step, (zeros, zeros, zeros),
                              unroll=True if s <= 32 else 8)

    denom = jnp.maximum(lengths.astype(jnp.float32), 1.0)         # (TN, 1)
    out_ref[...] = acc / denom                                    # exact mean


def encoder_pool(params, ids):
    n, s = ids.shape
    r = params['w_hh0'].shape[0]
    tn = _pick_tile(n)
    n_pad = _round_up(n, tn)
    if n_pad != n:                                  # pad batch with all-pad rows
        ids = jnp.pad(ids, ((0, n_pad - n), (0, 0)), constant_values=PAD_ID)

    # Fold the embedding table into the layer-0 input projection and pad the vocab
    # dim to a multiple of 128 so the MXU contraction is lane-dense.
    emb = params['emb']
    v = emb.shape[0]
    vpad = _round_up(v, 128)
    emb_w0 = jnp.dot(emb, params['w_ih0'],
                     preferred_element_type=jnp.float32)          # (V, 3R) f32
    if vpad != v:
        emb_w0 = jnp.pad(emb_w0, ((0, vpad - v), (0, 0)))
    emb_w0 = emb_w0.astype(jnp.bfloat16)

    def full_spec(arr):
        return pl.BlockSpec(arr.shape, lambda i, _nd=arr.ndim: (0,) * _nd)

    weights = (emb_w0, params['b_ih0'],
               params['w_hh0'], params['b_hh0'],
               params['w_ih1'], params['w_hh1'],
               params['b_ih1'], params['b_hh1'])

    pooled = pl.pallas_call(
        _encoder_kernel,
        out_shape=jax.ShapeDtypeStruct((n_pad, r), jnp.float32),
        grid_spec=pltpu.PrefetchScalarGridSpec(
            num_scalar_prefetch=0,
            grid=(n_pad // tn,),
            in_specs=[pl.BlockSpec((tn, s), lambda i: (i, 0))]
                     + [full_spec(w) for w in weights],
            out_specs=pl.BlockSpec((tn, r), lambda i: (i, 0)),
            scratch_shapes=[pltpu.VMEM((s, tn, 3 * r), jnp.bfloat16)],
        ),
        compiler_params=pltpu.CompilerParams(
            dimension_semantics=("parallel",),
            vmem_limit_bytes=64 * 1024 * 1024),
    )(ids, *weights)
    return pooled[:n]


# ---------------------------------------------------------------------------
# Kernel 2: scores = nl @ code^T ; CE(scores, arange(B))  (fused, lane-dense output)
# ---------------------------------------------------------------------------
def score_and_ce(nl_vec, code_vec):
    bn, r = nl_vec.shape
    bc = code_vec.shape[0]
    assert bn == bc, "CE with arange targets assumes a square score matrix"
    bn_pad = _round_up(bn, 8)
    bc_pad = _round_up(bc, 128)                     # lane-dense scores output
    nl_p = jnp.pad(nl_vec, ((0, bn_pad - bn), (0, 0)))
    code_p = jnp.pad(code_vec, ((0, bc_pad - bc), (0, 0)))

    def kernel(nl_ref, code_ref, scores_ref, loss_ref):
        nl = nl_ref[...].astype(jnp.bfloat16)
        code = code_ref[...].astype(jnp.bfloat16)
        # contract the shared hidden dim directly (no materialized transpose)
        scores = lax.dot_general(nl, code,
                                 dimension_numbers=(((1,), (1,)), ((), ())),
                                 preferred_element_type=jnp.float32)   # (Bn_p, Bc_p)
        scores_ref[...] = scores

        row = lax.broadcasted_iota(jnp.int32, (bn_pad, bc_pad), 0)
        col = lax.broadcasted_iota(jnp.int32, (bn_pad, bc_pad), 1)
        s_m = jnp.where(col < bc, scores, _NEG)                  # mask padded cols
        m = jnp.max(s_m, axis=-1, keepdims=True)
        lse = m + jnp.log(jnp.sum(jnp.exp(s_m - m), axis=-1, keepdims=True))
        diag = jnp.sum(jnp.where(row == col, scores, 0.0), axis=-1, keepdims=True)
        row_valid = lax.broadcasted_iota(jnp.int32, (bn_pad, 1), 0) < bn
        loss_ref[0, 0] = jnp.sum(jnp.where(row_valid, lse - diag, 0.0)) / bn

    scores, loss = pl.pallas_call(
        kernel,
        out_shape=(jax.ShapeDtypeStruct((bn_pad, bc_pad), jnp.float32),
                   jax.ShapeDtypeStruct((1, 1), jnp.float32)),
        out_specs=(pl.BlockSpec(memory_space=pltpu.MemorySpace.VMEM),
                   pl.BlockSpec(memory_space=pltpu.MemorySpace.SMEM)),
    )(nl_p, code_p)
    return scores[:bn, :bc], loss[0, 0]


# ---------------------------------------------------------------------------
# Full forward (mirrors CODEnn.forward, CrossEntropyLoss branch)
# ---------------------------------------------------------------------------
@jax.jit
def forward(params, code_inputs, nl_inputs, labels):
    n_code = code_inputs.shape[0]
    n_nl = nl_inputs.shape[0]
    s = max(code_inputs.shape[1], nl_inputs.shape[1])

    def pad_seq(x):
        if x.shape[1] < s:
            x = jnp.pad(x, ((0, 0), (0, s - x.shape[1])), constant_values=PAD_ID)
        return x

    # one pallas_call for both encoders: weights resident once, deeper parallel grid
    both = jnp.concatenate([pad_seq(code_inputs), pad_seq(nl_inputs)], axis=0)
    pooled = encoder_pool(params, both)
    code_vec = pooled[:n_code]                        # encoder(code, code.ne(1))[1]
    nl_vec = pooled[n_code:n_code + n_nl]             # encoder(nl,   nl.ne(1))[1]

    scores, loss = score_and_ce(nl_vec, code_vec)     # nl_vec.mm(code_vec.T); CE
    empty = jnp.zeros((0,), jnp.float32)              # torch.Tensor(0) stand-in
    loss_dict = {'all': loss, 'loss_positive': empty, 'loss_negative': empty}
    predictions = labels
    return loss_dict, predictions, scores


# ---------------------------------------------------------------------------
def init_params(key, vocab=64, hidden=128, rnn_size=128):
    ks = jax.random.split(key, 9)
    k0 = 1.0 / (rnn_size ** 0.5)

    def u(k, shape):
        return jax.random.uniform(k, shape, jnp.float32, -k0, k0)

    emb = 0.02 * jax.random.normal(ks[0], (vocab, hidden), jnp.float32)
    emb = emb.at[PAD_ID].set(0.0)                      # nn.Embedding padding_idx
    return {
        'emb':   emb.astype(jnp.bfloat16),
        'w_ih0': u(ks[1], (hidden, 3 * rnn_size)).astype(jnp.bfloat16),
        'w_hh0': u(ks[2], (rnn_size, 3 * rnn_size)).astype(jnp.bfloat16),
        'b_ih0': u(ks[3], (1, 3 * rnn_size)),
        'b_hh0': u(ks[4], (1, 3 * rnn_size)),
        'w_ih1': u(ks[5], (rnn_size, 3 * rnn_size)).astype(jnp.bfloat16),
        'w_hh1': u(ks[6], (rnn_size, 3 * rnn_size)).astype(jnp.bfloat16),
        'b_ih1': u(ks[7], (1, 3 * rnn_size)),
        'b_hh1': u(ks[8], (1, 3 * rnn_size)),
    }


if __name__ == "__main__":
    key = jax.random.PRNGKey(0)
    kp, kc, kn = jax.random.split(key, 3)

    VOCAB, HIDDEN, RNN, SEQ, B = 64, 128, 128, 8, 16   # lane-dense hidden dims
    params = init_params(kp, vocab=VOCAB, hidden=HIDDEN, rnn_size=RNN)

    # token ids in [2, VOCAB); pad id == 1 (RoBERTa-style `.ne(1)` masking)
    code_inputs = jax.random.randint(kc, (B, SEQ), 2, VOCAB, dtype=jnp.int32)
    code_inputs = code_inputs.at[:, -2:].set(PAD_ID)   # trailing padding
    nl_inputs = jax.random.randint(kn, (B, SEQ), 2, VOCAB, dtype=jnp.int32)
    nl_inputs = nl_inputs.at[:, -1:].set(PAD_ID)
    labels = jnp.ones((B,), jnp.float32)               # 1 = matched

    loss_dict, predictions, scores = forward(params, code_inputs, nl_inputs, labels)
    jax.block_until_ready((loss_dict, predictions, scores))

    assert scores.shape == (B, B)
    assert predictions.shape == (B,)
    assert loss_dict['all'].shape == ()
    assert bool(jnp.isfinite(loss_dict['all']))
    assert bool(jnp.isfinite(scores).all())
    print("KERNEL_OK")
</pallas_src>

<mosaic_0001>
module attributes {stable_mosaic.version = 11 : i64} {
  func.func @kernel(%arg0: memref<16x128xf32, #tpu.memory_space<vmem>>, %arg1: memref<128x128xf32, #tpu.memory_space<vmem>>, %arg2: memref<16x128xf32, #tpu.memory_space<vmem>>, %arg3: memref<1x1xf32, #tpu.memory_space<smem>>) attributes {dimension_semantics = [], scalar_prefetch = 0 : i64, scratch_operands = 0 : i64, tpu.core_type = #tpu.core_type<tc>} {
    %c0 = arith.constant 0 : index
    %c0_0 = arith.constant 0 : index
    %0 = vector.load %arg0[%c0, %c0_0] : memref<16x128xf32, #tpu.memory_space<vmem>>, vector<16x128xf32>
    %1 = arith.truncf %0 : vector<16x128xf32> to vector<16x128xbf16>
    %c0_1 = arith.constant 0 : index
    %c0_2 = arith.constant 0 : index
    %2 = vector.load %arg1[%c0_1, %c0_2] : memref<128x128xf32, #tpu.memory_space<vmem>>, vector<128x128xf32>
    %3 = arith.truncf %2 : vector<128x128xf32> to vector<128x128xbf16>
    %cst = arith.constant dense<0.000000e+00> : vector<16x128xf32>
    %4 = tpu.matmul %1, %3, %cst {dimension_numbers = #tpu.dot_dimension_numbers<[1], [1], [0], [0], [0, 0, 1, 0], [], []>} : vector<16x128xbf16>, vector<128x128xbf16>, vector<16x128xf32> -> vector<16x128xf32>
    %c0_3 = arith.constant 0 : index
    %c0_4 = arith.constant 0 : index
    %5 = vector.load %arg2[%c0_3, %c0_4] : memref<16x128xf32, #tpu.memory_space<vmem>>, vector<16x128xf32>
    tpu.vector_store %arg2[%c0_3, %c0_4], %4 {strides = array<i32>} : memref<16x128xf32, #tpu.memory_space<vmem>>, vector<16x128xf32>,
    %6 = tpu.iota {dimensions = array<i32: 0>} : vector<16x128xi32>
    %7 = tpu.iota {dimensions = array<i32: 1>} : vector<16x128xi32>
    %c16_i32 = arith.constant 16 : i32
    %8 = vector.broadcast %c16_i32 : i32 to vector<16x128xi32>
    %9 = arith.cmpi slt, %7, %8 : vector<16x128xi32>
    %cst_5 = arith.constant -1.000000e+30 : f32
    %10 = vector.broadcast %cst_5 : f32 to vector<16x128xf32>
    %11 = arith.select %9, %4, %10 : vector<16x128xi1>, vector<16x128xf32>
    %cst_6 = arith.constant dense<0xFF800000> : vector<16xf32>
    %12 = vector.multi_reduction <maximumf>, %11, %cst_6 [1] : vector<16x128xf32> to vector<16xf32>
    %13 = vector.shape_cast %12 : vector<16xf32> to vector<16x1xf32>
    %14 = vector.broadcast %13 : vector<16x1xf32> to vector<16x128xf32>
    %15 = arith.subf %11, %14 : vector<16x128xf32>
    %16 = math.exp %15 : vector<16x128xf32>
    %cst_7 = arith.constant dense<0.000000e+00> : vector<16xf32>
    %17 = vector.multi_reduction <add>, %16, %cst_7 [1] : vector<16x128xf32> to vector<16xf32>
    %18 = vector.shape_cast %17 : vector<16xf32> to vector<16x1xf32>
    %19 = math.log %18 : vector<16x1xf32>
    %20 = arith.addf %13, %19 : vector<16x1xf32>
    %21 = arith.cmpi eq, %6, %7 : vector<16x128xi32>
    %cst_8 = arith.constant 0.000000e+00 : f32
    %22 = vector.broadcast %cst_8 : f32 to vector<16x128xf32>
    %23 = arith.select %21, %4, %22 : vector<16x128xi1>, vector<16x128xf32>
    %cst_9 = arith.constant dense<0.000000e+00> : vector<16xf32>
    %24 = vector.multi_reduction <add>, %23, %cst_9 [1] : vector<16x128xf32> to vector<16xf32>
    %25 = vector.shape_cast %24 : vector<16xf32> to vector<16x1xf32>
    %26 = tpu.iota {dimensions = array<i32: 0>} : vector<16x1xi32>
    %c16_i32_10 = arith.constant 16 : i32
    %27 = vector.broadcast %c16_i32_10 : i32 to vector<16x1xi32>
    %28 = arith.cmpi slt, %26, %27 : vector<16x1xi32>
    %29 = arith.subf %20, %25 : vector<16x1xf32>
    %cst_11 = arith.constant 0.000000e+00 : f32
    %30 = vector.broadcast %cst_11 : f32 to vector<16x1xf32>
    %31 = arith.select %28, %29, %30 : vector<16x1xi1>, vector<16x1xf32>
    %32 = vector.shape_cast %31 : vector<16x1xf32> to vector<1x16x1xf32>
    %cst_12 = arith.constant dense<0.000000e+00> : vector<1xf32>
    %33 = vector.multi_reduction <add>, %32, %cst_12 [1, 2] : vector<1x16x1xf32> to vector<1xf32>
    %34 = vector.shape_cast %33 : vector<1xf32> to vector<1x1x1xf32>
    %35 = vector.extract %34[0, 0, 0] : f32 from vector<1x1x1xf32>
    %cst_13 = arith.constant 1.600000e+01 : f32
    %36 = arith.divf %35, %cst_13 : f32
    %c0_14 = arith.constant 0 : index
    %c0_15 = arith.constant 0 : index
    %37 = memref.load %arg3[%c0_14, %c0_15] : memref<1x1xf32, #tpu.memory_space<smem>>
    memref.store %36, %arg3[%c0_14, %c0_15] : memref<1x1xf32, #tpu.memory_space<smem>>
    return
  }
}

module attributes {stable_mosaic.version = 11 : i64} {
  func.func @_encoder_kernel(%arg0: i32, %arg1: memref<16x8xi32, #tpu.memory_space<vmem>>, %arg2: memref<128x384xbf16, #tpu.memory_space<vmem>>, %arg3: memref<1x384xf32, #tpu.memory_space<vmem>>, %arg4: memref<128x384xbf16, #tpu.memory_space<vmem>>, %arg5: memref<1x384xf32, #tpu.memory_space<vmem>>, %arg6: memref<128x384xbf16, #tpu.memory_space<vmem>>, %arg7: memref<128x384xbf16, #tpu.memory_space<vmem>>, %arg8: memref<1x384xf32, #tpu.memory_space<vmem>>, %arg9: memref<1x384xf32, #tpu.memory_space<vmem>>, %arg10: memref<16x128xf32, #tpu.memory_space<vmem>>, %arg11: memref<8x16x384xbf16, #tpu.memory_space<vmem>>) attributes {dimension_semantics = [#tpu.dimension_semantics<parallel>], iteration_bounds = array<i64: 2>, scalar_prefetch = 0 : i64, scratch_operands = 1 : i64, tpu.core_type = #tpu.core_type<tc>, window_params = [{transform_indices = @transform_0, window_bounds = array<i64: 16, 8>}, {pipeline_mode = #tpu.pipeline_mode<synchronous>, transform_indices = @transform_1, window_bounds = array<i64: 128, 384>}, {pipeline_mode = #tpu.pipeline_mode<synchronous>, transform_indices = @transform_2, window_bounds = array<i64: 1, 384>}, {pipeline_mode = #tpu.pipeline_mode<synchronous>, transform_indices = @transform_3, window_bounds = array<i64: 128, 384>}, {pipeline_mode = #tpu.pipeline_mode<synchronous>, transform_indices = @transform_4, window_bounds = array<i64: 1, 384>}, {pipeline_mode = #tpu.pipeline_mode<synchronous>, transform_indices = @transform_5, window_bounds = array<i64: 128, 384>}, {pipeline_mode = #tpu.pipeline_mode<synchronous>, transform_indices = @transform_6, window_bounds = array<i64: 128, 384>}, {pipeline_mode = #tpu.pipeline_mode<synchronous>, transform_indices = @transform_7, window_bounds = array<i64: 1, 384>}, {pipeline_mode = #tpu.pipeline_mode<synchronous>, transform_indices = @transform_8, window_bounds = array<i64: 1, 384>}, {transform_indices = @transform_9, window_bounds = array<i64: 16, 128>}]} {
    %c0 = arith.constant 0 : index
    %c0_0 = arith.constant 0 : index
    %0 = vector.load %arg1[%c0, %c0_0] : memref<16x8xi32, #tpu.memory_space<vmem>>, vector<16x8xi32>
    %c1_i32 = arith.constant 1 : i32
    %1 = vector.broadcast %c1_i32 : i32 to vector<16x8xi32>
    %2 = arith.cmpi ne, %0, %1 : vector<16x8xi32>
    %3 = arith.extui %2 : vector<16x8xi1> to vector<16x8xi32>
    %cst = arith.constant dense<0> : vector<16xi32>
    %4 = vector.multi_reduction <add>, %3, %cst [1] : vector<16x8xi32> to vector<16xi32>
    %5 = vector.shape_cast %4 : vector<16xi32> to vector<16x1xi32>
    %6 = tpu.transpose %0, [1, 0] : vector<16x8xi32> -> vector<8x16xi32>
    %7 = vector.shape_cast %6 : vector<8x16xi32> to vector<8x16x1xi32>
    %8 = tpu.iota {dimensions = array<i32: 2>} : vector<8x16x128xi32>
    %9 = vector.broadcast %7 : vector<8x16x1xi32> to vector<8x16x128xi32>
    %10 = arith.cmpi eq, %9, %8 : vector<8x16x128xi32>
    %11 = arith.extui %10 : vector<8x16x128xi1> to vector<8x16x128xi32>
    %12 = arith.sitofp %11 : vector<8x16x128xi32> to vector<8x16x128xf32>
    %13 = arith.truncf %12 : vector<8x16x128xf32> to vector<8x16x128xbf16>
    %14 = vector.shape_cast %13 : vector<8x16x128xbf16> to vector<128x128xbf16>
    %c0_1 = arith.constant 0 : index
    %c0_2 = arith.constant 0 : index
    %15 = vector.load %arg2[%c0_1, %c0_2] : memref<128x384xbf16, #tpu.memory_space<vmem>>, vector<128x384xbf16>
    %cst_3 = arith.constant dense<0.000000e+00> : vector<128x384xf32>
    %16 = tpu.matmul %14, %15, %cst_3 {dimension_numbers = #tpu.dot_dimension_numbers<[1], [0], [0], [1], [0, 0, 1, 1], [], []>} : vector<128x128xbf16>, vector<128x384xbf16>, vector<128x384xf32> -> vector<128x384xf32>
    %c0_4 = arith.constant 0 : index
    %c0_5 = arith.constant 0 : index
    %17 = vector.load %arg3[%c0_4, %c0_5] : memref<1x384xf32, #tpu.memory_space<vmem>>, vector<1x384xf32>
    %18 = vector.broadcast %17 : vector<1x384xf32> to vector<128x384xf32>
    %19 = arith.addf %16, %18 : vector<128x384xf32>
    %20 = vector.shape_cast %19 : vector<128x384xf32> to vector<8x16x384xf32>
    %21 = arith.truncf %20 : vector<8x16x384xf32> to vector<8x16x384xbf16>
    %c0_6 = arith.constant 0 : index
    %c0_7 = arith.constant 0 : index
    %c0_8 = arith.constant 0 : index
    %22 = vector.load %arg11[%c0_6, %c0_7, %c0_8] : memref<8x16x384xbf16, #tpu.memory_space<vmem>>, vector<8x16x384xbf16>
    tpu.vector_store %arg11[%c0_6, %c0_7, %c0_8], %21 {strides = array<i32>} : memref<8x16x384xbf16, #tpu.memory_space<vmem>>, vector<8x16x384xbf16>,
    %c0_9 = arith.constant 0 : index
    %c0_10 = arith.constant 0 : index
    %23 = vector.load %arg4[%c0_9, %c0_10] : memref<128x384xbf16, #tpu.memory_space<vmem>>, vector<128x384xbf16>
    %c0_11 = arith.constant 0 : index
    %c0_12 = arith.constant 0 : index
    %24 = vector.load %arg5[%c0_11, %c0_12] : memref<1x384xf32, #tpu.memory_space<vmem>>, vector<1x384xf32>
    %c0_13 = arith.constant 0 : index
    %c0_14 = arith.constant 0 : index
    %25 = vector.load %arg6[%c0_13, %c0_14] : memref<128x384xbf16, #tpu.memory_space<vmem>>, vector<128x384xbf16>
    %c0_15 = arith.constant 0 : index
    %c0_16 = arith.constant 0 : index
    %26 = vector.load %arg7[%c0_15, %c0_16] : memref<128x384xbf16, #tpu.memory_space<vmem>>, vector<128x384xbf16>
    %c0_17 = arith.constant 0 : index
    %c0_18 = arith.constant 0 : index
    %27 = vector.load %arg8[%c0_17, %c0_18] : memref<1x384xf32, #tpu.memory_space<vmem>>, vector<1x384xf32>
    %c0_19 = arith.constant 0 : index
    %c0_20 = arith.constant 0 : index
    %28 = vector.load %arg9[%c0_19, %c0_20] : memref<1x384xf32, #tpu.memory_space<vmem>>, vector<1x384xf32>
    %cst_21 = arith.constant 0.000000e+00 : f32
    %29 = vector.broadcast %cst_21 : f32 to vector<16x128xf32>
    %c0_i32 = arith.constant 0 : i32
    %30 = arith.index_cast %c0_i32 : i32 to index
    %c0_22 = arith.constant 0 : index
    %c0_23 = arith.constant 0 : index
    %31 = vector.load %arg11[%30, %c0_22, %c0_23] : memref<8x16x384xbf16, #tpu.memory_space<vmem>>, vector<1x16x384xbf16>
    %32 = vector.shape_cast %31 : vector<1x16x384xbf16> to vector<16x384xbf16>
    %33 = arith.extf %32 : vector<16x384xbf16> to vector<16x384xf32>
    %34 = arith.truncf %29 : vector<16x128xf32> to vector<16x128xbf16>
    %cst_24 = arith.constant dense<0.000000e+00> : vector<16x384xf32>
    %35 = tpu.matmul %34, %23, %cst_24 {dimension_numbers = #tpu.dot_dimension_numbers<[1], [0], [0], [1], [0, 0, 1, 1], [], []>} : vector<16x128xbf16>, vector<128x384xbf16>, vector<16x384xf32> -> vector<16x384xf32>
    %36 = vector.broadcast %24 : vector<1x384xf32> to vector<16x384xf32>
    %37 = arith.addf %35, %36 : vector<16x384xf32>
    %38 = vector.extract_strided_slice %33 {offsets = [0, 0], sizes = [16, 128], strides = [1, 1]} : vector<16x384xf32> to vector<16x128xf32>
    %39 = vector.extract_strided_slice %37 {offsets = [0, 0], sizes = [16, 128], strides = [1, 1]} : vector<16x384xf32> to vector<16x128xf32>
    %40 = arith.addf %38, %39 : vector<16x128xf32>
    %cst_25 = arith.constant 5.000000e-01 : f32
    %41 = vector.broadcast %cst_25 : f32 to vector<16x128xf32>
    %42 = arith.mulf %41, %40 : vector<16x128xf32>
    %43 = math.tanh %42 : vector<16x128xf32>
    %cst_26 = arith.constant 1.000000e+00 : f32
    %44 = vector.broadcast %cst_26 : f32 to vector<16x128xf32>
    %45 = arith.addf %43, %44 : vector<16x128xf32>
    %cst_27 = arith.constant 5.000000e-01 : f32
    %46 = vector.broadcast %cst_27 : f32 to vector<16x128xf32>
    %47 = arith.mulf %46, %45 : vector<16x128xf32>
    %48 = vector.extract_strided_slice %33 {offsets = [0, 128], sizes = [16, 128], strides = [1, 1]} : vector<16x384xf32> to vector<16x128xf32>
    %49 = vector.extract_strided_slice %37 {offsets = [0, 128], sizes = [16, 128], strides = [1, 1]} : vector<16x384xf32> to vector<16x128xf32>
    %50 = arith.addf %48, %49 : vector<16x128xf32>
    %cst_28 = arith.constant 5.000000e-01 : f32
    %51 = vector.broadcast %cst_28 : f32 to vector<16x128xf32>
    %52 = arith.mulf %51, %50 : vector<16x128xf32>
    %53 = math.tanh %52 : vector<16x128xf32>
    %cst_29 = arith.constant 1.000000e+00 : f32
    %54 = vector.broadcast %cst_29 : f32 to vector<16x128xf32>
    %55 = arith.addf %53, %54 : vector<16x128xf32>
    %cst_30 = arith.constant 5.000000e-01 : f32
    %56 = vector.broadcast %cst_30 : f32 to vector<16x128xf32>
    %57 = arith.mulf %56, %55 : vector<16x128xf32>
    %58 = vector.extract_strided_slice %33 {offsets = [0, 256], sizes = [16, 128], strides = [1, 1]} : vector<16x384xf32> to vector<16x128xf32>
    %59 = vector.extract_strided_slice %37 {offsets = [0, 256], sizes = [16, 128], strides = [1, 1]} : vector<16x384xf32> to vector<16x128xf32>
    %60 = arith.mulf %47, %59 : vector<16x128xf32>
    %61 = arith.addf %58, %60 : vector<16x128xf32>
    %62 = math.tanh %61 : vector<16x128xf32>
    %cst_31 = arith.constant 1.000000e+00 : f32
    %63 = vector.broadcast %cst_31 : f32 to vector<16x128xf32>
    %64 = arith.subf %63, %57 : vector<16x128xf32>
    %65 = arith.mulf %64, %62 : vector<16x128xf32>
    %66 = arith.mulf %57, %29 : vector<16x128xf32>
    %67 = arith.addf %65, %66 : vector<16x128xf32>
    %68 = arith.truncf %67 : vector<16x128xf32> to vector<16x128xbf16>
    %cst_32 = arith.constant dense<0.000000e+00> : vector<16x384xf32>
    %69 = tpu.matmul %68, %25, %cst_32 {dimension_numbers = #tpu.dot_dimension_numbers<[1], [0], [0], [1], [0, 0, 1, 1], [], []>} : vector<16x128xbf16>, vector<128x384xbf16>, vector<16x384xf32> -> vector<16x384xf32>
    %70 = vector.broadcast %27 : vector<1x384xf32> to vector<16x384xf32>
    %71 = arith.addf %69, %70 : vector<16x384xf32>
    %72 = arith.truncf %29 : vector<16x128xf32> to vector<16x128xbf16>
    %cst_33 = arith.constant dense<0.000000e+00> : vector<16x384xf32>
    %73 = tpu.matmul %72, %26, %cst_33 {dimension_numbers = #tpu.dot_dimension_numbers<[1], [0], [0], [1], [0, 0, 1, 1], [], []>} : vector<16x128xbf16>, vector<128x384xbf16>, vector<16x384xf32> -> vector<16x384xf32>
    %74 = vector.broadcast %28 : vector<1x384xf32> to vector<16x384xf32>
    %75 = arith.addf %73, %74 : vector<16x384xf32>
    %76 = vector.extract_strided_slice %71 {offsets = [0, 0], sizes = [16, 128], strides = [1, 1]} : vector<16x384xf32> to vector<16x128xf32>
    %77 = vector.extract_strided_slice %75 {offsets = [0, 0], sizes = [16, 128], strides = [1, 1]} : vector<16x384xf32> to vector<16x128xf32>
    %78 = arith.addf %76, %77 : vector<16x128xf32>
    %cst_34 = arith.constant 5.000000e-01 : f32
    %79 = vector.broadcast %cst_34 : f32 to vector<16x128xf32>
    %80 = arith.mulf %79, %78 : vector<16x128xf32>
    %81 = math.tanh %80 : vector<16x128xf32>
    %cst_35 = arith.constant 1.000000e+00 : f32
    %82 = vector.broadcast %cst_35 : f32 to vector<16x128xf32>
    %83 = arith.addf %81, %82 : vector<16x128xf32>
    %cst_36 = arith.constant 5.000000e-01 : f32
    %84 = vector.broadcast %cst_36 : f32 to vector<16x128xf32>
    %85 = arith.mulf %84, %83 : vector<16x128xf32>
    %86 = vector.extract_strided_slice %71 {offsets = [0, 128], sizes = [16, 128], strides = [1, 1]} : vector<16x384xf32> to vector<16x128xf32>
    %87 = vector.extract_strided_slice %75 {offsets = [0, 128], sizes = [16, 128], strides = [1, 1]} : vector<16x384xf32> to vector<16x128xf32>
    %88 = arith.addf %86, %87 : vector<16x128xf32>
    %cst_37 = arith.constant 5.000000e-01 : f32
    %89 = vector.broadcast %cst_37 : f32 to vector<16x128xf32>
    %90 = arith.mulf %89, %88 : vector<16x128xf32>
    %91 = math.tanh %90 : vector<16x128xf32>
    %cst_38 = arith.constant 1.000000e+00 : f32
    %92 = vector.broadcast %cst_38 : f32 to vector<16x128xf32>
    %93 = arith.addf %91, %92 : vector<16x128xf32>
    %cst_39 = arith.constant 5.000000e-01 : f32
    %94 = vector.broadcast %cst_39 : f32 to vector<16x128xf32>
    %95 = arith.mulf %94, %93 : vector<16x128xf32>
    %96 = vector.extract_strided_slice %71 {offsets = [0, 256], sizes = [16, 128], strides = [1, 1]} : vector<16x384xf32> to vector<16x128xf32>
    %97 = vector.extract_strided_slice %75 {offsets = [0, 256], sizes = [16, 128], strides = [1, 1]} : vector<16x384xf32> to vector<16x128xf32>
    %98 = arith.mulf %85, %97 : vector<16x128xf32>
    %99 = arith.addf %96, %98 : vector<16x128xf32>
    %100 = math.tanh %99 : vector<16x128xf32>
    %cst_40 = arith.constant 1.000000e+00 : f32
    %101 = vector.broadcast %cst_40 : f32 to vector<16x128xf32>
    %102 = arith.subf %101, %95 : vector<16x128xf32>
    %103 = arith.mulf %102, %100 : vector<16x128xf32>
    %104 = arith.mulf %95, %29 : vector<16x128xf32>
    %105 = arith.addf %103, %104 : vector<16x128xf32>
    %106 = vector.broadcast %c0_i32 : i32 to vector<16x1xi32>
    %107 = arith.cmpi sgt, %5, %106 : vector<16x1xi32>
    %cst_41 = arith.constant 0.000000e+00 : f32
    %108 = vector.shape_cast %107 : vector<16x1xi1> to vector<16x1xi1>
    %109 = vector.broadcast %108 : vector<16x1xi1> to vector<16x128xi1>
    %110 = vector.broadcast %cst_41 : f32 to vector<16x128xf32>
    %111 = arith.select %109, %105, %110 : vector<16x128xi1>, vector<16x128xf32>
    %112 = arith.addf %29, %111 : vector<16x128xf32>
    %c1_i32_42 = arith.constant 1 : i32
    %113 = arith.index_cast %c1_i32_42 : i32 to index
    %c0_43 = arith.constant 0 : index
    %c0_44 = arith.constant 0 : index
    %114 = vector.load %arg11[%113, %c0_43, %c0_44] : memref<8x16x384xbf16, #tpu.memory_space<vmem>>, vector<1x16x384xbf16>
    %115 = vector.shape_cast %114 : vector<1x16x384xbf16> to vector<16x384xbf16>
    %116 = arith.extf %115 : vector<16x384xbf16> to vector<16x384xf32>
    %117 = arith.truncf %67 : vector<16x128xf32> to vector<16x128xbf16>
    %cst_45 = arith.constant dense<0.000000e+00> : vector<16x384xf32>
    %118 = tpu.matmul %117, %23, %cst_45 {dimension_numbers = #tpu.dot_dimension_numbers<[1], [0], [0], [1], [0, 0, 1, 1], [], []>} : vector<16x128xbf16>, vector<128x384xbf16>, vector<16x384xf32> -> vector<16x384xf32>
    %119 = vector.broadcast %24 : vector<1x384xf32> to vector<16x384xf32>
    %120 = arith.addf %118, %119 : vector<16x384xf32>
    %121 = vector.extract_strided_slice %116 {offsets = [0, 0], sizes = [16, 128], strides = [1, 1]} : vector<16x384xf32> to vector<16x128xf32>
    %122 = vector.extract_strided_slice %120 {offsets = [0, 0], sizes = [16, 128], strides = [1, 1]} : vector<16x384xf32> to vector<16x128xf32>
    %123 = arith.addf %121, %122 : vector<16x128xf32>
    %cst_46 = arith.constant 5.000000e-01 : f32
    %124 = vector.broadcast %cst_46 : f32 to vector<16x128xf32>
    %125 = arith.mulf %124, %123 : vector<16x128xf32>
    %126 = math.tanh %125 : vector<16x128xf32>
    %cst_47 = arith.constant 1.000000e+00 : f32
    %127 = vector.broadcast %cst_47 : f32 to vector<16x128xf32>
    %128 = arith.addf %126, %127 : vector<16x128xf32>
    %cst_48 = arith.constant 5.000000e-01 : f32
    %129 = vector.broadcast %cst_48 : f32 to vector<16x128xf32>
    %130 = arith.mulf %129, %128 : vector<16x128xf32>
    %131 = vector.extract_strided_slice %116 {offsets = [0, 128], sizes = [16, 128], strides = [1, 1]} : vector<16x384xf32> to vector<16x128xf32>
    %132 = vector.extract_strided_slice %120 {offsets = [0, 128], sizes = [16, 128], strides = [1, 1]} : vector<16x384xf32> to vector<16x128xf32>
    %133 = arith.addf %131, %132 : vector<16x128xf32>
    %cst_49 = arith.constant 5.000000e-01 : f32
    %134 = vector.broadcast %cst_49 : f32 to vector<16x128xf32>
    %135 = arith.mulf %134, %133 : vector<16x128xf32>
    %136 = math.tanh %135 : vector<16x128xf32>
    %cst_50 = arith.constant 1.000000e+00 : f32
    %137 = vector.broadcast %cst_50 : f32 to vector<16x128xf32>
    %138 = arith.addf %136, %137 : vector<16x128xf32>
    %cst_51 = arith.constant 5.000000e-01 : f32
    %139 = vector.broadcast %cst_51 : f32 to vector<16x128xf32>
    %140 = arith.mulf %139, %138 : vector<16x128xf32>
    %141 = vector.extract_strided_slice %116 {offsets = [0, 256], sizes = [16, 128], strides = [1, 1]} : vector<16x384xf32> to vector<16x128xf32>
    %142 = vector.extract_strided_slice %120 {offsets = [0, 256], sizes = [16, 128], strides = [1, 1]} : vector<16x384xf32> to vector<16x128xf32>
    %143 = arith.mulf %130, %142 : vector<16x128xf32>
    %144 = arith.addf %141, %143 : vector<16x128xf32>
    %145 = math.tanh %144 : vector<16x128xf32>
    %cst_52 = arith.constant 1.000000e+00 : f32
    %146 = vector.broadcast %cst_52 : f32 to vector<16x128xf32>
    %147 = arith.subf %146, %140 : vector<16x128xf32>
    %148 = arith.mulf %147, %145 : vector<16x128xf32>
    %149 = arith.mulf %140, %67 : vector<16x128xf32>
    %150 = arith.addf %148, %149 : vector<16x128xf32>
    %151 = arith.truncf %150 : vector<16x128xf32> to vector<16x128xbf16>
    %cst_53 = arith.constant dense<0.000000e+00> : vector<16x384xf32>
    %152 = tpu.matmul %151, %25, %cst_53 {dimension_numbers = #tpu.dot_dimension_numbers<[1], [0], [0], [1], [0, 0, 1, 1], [], []>} : vector<16x128xbf16>, vector<128x384xbf16>, vector<16x384xf32> -> vector<16x384xf32>
    %153 = vector.broadcast %27 : vector<1x384xf32> to vector<16x384xf32>
    %154 = arith.addf %152, %153 : vector<16x384xf32>
    %155 = arith.truncf %105 : vector<16x128xf32> to vector<16x128xbf16>
    %cst_54 = arith.constant dense<0.000000e+00> : vector<16x384xf32>
    %156 = tpu.matmul %155, %26, %cst_54 {dimension_numbers = #tpu.dot_dimension_numbers<[1], [0], [0], [1], [0, 0, 1, 1], [], []>} : vector<16x128xbf16>, vector<128x384xbf16>, vector<16x384xf32> -> vector<16x384xf32>
    %157 = vector.broadcast %28 : vector<1x384xf32> to vector<16x384xf32>
    %158 = arith.addf %156, %157 : vector<16x384xf32>
    %159 = vector.extract_strided_slice %154 {offsets = [0, 0], sizes = [16, 128], strides = [1, 1]} : vector<16x384xf32> to vector<16x128xf32>
    %160 = vector.extract_strided_slice %158 {offsets = [0, 0], sizes = [16, 128], strides = [1, 1]} : vector<16x384xf32> to vector<16x128xf32>
    %161 = arith.addf %159, %160 : vector<16x128xf32>
    %cst_55 = arith.constant 5.000000e-01 : f32
    %162 = vector.broadcast %cst_55 : f32 to vector<16x128xf32>
    %163 = arith.mulf %162, %161 : vector<16x128xf32>
    %164 = math.tanh %163 : vector<16x128xf32>
    %cst_56 = arith.constant 1.000000e+00 : f32
    %165 = vector.broadcast %cst_56 : f32 to vector<16x128xf32>
    %166 = arith.addf %164, %165 : vector<16x128xf32>
    %cst_57 = arith.constant 5.000000e-01 : f32
    %167 = vector.broadcast %cst_57 : f32 to vector<16x128xf32>
    %168 = arith.mulf %167, %166 : vector<16x128xf32>
    %169 = vector.extract_strided_slice %154 {offsets = [0, 128], sizes = [16, 128], strides = [1, 1]} : vector<16x384xf32> to vector<16x128xf32>
    %170 = vector.extract_strided_slice %158 {offsets = [0, 128], sizes = [16, 128], strides = [1, 1]} : vector<16x384xf32> to vector<16x128xf32>
    %171 = arith.addf %169, %170 : vector<16x128xf32>
    %cst_58 = arith.constant 5.000000e-01 : f32
    %172 = vector.broadcast %cst_58 : f32 to vector<16x128xf32>
    %173 = arith.mulf %172, %171 : vector<16x128xf32>
    %174 = math.tanh %173 : vector<16x128xf32>
    %cst_59 = arith.constant 1.000000e+00 : f32
    %175 = vector.broadcast %cst_59 : f32 to vector<16x128xf32>
    %176 = arith.addf %174, %175 : vector<16x128xf32>
    %cst_60 = arith.constant 5.000000e-01 : f32
    %177 = vector.broadcast %cst_60 : f32 to vector<16x128xf32>
    %178 = arith.mulf %177, %176 : vector<16x128xf32>
    %179 = vector.extract_strided_slice %154 {offsets = [0, 256], sizes = [16, 128], strides = [1, 1]} : vector<16x384xf32> to vector<16x128xf32>
    %180 = vector.extract_strided_slice %158 {offsets = [0, 256], sizes = [16, 128], strides = [1, 1]} : vector<16x384xf32> to vector<16x128xf32>
    %181 = arith.mulf %168, %180 : vector<16x128xf32>
    %182 = arith.addf %179, %181 : vector<16x128xf32>
    %183 = math.tanh %182 : vector<16x128xf32>
    %cst_61 = arith.constant 1.000000e+00 : f32
    %184 = vector.broadcast %cst_61 : f32 to vector<16x128xf32>
    %185 = arith.subf %184, %178 : vector<16x128xf32>
    %186 = arith.mulf %185, %183 : vector<16x128xf32>
    %187 = arith.mulf %178, %105 : vector<16x128xf32>
    %188 = arith.addf %186, %187 : vector<16x128xf32>
    %189 = vector.broadcast %c1_i32_42 : i32 to vector<16x1xi32>
    %190 = arith.cmpi sgt, %5, %189 : vector<16x1xi32>
    %cst_62 = arith.constant 0.000000e+00 : f32
    %191 = vector.shape_cast %190 : vector<16x1xi1> to vector<16x1xi1>
    %192 = vector.broadcast %191 : vector<16x1xi1> to vector<16x128xi1>
    %193 = vector.broadcast %cst_62 : f32 to vector<16x128xf32>
    %194 = arith.select %192, %188, %193 : vector<16x128xi1>, vector<16x128xf32>
    %195 = arith.addf %112, %194 : vector<16x128xf32>
    %c2_i32 = arith.constant 2 : i32
    %196 = arith.index_cast %c2_i32 : i32 to index
    %c0_63 = arith.constant 0 : index
    %c0_64 = arith.constant 0 : index
    %197 = vector.load %arg11[%196, %c0_63, %c0_64] : memref<8x16x384xbf16, #tpu.memory_space<vmem>>, vector<1x16x384xbf16>
    %198 = vector.shape_cast %197 : vector<1x16x384xbf16> to vector<16x384xbf16>
    %199 = arith.extf %198 : vector<16x384xbf16> to vector<16x384xf32>
    %200 = arith.truncf %150 : vector<16x128xf32> to vector<16x128xbf16>
    %cst_65 = arith.constant dense<0.000000e+00> : vector<16x384xf32>
    %201 = tpu.matmul %200, %23, %cst_65 {dimension_numbers = #tpu.dot_dimension_numbers<[1], [0], [0], [1], [0, 0, 1, 1], [], []>} : vector<16x128xbf16>, vector<128x384xbf16>, vector<16x384xf32> -> vector<16x384xf32>
    %202 = vector.broadcast %24 : vector<1x384xf32> to vector<16x384xf32>
    %203 = arith.addf %201, %202 : vector<16x384xf32>
    %204 = vector.extract_strided_slice %199 {offsets = [0, 0], sizes = [16, 128], strides = [1, 1]} : vector<16x384xf32> to vector<16x128xf32>
    %205 = vector.extract_strided_slice %203 {offsets = [0, 0], sizes = [16, 128], strides = [1, 1]} : vector<16x384xf32> to vector<16x128xf32>
    %206 = arith.addf %204, %205 : vector<16x128xf32>
    %cst_66 = arith.constant 5.000000e-01 : f32
    %207 = vector.broadcast %cst_66 : f32 to vector<16x128xf32>
    %208 = arith.mulf %207, %206 : vector<16x128xf32>
    %209 = math.tanh %208 : vector<16x128xf32>
    %cst_67 = arith.constant 1.000000e+00 : f32
    %210 = vector.broadcast %cst_67 : f32 to vector<16x128xf32>
    %211 = arith.addf %209, %210 : vector<16x128xf32>
    %cst_68 = arith.constant 5.000000e-01 : f32
    %212 = vector.broadcast %cst_68 : f32 to vector<16x128xf32>
    %213 = arith.mulf %212, %211 : vector<16x128xf32>
    %214 = vector.extract_strided_slice %199 {offsets = [0, 128], sizes = [16, 128], strides = [1, 1]} : vector<16x384xf32> to vector<16x128xf32>
    %215 = vector.extract_strided_slice %203 {offsets = [0, 128], sizes = [16, 128], strides = [1, 1]} : vector<16x384xf32> to vector<16x128xf32>
    %216 = arith.addf %214, %215 : vector<16x128xf32>
    %cst_69 = arith.constant 5.000000e-01 : f32
    %217 = vector.broadcast %cst_69 : f32 to vector<16x128xf32>
    %218 = arith.mulf %217, %216 : vector<16x128xf32>
    %219 = math.tanh %218 : vector<16x128xf32>
    %cst_70 = arith.constant 1.000000e+00 : f32
    %220 = vector.broadcast %cst_70 : f32 to vector<16x128xf32>
    %221 = arith.addf %219, %220 : vector<16x128xf32>
    %cst_71 = arith.constant 5.000000e-01 : f32
    %222 = vector.broadcast %cst_71 : f32 to vector<16x128xf32>
    %223 = arith.mulf %222, %221 : vector<16x128xf32>
    %224 = vector.extract_strided_slice %199 {offsets = [0, 256], sizes = [16, 128], strides = [1, 1]} : vector<16x384xf32> to vector<16x128xf32>
    %225 = vector.extract_strided_slice %203 {offsets = [0, 256], sizes = [16, 128], strides = [1, 1]} : vector<16x384xf32> to vector<16x128xf32>
    %226 = arith.mulf %213, %225 : vector<16x128xf32>
    %227 = arith.addf %224, %226 : vector<16x128xf32>
    %228 = math.tanh %227 : vector<16x128xf32>
    %cst_72 = arith.constant 1.000000e+00 : f32
    %229 = vector.broadcast %cst_72 : f32 to vector<16x128xf32>
    %230 = arith.subf %229, %223 : vector<16x128xf32>
    %231 = arith.mulf %230, %228 : vector<16x128xf32>
    %232 = arith.mulf %223, %150 : vector<16x128xf32>
    %233 = arith.addf %231, %232 : vector<16x128xf32>
    %234 = arith.truncf %233 : vector<16x128xf32> to vector<16x128xbf16>
    %cst_73 = arith.constant dense<0.000000e+00> : vector<16x384xf32>
    %235 = tpu.matmul %234, %25, %cst_73 {dimension_numbers = #tpu.dot_dimension_numbers<[1], [0], [0], [1], [0, 0, 1, 1], [], []>} : vector<16x128xbf16>, vector<128x384xbf16>, vector<16x384xf32> -> vector<16x384xf32>
    %236 = vector.broadcast %27 : vector<1x384xf32> to vector<16x384xf32>
    %237 = arith.addf %235, %236 : vector<16x384xf32>
    %238 = arith.truncf %188 : vector<16x128xf32> to vector<16x128xbf16>
    %cst_74 = arith.constant dense<0.000000e+00> : vector<16x384xf32>
    %239 = tpu.matmul %238, %26, %cst_74 {dimension_numbers = #tpu.dot_dimension_numbers<[1], [0], [0], [1], [0, 0, 1, 1], [], []>} : vector<16x128xbf16>, vector<128x384xbf16>, vector<16x384xf32> -> vector<16x384xf32>
    %240 = vector.broadcast %28 : vector<1x384xf32> to vector<16x384xf32>
    %241 = arith.addf %239, %240 : vector<16x384xf32>
    %242 = vector.extract_strided_slice %237 {offsets = [0, 0], sizes = [16, 128], strides = [1, 1]} : vector<16x384xf32> to vector<16x128xf32>
    %243 = vector.extract_strided_slice %241 {offsets = [0, 0], sizes = [16, 128], strides = [1, 1]} : vector<16x384xf32> to vector<16x128xf32>
    %244 = arith.addf %242, %243 : vector<16x128xf32>
    %cst_75 = arith.constant 5.000000e-01 : f32
    %245 = vector.broadcast %cst_75 : f32 to vector<16x128xf32>
    %246 = arith.mulf %245, %244 : vector<16x128xf32>
    %247 = math.tanh %246 : vector<16x128xf32>
    %cst_76 = arith.constant 1.000000e+00 : f32
    %248 = vector.broadcast %cst_76 : f32 to vector<16x128xf32>
    %249 = arith.addf %247, %248 : vector<16x128xf32>
    %cst_77 = arith.constant 5.000000e-01 : f32
    %250 = vector.broadcast %cst_77 : f32 to vector<16x128xf32>
    %251 = arith.mulf %250, %249 : vector<16x128xf32>
    %252 = vector.extract_strided_slice %237 {offsets = [0, 128], sizes = [16, 128], strides = [1, 1]} : vector<16x384xf32> to vector<16x128xf32>
    %253 = vector.extract_strided_slice %241 {offsets = [0, 128], sizes = [16, 128], strides = [1, 1]} : vector<16x384xf32> to vector<16x128xf32>
    %254 = arith.addf %252, %253 : vector<16x128xf32>
    %cst_78 = arith.constant 5.000000e-01 : f32
    %255 = vector.broadcast %cst_78 : f32 to vector<16x128xf32>
    %256 = arith.mulf %255, %254 : vector<16x128xf32>
    %257 = math.tanh %256 : vector<16x128xf32>
    %cst_79 = arith.constant 1.000000e+00 : f32
    %258 = vector.broadcast %cst_79 : f32 to vector<16x128xf32>
    %259 = arith.addf %257, %258 : vector<16x128xf32>
    %cst_80 = arith.constant 5.000000e-01 : f32
    %260 = vector.broadcast %cst_80 : f32 to vector<16x128xf32>
    %261 = arith.mulf %260, %259 : vector<16x128xf32>
    %262 = vector.extract_strided_slice %237 {offsets = [0, 256], sizes = [16, 128], strides = [1, 1]} : vector<16x384xf32> to vector<16x128xf32>
    %263 = vector.extract_strided_slice %241 {offsets = [0, 256], sizes = [16, 128], strides = [1, 1]} : vector<16x384xf32> to vector<16x128xf32>
    %264 = arith.mulf %251, %263 : vector<16x128xf32>
    %265 = arith.addf %262, %264 : vector<16x128xf32>
    %266 = math.tanh %265 : vector<16x128xf32>
    %cst_81 = arith.constant 1.000000e+00 : f32
    %267 = vector.broadcast %cst_81 : f32 to vector<16x128xf32>
    %268 = arith.subf %267, %261 : vector<16x128xf32>
    %269 = arith.mulf %268, %266 : vector<16x128xf32>
    %270 = arith.mulf %261, %188 : vector<16x128xf32>
    %271 = arith.addf %269, %270 : vector<16x128xf32>
    %272 = vector.broadcast %c2_i32 : i32 to vector<16x1xi32>
    %273 = arith.cmpi sgt, %5, %272 : vector<16x1xi32>
    %cst_82 = arith.constant 0.000000e+00 : f32
    %274 = vector.shape_cast %273 : vector<16x1xi1> to vector<16x1xi1>
    %275 = vector.broadcast %274 : vector<16x1xi1> to vector<16x128xi1>
    %276 = vector.broadcast %cst_82 : f32 to vector<16x128xf32>
    %277 = arith.select %275, %271, %276 : vector<16x128xi1>, vector<16x128xf32>
    %278 = arith.addf %195, %277 : vector<16x128xf32>
    %c3_i32 = arith.constant 3 : i32
    %279 = arith.index_cast %c3_i32 : i32 to index
    %c0_83 = arith.constant 0 : index
    %c0_84 = arith.constant 0 : index
    %280 = vector.load %arg11[%279, %c0_83, %c0_84] : memref<8x16x384xbf16, #tpu.memory_space<vmem>>, vector<1x16x384xbf16>
    %281 = vector.shape_cast %280 : vector<1x16x384xbf16> to vector<16x384xbf16>
    %282 = arith.extf %281 : vector<16x384xbf16> to vector<16x384xf32>
    %283 = arith.truncf %233 : vector<16x128xf32> to vector<16x128xbf16>
    %cst_85 = arith.constant dense<0.000000e+00> : vector<16x384xf32>
    %284 = tpu.matmul %283, %23, %cst_85 {dimension_numbers = #tpu.dot_dimension_numbers<[1], [0], [0], [1], [0, 0, 1, 1], [], []>} : vector<16x128xbf16>, vector<128x384xbf16>, vector<16x384xf32> -> vector<16x384xf32>
    %285 = vector.broadcast %24 : vector<1x384xf32> to vector<16x384xf32>
    %286 = arith.addf %284, %285 : vector<16x384xf32>
    %287 = vector.extract_strided_slice %282 {offsets = [0, 0], sizes = [16, 128], strides = [1, 1]} : vector<16x384xf32> to vector<16x128xf32>
    %288 = vector.extract_strided_slice %286 {offsets = [0, 0], sizes = [16, 128], strides = [1, 1]} : vector<16x384xf32> to vector<16x128xf32>
    %289 = arith.addf %287, %288 : vector<16x128xf32>
    %cst_86 = arith.constant 5.000000e-01 : f32
    %290 = vector.broadcast %cst_86 : f32 to vector<16x128xf32>
    %291 = arith.mulf %290, %289 : vector<16x128xf32>
    %292 = math.tanh %291 : vector<16x128xf32>
    %cst_87 = arith.constant 1.000000e+00 : f32
    %293 = vector.broadcast %cst_87 : f32 to vector<16x128xf32>
    %294 = arith.addf %292, %293 : vector<16x128xf32>
    %cst_88 = arith.constant 5.000000e-01 : f32
    %295 = vector.broadcast %cst_88 : f32 to vector<16x128xf32>
    %296 = arith.mulf %295, %294 : vector<16x128xf32>
    %297 = vector.extract_strided_slice %282 {offsets = [0, 128], sizes = [16, 128], strides = [1, 1]} : vector<16x384xf32> to vector<16x128xf32>
    %298 = vector.extract_strided_slice %286 {offsets = [0, 128], sizes = [16, 128], strides = [1, 1]} : vector<16x384xf32> to vector<16x128xf32>
    %299 = arith.addf %297, %298 : vector<16x128xf32>
    %cst_89 = arith.constant 5.000000e-01 : f32
    %300 = vector.broadcast %cst_89 : f32 to vector<16x128xf32>
    %301 = arith.mulf %300, %299 : vector<16x128xf32>
    %302 = math.tanh %301 : vector<16x128xf32>
    %cst_90 = arith.constant 1.000000e+00 : f32
    %303 = vector.broadcast %cst_90 : f32 to vector<16x128xf32>
    %304 = arith.addf %302, %303 : vector<16x128xf32>
    %cst_91 = arith.constant 5.000000e-01 : f32
    %305 = vector.broadcast %cst_91 : f32 to vector<16x128xf32>
    %306 = arith.mulf %305, %304 : vector<16x128xf32>
    %307 = vector.extract_strided_slice %282 {offsets = [0, 256], sizes = [16, 128], strides = [1, 1]} : vector<16x384xf32> to vector<16x128xf32>
    %308 = vector.extract_strided_slice %286 {offsets = [0, 256], sizes = [16, 128], strides = [1, 1]} : vector<16x384xf32> to vector<16x128xf32>
    %309 = arith.mulf %296, %308 : vector<16x128xf32>
    %310 = arith.addf %307, %309 : vector<16x128xf32>
    %311 = math.tanh %310 : vector<16x128xf32>
    %cst_92 = arith.constant 1.000000e+00 : f32
    %312 = vector.broadcast %cst_92 : f32 to vector<16x128xf32>
    %313 = arith.subf %312, %306 : vector<16x128xf32>
    %314 = arith.mulf %313, %311 : vector<16x128xf32>
    %315 = arith.mulf %306, %233 : vector<16x128xf32>
    %316 = arith.addf %314, %315 : vector<16x128xf32>
    %317 = arith.truncf %316 : vector<16x128xf32> to vector<16x128xbf16>
    %cst_93 = arith.constant dense<0.000000e+00> : vector<16x384xf32>
    %318 = tpu.matmul %317, %25, %cst_93 {dimension_numbers = #tpu.dot_dimension_numbers<[1], [0], [0], [1], [0, 0, 1, 1], [], []>} : vector<16x128xbf16>, vector<128x384xbf16>, vector<16x384xf32> -> vector<16x384xf32>
    %319 = vector.broadcast %27 : vector<1x384xf32> to vector<16x384xf32>
    %320 = arith.addf %318, %319 : vector<16x384xf32>
    %321 = arith.truncf %271 : vector<16x128xf32> to vector<16x128xbf16>
    %cst_94 = arith.constant dense<0.000000e+00> : vector<16x384xf32>
    %322 = tpu.matmul %321, %26, %cst_94 {dimension_numbers = #tpu.dot_dimension_numbers<[1], [0], [0], [1], [0, 0, 1, 1], [], []>} : vector<16x128xbf16>, vector<128x384xbf16>, vector<16x384xf32> -> vector<16x384xf32>
    %323 = vector.broadcast %28 : vector<1x384xf32> to vector<16x384xf32>
    %324 = arith.addf %322, %323 : vector<16x384xf32>
    %325 = vector.extract_strided_slice %320 {offsets = [0, 0], sizes = [16, 128], strides = [1, 1]} : vector<16x384xf32> to vector<16x128xf32>
    %326 = vector.extract_strided_slice %324 {offsets = [0, 0], sizes = [16, 128], strides = [1, 1]} : vector<16x384xf32> to vector<16x128xf32>
    %327 = arith.addf %325, %326 : vector<16x128xf32>
    %cst_95 = arith.constant 5.000000e-01 : f32
    %328 = vector.broadcast %cst_95 : f32 to vector<16x128xf32>
    %329 = arith.mulf %328, %327 : vector<16x128xf32>
    %330 = math.tanh %329 : vector<16x128xf32>
    %cst_96 = arith.constant 1.000000e+00 : f32
    %331 = vector.broadcast %cst_96 : f32 to vector<16x128xf32>
    %332 = arith.addf %330, %331 : vector<16x128xf32>
    %cst_97 = arith.constant 5.000000e-01 : f32
    %333 = vector.broadcast %cst_97 : f32 to vector<16x128xf32>
    %334 = arith.mulf %333, %332 : vector<16x128xf32>
    %335 = vector.extract_strided_slice %320 {offsets = [0, 128], sizes = [16, 128], strides = [1, 1]} : vector<16x384xf32> to vector<16x128xf32>
    %336 = vector.extract_strided_slice %324 {offsets = [0, 128], sizes = [16, 128], strides = [1, 1]} : vector<16x384xf32> to vector<16x128xf32>
    %337 = arith.addf %335, %336 : vector<16x128xf32>
    %cst_98 = arith.constant 5.000000e-01 : f32
    %338 = vector.broadcast %cst_98 : f32 to vector<16x128xf32>
    %339 = arith.mulf %338, %337 : vector<16x128xf32>
    %340 = math.tanh %339 : vector<16x128xf32>
    %cst_99 = arith.constant 1.000000e+00 : f32
    %341 = vector.broadcast %cst_99 : f32 to vector<16x128xf32>
    %342 = arith.addf %340, %341 : vector<16x128xf32>
    %cst_100 = arith.constant 5.000000e-01 : f32
    %343 = vector.broadcast %cst_100 : f32 to vector<16x128xf32>
    %344 = arith.mulf %343, %342 : vector<16x128xf32>
    %345 = vector.extract_strided_slice %320 {offsets = [0, 256], sizes = [16, 128], strides = [1, 1]} : vector<16x384xf32> to vector<16x128xf32>
    %346 = vector.extract_strided_slice %324 {offsets = [0, 256], sizes = [16, 128], strides = [1, 1]} : vector<16x384xf32> to vector<16x128xf32>
    %347 = arith.mulf %334, %346 : vector<16x128xf32>
    %348 = arith.addf %345, %347 : vector<16x128xf32>
    %349 = math.tanh %348 : vector<16x128xf32>
    %cst_101 = arith.constant 1.000000e+00 : f32
    %350 = vector.broadcast %cst_101 : f32 to vector<16x128xf32>
    %351 = arith.subf %350, %344 : vector<16x128xf32>
    %352 = arith.mulf %351, %349 : vector<16x128xf32>
    %353 = arith.mulf %344, %271 : vector<16x128xf32>
    %354 = arith.addf %352, %353 : vector<16x128xf32>
    %355 = vector.broadcast %c3_i32 : i32 to vector<16x1xi32>
    %356 = arith.cmpi sgt, %5, %355 : vector<16x1xi32>
    %cst_102 = arith.constant 0.000000e+00 : f32
    %357 = vector.shape_cast %356 : vector<16x1xi1> to vector<16x1xi1>
    %358 = vector.broadcast %357 : vector<16x1xi1> to vector<16x128xi1>
    %359 = vector.broadcast %cst_102 : f32 to vector<16x128xf32>
    %360 = arith.select %358, %354, %359 : vector<16x128xi1>, vector<16x128xf32>
    %361 = arith.addf %278, %360 : vector<16x128xf32>
    %c4_i32 = arith.constant 4 : i32
    %362 = arith.index_cast %c4_i32 : i32 to index
    %c0_103 = arith.constant 0 : index
    %c0_104 = arith.constant 0 : index
    %363 = vector.load %arg11[%362, %c0_103, %c0_104] : memref<8x16x384xbf16, #tpu.memory_space<vmem>>, vector<1x16x384xbf16>
    %364 = vector.shape_cast %363 : vector<1x16x384xbf16> to vector<16x384xbf16>
    %365 = arith.extf %364 : vector<16x384xbf16> to vector<16x384xf32>
    %366 = arith.truncf %316 : vector<16x128xf32> to vector<16x128xbf16>
    %cst_105 = arith.constant dense<0.000000e+00> : vector<16x384xf32>
    %367 = tpu.matmul %366, %23, %cst_105 {dimension_numbers = #tpu.dot_dimension_numbers<[1], [0], [0], [1], [0, 0, 1, 1], [], []>} : vector<16x128xbf16>, vector<128x384xbf16>, vector<16x384xf32> -> vector<16x384xf32>
    %368 = vector.broadcast %24 : vector<1x384xf32> to vector<16x384xf32>
    %369 = arith.addf %367, %368 : vector<16x384xf32>
    %370 = vector.extract_strided_slice %365 {offsets = [0, 0], sizes = [16, 128], strides = [1, 1]} : vector<16x384xf32> to vector<16x128xf32>
    %371 = vector.extract_strided_slice %369 {offsets = [0, 0], sizes = [16, 128], strides = [1, 1]} : vector<16x384xf32> to vector<16x128xf32>
    %372 = arith.addf %370, %371 : vector<16x128xf32>
    %cst_106 = arith.constant 5.000000e-01 : f32
    %373 = vector.broadcast %cst_106 : f32 to vector<16x128xf32>
    %374 = arith.mulf %373, %372 : vector<16x128xf32>
    %375 = math.tanh %374 : vector<16x128xf32>
    %cst_107 = arith.constant 1.000000e+00 : f32
    %376 = vector.broadcast %cst_107 : f32 to vector<16x128xf32>
    %377 = arith.addf %375, %376 : vector<16x128xf32>
    %cst_108 = arith.constant 5.000000e-01 : f32
    %378 = vector.broadcast %cst_108 : f32 to vector<16x128xf32>
    %379 = arith.mulf %378, %377 : vector<16x128xf32>
    %380 = vector.extract_strided_slice %365 {offsets = [0, 128], sizes = [16, 128], strides = [1, 1]} : vector<16x384xf32> to vector<16x128xf32>
    %381 = vector.extract_strided_slice %369 {offsets = [0, 128], sizes = [16, 128], strides = [1, 1]} : vector<16x384xf32> to vector<16x128xf32>
    %382 = arith.addf %380, %381 : vector<16x128xf32>
    %cst_109 = arith.constant 5.000000e-01 : f32
    %383 = vector.broadcast %cst_109 : f32 to vector<16x128xf32>
    %384 = arith.mulf %383, %382 : vector<16x128xf32>
    %385 = math.tanh %384 : vector<16x128xf32>
    %cst_110 = arith.constant 1.000000e+00 : f32
    %386 = vector.broadcast %cst_110 : f32 to vector<16x128xf32>
    %387 = arith.addf %385, %386 : vector<16x128xf32>
    %cst_111 = arith.constant 5.000000e-01 : f32
    %388 = vector.broadcast %cst_111 : f32 to vector<16x128xf32>
    %389 = arith.mulf %388, %387 : vector<16x128xf32>
    %390 = vector.extract_strided_slice %365 {offsets = [0, 256], sizes = [16, 128], strides = [1, 1]} : vector<16x384xf32> to vector<16x128xf32>
    %391 = vector.extract_strided_slice %369 {offsets = [0, 256], sizes = [16, 128], strides = [1, 1]} : vector<16x384xf32> to vector<16x128xf32>
    %392 = arith.mulf %379, %391 : vector<16x128xf32>
    %393 = arith.addf %390, %392 : vector<16x128xf32>
    %394 = math.tanh %393 : vector<16x128xf32>
    %cst_112 = arith.constant 1.000000e+00 : f32
    %395 = vector.broadcast %cst_112 : f32 to vector<16x128xf32>
    %396 = arith.subf %395, %389 : vector<16x128xf32>
    %397 = arith.mulf %396, %394 : vector<16x128xf32>
    %398 = arith.mulf %389, %316 : vector<16x128xf32>
    %399 = arith.addf %397, %398 : vector<16x128xf32>
    %400 = arith.truncf %399 : vector<16x128xf32> to vector<16x128xbf16>
    %cst_113 = arith.constant dense<0.000000e+00> : vector<16x384xf32>
    %401 = tpu.matmul %400, %25, %cst_113 {dimension_numbers = #tpu.dot_dimension_numbers<[1], [0], [0], [1], [0, 0, 1, 1], [], []>} : vector<16x128xbf16>, vector<128x384xbf16>, vector<16x384xf32> -> vector<16x384xf32>
    %402 = vector.broadcast %27 : vector<1x384xf32> to vector<16x384xf32>
    %403 = arith.addf %401, %402 : vector<16x384xf32>
    %404 = arith.truncf %354 : vector<16x128xf32> to vector<16x128xbf16>
    %cst_114 = arith.constant dense<0.000000e+00> : vector<16x384xf32>
    %405 = tpu.matmul %404, %26, %cst_114 {dimension_numbers = #tpu.dot_dimension_numbers<[1], [0], [0], [1], [0, 0, 1, 1], [], []>} : vector<16x128xbf16>, vector<128x384xbf16>, vector<16x384xf32> -> vector<16x384xf32>
    %406 = vector.broadcast %28 : vector<1x384xf32> to vector<16x384xf32>
    %407 = arith.addf %405, %406 : vector<16x384xf32>
    %408 = vector.extract_strided_slice %403 {offsets = [0, 0], sizes = [16, 128], strides = [1, 1]} : vector<16x384xf32> to vector<16x128xf32>
    %409 = vector.extract_strided_slice %407 {offsets = [0, 0], sizes = [16, 128], strides = [1, 1]} : vector<16x384xf32> to vector<16x128xf32>
    %410 = arith.addf %408, %409 : vector<16x128xf32>
    %cst_115 = arith.constant 5.000000e-01 : f32
    %411 = vector.broadcast %cst_115 : f32 to vector<16x128xf32>
    %412 = arith.mulf %411, %410 : vector<16x128xf32>
    %413 = math.tanh %412 : vector<16x128xf32>
    %cst_116 = arith.constant 1.000000e+00 : f32
    %414 = vector.broadcast %cst_116 : f32 to vector<16x128xf32>
    %415 = arith.addf %413, %414 : vector<16x128xf32>
    %cst_117 = arith.constant 5.000000e-01 : f32
    %416 = vector.broadcast %cst_117 : f32 to vector<16x128xf32>
    %417 = arith.mulf %416, %415 : vector<16x128xf32>
    %418 = vector.extract_strided_slice %403 {offsets = [0, 128], sizes = [16, 128], strides = [1, 1]} : vector<16x384xf32> to vector<16x128xf32>
    %419 = vector.extract_strided_slice %407 {offsets = [0, 128], sizes = [16, 128], strides = [1, 1]} : vector<16x384xf32> to vector<16x128xf32>
    %420 = arith.addf %418, %419 : vector<16x128xf32>
    %cst_118 = arith.constant 5.000000e-01 : f32
    %421 = vector.broadcast %cst_118 : f32 to vector<16x128xf32>
    %422 = arith.mulf %421, %420 : vector<16x128xf32>
    %423 = math.tanh %422 : vector<16x128xf32>
    %cst_119 = arith.constant 1.000000e+00 : f32
    %424 = vector.broadcast %cst_119 : f32 to vector<16x128xf32>
    %425 = arith.addf %423, %424 : vector<16x128xf32>
    %cst_120 = arith.constant 5.000000e-01 : f32
    %426 = vector.broadcast %cst_120 : f32 to vector<16x128xf32>
    %427 = arith.mulf %426, %425 : vector<16x128xf32>
    %428 = vector.extract_strided_slice %403 {offsets = [0, 256], sizes = [16, 128], strides = [1, 1]} : vector<16x384xf32> to vector<16x128xf32>
    %429 = vector.extract_strided_slice %407 {offsets = [0, 256], sizes = [16, 128], strides = [1, 1]} : vector<16x384xf32> to vector<16x128xf32>
    %430 = arith.mulf %417, %429 : vector<16x128xf32>
    %431 = arith.addf %428, %430 : vector<16x128xf32>
    %432 = math.tanh %431 : vector<16x128xf32>
    %cst_121 = arith.constant 1.000000e+00 : f32
    %433 = vector.broadcast %cst_121 : f32 to vector<16x128xf32>
    %434 = arith.subf %433, %427 : vector<16x128xf32>
    %435 = arith.mulf %434, %432 : vector<16x128xf32>
    %436 = arith.mulf %427, %354 : vector<16x128xf32>
    %437 = arith.addf %435, %436 : vector<16x128xf32>
    %438 = vector.broadcast %c4_i32 : i32 to vector<16x1xi32>
    %439 = arith.cmpi sgt, %5, %438 : vector<16x1xi32>
    %cst_122 = arith.constant 0.000000e+00 : f32
    %440 = vector.shape_cast %439 : vector<16x1xi1> to vector<16x1xi1>
    %441 = vector.broadcast %440 : vector<16x1xi1> to vector<16x128xi1>
    %442 = vector.broadcast %cst_122 : f32 to vector<16x128xf32>
    %443 = arith.select %441, %437, %442 : vector<16x128xi1>, vector<16x128xf32>
    %444 = arith.addf %361, %443 : vector<16x128xf32>
    %c5_i32 = arith.constant 5 : i32
    %445 = arith.index_cast %c5_i32 : i32 to index
    %c0_123 = arith.constant 0 : index
    %c0_124 = arith.constant 0 : index
    %446 = vector.load %arg11[%445, %c0_123, %c0_124] : memref<8x16x384xbf16, #tpu.memory_space<vmem>>, vector<1x16x384xbf16>
    %447 = vector.shape_cast %446 : vector<1x16x384xbf16> to vector<16x384xbf16>
    %448 = arith.extf %447 : vector<16x384xbf16> to vector<16x384xf32>
    %449 = arith.truncf %399 : vector<16x128xf32> to vector<16x128xbf16>
    %cst_125 = arith.constant dense<0.000000e+00> : vector<16x384xf32>
    %450 = tpu.matmul %449, %23, %cst_125 {dimension_numbers = #tpu.dot_dimension_numbers<[1], [0], [0], [1], [0, 0, 1, 1], [], []>} : vector<16x128xbf16>, vector<128x384xbf16>, vector<16x384xf32> -> vector<16x384xf32>
    %451 = vector.broadcast %24 : vector<1x384xf32> to vector<16x384xf32>
    %452 = arith.addf %450, %451 : vector<16x384xf32>
    %453 = vector.extract_strided_slice %448 {offsets = [0, 0], sizes = [16, 128], strides = [1, 1]} : vector<16x384xf32> to vector<16x128xf32>
    %454 = vector.extract_strided_slice %452 {offsets = [0, 0], sizes = [16, 128], strides = [1, 1]} : vector<16x384xf32> to vector<16x128xf32>
    %455 = arith.addf %453, %454 : vector<16x128xf32>
    %cst_126 = arith.constant 5.000000e-01 : f32
    %456 = vector.broadcast %cst_126 : f32 to vector<16x128xf32>
    %457 = arith.mulf %456, %455 : vector<16x128xf32>
    %458 = math.tanh %457 : vector<16x128xf32>
    %cst_127 = arith.constant 1.000000e+00 : f32
    %459 = vector.broadcast %cst_127 : f32 to vector<16x128xf32>
    %460 = arith.addf %458, %459 : vector<16x128xf32>
    %cst_128 = arith.constant 5.000000e-01 : f32
    %461 = vector.broadcast %cst_128 : f32 to vector<16x128xf32>
    %462 = arith.mulf %461, %460 : vector<16x128xf32>
    %463 = vector.extract_strided_slice %448 {offsets = [0, 128], sizes = [16, 128], strides = [1, 1]} : vector<16x384xf32> to vector<16x128xf32>
    %464 = vector.extract_strided_slice %452 {offsets = [0, 128], sizes = [16, 128], strides = [1, 1]} : vector<16x384xf32> to vector<16x128xf32>
    %465 = arith.addf %463, %464 : vector<16x128xf32>
    %cst_129 = arith.constant 5.000000e-01 : f32
    %466 = vector.broadcast %cst_129 : f32 to vector<16x128xf32>
    %467 = arith.mulf %466, %465 : vector<16x128xf32>
    %468 = math.tanh %467 : vector<16x128xf32>
    %cst_130 = arith.constant 1.000000e+00 : f32
    %469 = vector.broadcast %cst_130 : f32 to vector<16x128xf32>
    %470 = arith.addf %468, %469 : vector<16x128xf32>
    %cst_131 = arith.constant 5.000000e-01 : f32
    %471 = vector.broadcast %cst_131 : f32 to vector<16x128xf32>
    %472 = arith.mulf %471, %470 : vector<16x128xf32>
    %473 = vector.extract_strided_slice %448 {offsets = [0, 256], sizes = [16, 128], strides = [1, 1]} : vector<16x384xf32> to vector<16x128xf32>
    %474 = vector.extract_strided_slice %452 {offsets = [0, 256], sizes = [16, 128], strides = [1, 1]} : vector<16x384xf32> to vector<16x128xf32>
    %475 = arith.mulf %462, %474 : vector<16x128xf32>
    %476 = arith.addf %473, %475 : vector<16x128xf32>
    %477 = math.tanh %476 : vector<16x128xf32>
    %cst_132 = arith.constant 1.000000e+00 : f32
    %478 = vector.broadcast %cst_132 : f32 to vector<16x128xf32>
    %479 = arith.subf %478, %472 : vector<16x128xf32>
    %480 = arith.mulf %479, %477 : vector<16x128xf32>
    %481 = arith.mulf %472, %399 : vector<16x128xf32>
    %482 = arith.addf %480, %481 : vector<16x128xf32>
    %483 = arith.truncf %482 : vector<16x128xf32> to vector<16x128xbf16>
    %cst_133 = arith.constant dense<0.000000e+00> : vector<16x384xf32>
    %484 = tpu.matmul %483, %25, %cst_133 {dimension_numbers = #tpu.dot_dimension_numbers<[1], [0], [0], [1], [0, 0, 1, 1], [], []>} : vector<16x128xbf16>, vector<128x384xbf16>, vector<16x384xf32> -> vector<16x384xf32>
    %485 = vector.broadcast %27 : vector<1x384xf32> to vector<16x384xf32>
    %486 = arith.addf %484, %485 : vector<16x384xf32>
    %487 = arith.truncf %437 : vector<16x128xf32> to vector<16x128xbf16>
    %cst_134 = arith.constant dense<0.000000e+00> : vector<16x384xf32>
    %488 = tpu.matmul %487, %26, %cst_134 {dimension_numbers = #tpu.dot_dimension_numbers<[1], [0], [0], [1], [0, 0, 1, 1], [], []>} : vector<16x128xbf16>, vector<128x384xbf16>, vector<16x384xf32> -> vector<16x384xf32>
    %489 = vector.broadcast %28 : vector<1x384xf32> to vector<16x384xf32>
    %490 = arith.addf %488, %489 : vector<16x384xf32>
    %491 = vector.extract_strided_slice %486 {offsets = [0, 0], sizes = [16, 128], strides = [1, 1]} : vector<16x384xf32> to vector<16x128xf32>
    %492 = vector.extract_strided_slice %490 {offsets = [0, 0], sizes = [16, 128], strides = [1, 1]} : vector<16x384xf32> to vector<16x128xf32>
    %493 = arith.addf %491, %492 : vector<16x128xf32>
    %cst_135 = arith.constant 5.000000e-01 : f32
    %494 = vector.broadcast %cst_135 : f32 to vector<16x128xf32>
    %495 = arith.mulf %494, %493 : vector<16x128xf32>
    %496 = math.tanh %495 : vector<16x128xf32>
    %cst_136 = arith.constant 1.000000e+00 : f32
    %497 = vector.broadcast %cst_136 : f32 to vector<16x128xf32>
    %498 = arith.addf %496, %497 : vector<16x128xf32>
    %cst_137 = arith.constant 5.000000e-01 : f32
    %499 = vector.broadcast %cst_137 : f32 to vector<16x128xf32>
    %500 = arith.mulf %499, %498 : vector<16x128xf32>
    %501 = vector.extract_strided_slice %486 {offsets = [0, 128], sizes = [16, 128], strides = [1, 1]} : vector<16x384xf32> to vector<16x128xf32>
    %502 = vector.extract_strided_slice %490 {offsets = [0, 128], sizes = [16, 128], strides = [1, 1]} : vector<16x384xf32> to vector<16x128xf32>
    %503 = arith.addf %501, %502 : vector<16x128xf32>
    %cst_138 = arith.constant 5.000000e-01 : f32
    %504 = vector.broadcast %cst_138 : f32 to vector<16x128xf32>
    %505 = arith.mulf %504, %503 : vector<16x128xf32>
    %506 = math.tanh %505 : vector<16x128xf32>
    %cst_139 = arith.constant 1.000000e+00 : f32
    %507 = vector.broadcast %cst_139 : f32 to vector<16x128xf32>
    %508 = arith.addf %506, %507 : vector<16x128xf32>
    %cst_140 = arith.constant 5.000000e-01 : f32
    %509 = vector.broadcast %cst_140 : f32 to vector<16x128xf32>
    %510 = arith.mulf %509, %508 : vector<16x128xf32>
    %511 = vector.extract_strided_slice %486 {offsets = [0, 256], sizes = [16, 128], strides = [1, 1]} : vector<16x384xf32> to vector<16x128xf32>
    %512 = vector.extract_strided_slice %490 {offsets = [0, 256], sizes = [16, 128], strides = [1, 1]} : vector<16x384xf32> to vector<16x128xf32>
    %513 = arith.mulf %500, %512 : vector<16x128xf32>
    %514 = arith.addf %511, %513 : vector<16x128xf32>
    %515 = math.tanh %514 : vector<16x128xf32>
    %cst_141 = arith.constant 1.000000e+00 : f32
    %516 = vector.broadcast %cst_141 : f32 to vector<16x128xf32>
    %517 = arith.subf %516, %510 : vector<16x128xf32>
    %518 = arith.mulf %517, %515 : vector<16x128xf32>
    %519 = arith.mulf %510, %437 : vector<16x128xf32>
    %520 = arith.addf %518, %519 : vector<16x128xf32>
    %521 = vector.broadcast %c5_i32 : i32 to vector<16x1xi32>
    %522 = arith.cmpi sgt, %5, %521 : vector<16x1xi32>
    %cst_142 = arith.constant 0.000000e+00 : f32
    %523 = vector.shape_cast %522 : vector<16x1xi1> to vector<16x1xi1>
    %524 = vector.broadcast %523 : vector<16x1xi1> to vector<16x128xi1>
    %525 = vector.broadcast %cst_142 : f32 to vector<16x128xf32>
    %526 = arith.select %524, %520, %525 : vector<16x128xi1>, vector<16x128xf32>
    %527 = arith.addf %444, %526 : vector<16x128xf32>
    %c6_i32 = arith.constant 6 : i32
    %528 = arith.index_cast %c6_i32 : i32 to index
    %c0_143 = arith.constant 0 : index
    %c0_144 = arith.constant 0 : index
    %529 = vector.load %arg11[%528, %c0_143, %c0_144] : memref<8x16x384xbf16, #tpu.memory_space<vmem>>, vector<1x16x384xbf16>
    %530 = vector.shape_cast %529 : vector<1x16x384xbf16> to vector<16x384xbf16>
    %531 = arith.extf %530 : vector<16x384xbf16> to vector<16x384xf32>
    %532 = arith.truncf %482 : vector<16x128xf32> to vector<16x128xbf16>
    %cst_145 = arith.constant dense<0.000000e+00> : vector<16x384xf32>
    %533 = tpu.matmul %532, %23, %cst_145 {dimension_numbers = #tpu.dot_dimension_numbers<[1], [0], [0], [1], [0, 0, 1, 1], [], []>} : vector<16x128xbf16>, vector<128x384xbf16>, vector<16x384xf32> -> vector<16x384xf32>
    %534 = vector.broadcast %24 : vector<1x384xf32> to vector<16x384xf32>
    %535 = arith.addf %533, %534 : vector<16x384xf32>
    %536 = vector.extract_strided_slice %531 {offsets = [0, 0], sizes = [16, 128], strides = [1, 1]} : vector<16x384xf32> to vector<16x128xf32>
    %537 = vector.extract_strided_slice %535 {offsets = [0, 0], sizes = [16, 128], strides = [1, 1]} : vector<16x384xf32> to vector<16x128xf32>
    %538 = arith.addf %536, %537 : vector<16x128xf32>
    %cst_146 = arith.constant 5.000000e-01 : f32
    %539 = vector.broadcast %cst_146 : f32 to vector<16x128xf32>
    %540 = arith.mulf %539, %538 : vector<16x128xf32>
    %541 = math.tanh %540 : vector<16x128xf32>
    %cst_147 = arith.constant 1.000000e+00 : f32
    %542 = vector.broadcast %cst_147 : f32 to vector<16x128xf32>
    %543 = arith.addf %541, %542 : vector<16x128xf32>
    %cst_148 = arith.constant 5.000000e-01 : f32
    %544 = vector.broadcast %cst_148 : f32 to vector<16x128xf32>
    %545 = arith.mulf %544, %543 : vector<16x128xf32>
    %546 = vector.extract_strided_slice %531 {offsets = [0, 128], sizes = [16, 128], strides = [1, 1]} : vector<16x384xf32> to vector<16x128xf32>
    %547 = vector.extract_strided_slice %535 {offsets = [0, 128], sizes = [16, 128], strides = [1, 1]} : vector<16x384xf32> to vector<16x128xf32>
    %548 = arith.addf %546, %547 : vector<16x128xf32>
    %cst_149 = arith.constant 5.000000e-01 : f32
    %549 = vector.broadcast %cst_149 : f32 to vector<16x128xf32>
    %550 = arith.mulf %549, %548 : vector<16x128xf32>
    %551 = math.tanh %550 : vector<16x128xf32>
    %cst_150 = arith.constant 1.000000e+00 : f32
    %552 = vector.broadcast %cst_150 : f32 to vector<16x128xf32>
    %553 = arith.addf %551, %552 : vector<16x128xf32>
    %cst_151 = arith.constant 5.000000e-01 : f32
    %554 = vector.broadcast %cst_151 : f32 to vector<16x128xf32>
    %555 = arith.mulf %554, %553 : vector<16x128xf32>
    %556 = vector.extract_strided_slice %531 {offsets = [0, 256], sizes = [16, 128], strides = [1, 1]} : vector<16x384xf32> to vector<16x128xf32>
    %557 = vector.extract_strided_slice %535 {offsets = [0, 256], sizes = [16, 128], strides = [1, 1]} : vector<16x384xf32> to vector<16x128xf32>
    %558 = arith.mulf %545, %557 : vector<16x128xf32>
    %559 = arith.addf %556, %558 : vector<16x128xf32>
    %560 = math.tanh %559 : vector<16x128xf32>
    %cst_152 = arith.constant 1.000000e+00 : f32
    %561 = vector.broadcast %cst_152 : f32 to vector<16x128xf32>
    %562 = arith.subf %561, %555 : vector<16x128xf32>
    %563 = arith.mulf %562, %560 : vector<16x128xf32>
    %564 = arith.mulf %555, %482 : vector<16x128xf32>
    %565 = arith.addf %563, %564 : vector<16x128xf32>
    %566 = arith.truncf %565 : vector<16x128xf32> to vector<16x128xbf16>
    %cst_153 = arith.constant dense<0.000000e+00> : vector<16x384xf32>
    %567 = tpu.matmul %566, %25, %cst_153 {dimension_numbers = #tpu.dot_dimension_numbers<[1], [0], [0], [1], [0, 0, 1, 1], [], []>} : vector<16x128xbf16>, vector<128x384xbf16>, vector<16x384xf32> -> vector<16x384xf32>
    %568 = vector.broadcast %27 : vector<1x384xf32> to vector<16x384xf32>
    %569 = arith.addf %567, %568 : vector<16x384xf32>
    %570 = arith.truncf %520 : vector<16x128xf32> to vector<16x128xbf16>
    %cst_154 = arith.constant dense<0.000000e+00> : vector<16x384xf32>
    %571 = tpu.matmul %570, %26, %cst_154 {dimension_numbers = #tpu.dot_dimension_numbers<[1], [0], [0], [1], [0, 0, 1, 1], [], []>} : vector<16x128xbf16>, vector<128x384xbf16>, vector<16x384xf32> -> vector<16x384xf32>
    %572 = vector.broadcast %28 : vector<1x384xf32> to vector<16x384xf32>
    %573 = arith.addf %571, %572 : vector<16x384xf32>
    %574 = vector.extract_strided_slice %569 {offsets = [0, 0], sizes = [16, 128], strides = [1, 1]} : vector<16x384xf32> to vector<16x128xf32>
    %575 = vector.extract_strided_slice %573 {offsets = [0, 0], sizes = [16, 128], strides = [1, 1]} : vector<16x384xf32> to vector<16x128xf32>
    %576 = arith.addf %574, %575 : vector<16x128xf32>
    %cst_155 = arith.constant 5.000000e-01 : f32
    %577 = vector.broadcast %cst_155 : f32 to vector<16x128xf32>
    %578 = arith.mulf %577, %576 : vector<16x128xf32>
    %579 = math.tanh %578 : vector<16x128xf32>
    %cst_156 = arith.constant 1.000000e+00 : f32
    %580 = vector.broadcast %cst_156 : f32 to vector<16x128xf32>
    %581 = arith.addf %579, %580 : vector<16x128xf32>
    %cst_157 = arith.constant 5.000000e-01 : f32
    %582 = vector.broadcast %cst_157 : f32 to vector<16x128xf32>
    %583 = arith.mulf %582, %581 : vector<16x128xf32>
    %584 = vector.extract_strided_slice %569 {offsets = [0, 128], sizes = [16, 128], strides = [1, 1]} : vector<16x384xf32> to vector<16x128xf32>
    %585 = vector.extract_strided_slice %573 {offsets = [0, 128], sizes = [16, 128], strides = [1, 1]} : vector<16x384xf32> to vector<16x128xf32>
    %586 = arith.addf %584, %585 : vector<16x128xf32>
    %cst_158 = arith.constant 5.000000e-01 : f32
    %587 = vector.broadcast %cst_158 : f32 to vector<16x128xf32>
    %588 = arith.mulf %587, %586 : vector<16x128xf32>
    %589 = math.tanh %588 : vector<16x128xf32>
    %cst_159 = arith.constant 1.000000e+00 : f32
    %590 = vector.broadcast %cst_159 : f32 to vector<16x128xf32>
    %591 = arith.addf %589, %590 : vector<16x128xf32>
    %cst_160 = arith.constant 5.000000e-01 : f32
    %592 = vector.broadcast %cst_160 : f32 to vector<16x128xf32>
    %593 = arith.mulf %592, %591 : vector<16x128xf32>
    %594 = vector.extract_strided_slice %569 {offsets = [0, 256], sizes = [16, 128], strides = [1, 1]} : vector<16x384xf32> to vector<16x128xf32>
    %595 = vector.extract_strided_slice %573 {offsets = [0, 256], sizes = [16, 128], strides = [1, 1]} : vector<16x384xf32> to vector<16x128xf32>
    %596 = arith.mulf %583, %595 : vector<16x128xf32>
    %597 = arith.addf %594, %596 : vector<16x128xf32>
    %598 = math.tanh %597 : vector<16x128xf32>
    %cst_161 = arith.constant 1.000000e+00 : f32
    %599 = vector.broadcast %cst_161 : f32 to vector<16x128xf32>
    %600 = arith.subf %599, %593 : vector<16x128xf32>
    %601 = arith.mulf %600, %598 : vector<16x128xf32>
    %602 = arith.mulf %593, %520 : vector<16x128xf32>
    %603 = arith.addf %601, %602 : vector<16x128xf32>
    %604 = vector.broadcast %c6_i32 : i32 to vector<16x1xi32>
    %605 = arith.cmpi sgt, %5, %604 : vector<16x1xi32>
    %cst_162 = arith.constant 0.000000e+00 : f32
    %606 = vector.shape_cast %605 : vector<16x1xi1> to vector<16x1xi1>
    %607 = vector.broadcast %606 : vector<16x1xi1> to vector<16x128xi1>
    %608 = vector.broadcast %cst_162 : f32 to vector<16x128xf32>
    %609 = arith.select %607, %603, %608 : vector<16x128xi1>, vector<16x128xf32>
    %610 = arith.addf %527, %609 : vector<16x128xf32>
    %c7_i32 = arith.constant 7 : i32
    %611 = arith.index_cast %c7_i32 : i32 to index
    %c0_163 = arith.constant 0 : index
    %c0_164 = arith.constant 0 : index
    %612 = vector.load %arg11[%611, %c0_163, %c0_164] : memref<8x16x384xbf16, #tpu.memory_space<vmem>>, vector<1x16x384xbf16>
    %613 = vector.shape_cast %612 : vector<1x16x384xbf16> to vector<16x384xbf16>
    %614 = arith.extf %613 : vector<16x384xbf16> to vector<16x384xf32>
    %615 = arith.truncf %565 : vector<16x128xf32> to vector<16x128xbf16>
    %cst_165 = arith.constant dense<0.000000e+00> : vector<16x384xf32>
    %616 = tpu.matmul %615, %23, %cst_165 {dimension_numbers = #tpu.dot_dimension_numbers<[1], [0], [0], [1], [0, 0, 1, 1], [], []>} : vector<16x128xbf16>, vector<128x384xbf16>, vector<16x384xf32> -> vector<16x384xf32>
    %617 = vector.broadcast %24 : vector<1x384xf32> to vector<16x384xf32>
    %618 = arith.addf %616, %617 : vector<16x384xf32>
    %619 = vector.extract_strided_slice %614 {offsets = [0, 0], sizes = [16, 128], strides = [1, 1]} : vector<16x384xf32> to vector<16x128xf32>
    %620 = vector.extract_strided_slice %618 {offsets = [0, 0], sizes = [16, 128], strides = [1, 1]} : vector<16x384xf32> to vector<16x128xf32>
    %621 = arith.addf %619, %620 : vector<16x128xf32>
    %cst_166 = arith.constant 5.000000e-01 : f32
    %622 = vector.broadcast %cst_166 : f32 to vector<16x128xf32>
    %623 = arith.mulf %622, %621 : vector<16x128xf32>
    %624 = math.tanh %623 : vector<16x128xf32>
    %cst_167 = arith.constant 1.000000e+00 : f32
    %625 = vector.broadcast %cst_167 : f32 to vector<16x128xf32>
    %626 = arith.addf %624, %625 : vector<16x128xf32>
    %cst_168 = arith.constant 5.000000e-01 : f32
    %627 = vector.broadcast %cst_168 : f32 to vector<16x128xf32>
    %628 = arith.mulf %627, %626 : vector<16x128xf32>
    %629 = vector.extract_strided_slice %614 {offsets = [0, 128], sizes = [16, 128], strides = [1, 1]} : vector<16x384xf32> to vector<16x128xf32>
    %630 = vector.extract_strided_slice %618 {offsets = [0, 128], sizes = [16, 128], strides = [1, 1]} : vector<16x384xf32> to vector<16x128xf32>
    %631 = arith.addf %629, %630 : vector<16x128xf32>
    %cst_169 = arith.constant 5.000000e-01 : f32
    %632 = vector.broadcast %cst_169 : f32 to vector<16x128xf32>
    %633 = arith.mulf %632, %631 : vector<16x128xf32>
    %634 = math.tanh %633 : vector<16x128xf32>
    %cst_170 = arith.constant 1.000000e+00 : f32
    %635 = vector.broadcast %cst_170 : f32 to vector<16x128xf32>
    %636 = arith.addf %634, %635 : vector<16x128xf32>
    %cst_171 = arith.constant 5.000000e-01 : f32
    %637 = vector.broadcast %cst_171 : f32 to vector<16x128xf32>
    %638 = arith.mulf %637, %636 : vector<16x128xf32>
    %639 = vector.extract_strided_slice %614 {offsets = [0, 256], sizes = [16, 128], strides = [1, 1]} : vector<16x384xf32> to vector<16x128xf32>
    %640 = vector.extract_strided_slice %618 {offsets = [0, 256], sizes = [16, 128], strides = [1, 1]} : vector<16x384xf32> to vector<16x128xf32>
    %641 = arith.mulf %628, %640 : vector<16x128xf32>
    %642 = arith.addf %639, %641 : vector<16x128xf32>
    %643 = math.tanh %642 : vector<16x128xf32>
    %cst_172 = arith.constant 1.000000e+00 : f32
    %644 = vector.broadcast %cst_172 : f32 to vector<16x128xf32>
    %645 = arith.subf %644, %638 : vector<16x128xf32>
    %646 = arith.mulf %645, %643 : vector<16x128xf32>
    %647 = arith.mulf %638, %565 : vector<16x128xf32>
    %648 = arith.addf %646, %647 : vector<16x128xf32>
    %649 = arith.truncf %648 : vector<16x128xf32> to vector<16x128xbf16>
    %cst_173 = arith.constant dense<0.000000e+00> : vector<16x384xf32>
    %650 = tpu.matmul %649, %25, %cst_173 {dimension_numbers = #tpu.dot_dimension_numbers<[1], [0], [0], [1], [0, 0, 1, 1], [], []>} : vector<16x128xbf16>, vector<128x384xbf16>, vector<16x384xf32> -> vector<16x384xf32>
    %651 = vector.broadcast %27 : vector<1x384xf32> to vector<16x384xf32>
    %652 = arith.addf %650, %651 : vector<16x384xf32>
    %653 = arith.truncf %603 : vector<16x128xf32> to vector<16x128xbf16>
    %cst_174 = arith.constant dense<0.000000e+00> : vector<16x384xf32>
    %654 = tpu.matmul %653, %26, %cst_174 {dimension_numbers = #tpu.dot_dimension_numbers<[1], [0], [0], [1], [0, 0, 1, 1], [], []>} : vector<16x128xbf16>, vector<128x384xbf16>, vector<16x384xf32> -> vector<16x384xf32>
    %655 = vector.broadcast %28 : vector<1x384xf32> to vector<16x384xf32>
    %656 = arith.addf %654, %655 : vector<16x384xf32>
    %657 = vector.extract_strided_slice %652 {offsets = [0, 0], sizes = [16, 128], strides = [1, 1]} : vector<16x384xf32> to vector<16x128xf32>
    %658 = vector.extract_strided_slice %656 {offsets = [0, 0], sizes = [16, 128], strides = [1, 1]} : vector<16x384xf32> to vector<16x128xf32>
    %659 = arith.addf %657, %658 : vector<16x128xf32>
    %cst_175 = arith.constant 5.000000e-01 : f32
    %660 = vector.broadcast %cst_175 : f32 to vector<16x128xf32>
    %661 = arith.mulf %660, %659 : vector<16x128xf32>
    %662 = math.tanh %661 : vector<16x128xf32>
    %cst_176 = arith.constant 1.000000e+00 : f32
    %663 = vector.broadcast %cst_176 : f32 to vector<16x128xf32>
    %664 = arith.addf %662, %663 : vector<16x128xf32>
    %cst_177 = arith.constant 5.000000e-01 : f32
    %665 = vector.broadcast %cst_177 : f32 to vector<16x128xf32>
    %666 = arith.mulf %665, %664 : vector<16x128xf32>
    %667 = vector.extract_strided_slice %652 {offsets = [0, 128], sizes = [16, 128], strides = [1, 1]} : vector<16x384xf32> to vector<16x128xf32>
    %668 = vector.extract_strided_slice %656 {offsets = [0, 128], sizes = [16, 128], strides = [1, 1]} : vector<16x384xf32> to vector<16x128xf32>
    %669 = arith.addf %667, %668 : vector<16x128xf32>
    %cst_178 = arith.constant 5.000000e-01 : f32
    %670 = vector.broadcast %cst_178 : f32 to vector<16x128xf32>
    %671 = arith.mulf %670, %669 : vector<16x128xf32>
    %672 = math.tanh %671 : vector<16x128xf32>
    %cst_179 = arith.constant 1.000000e+00 : f32
    %673 = vector.broadcast %cst_179 : f32 to vector<16x128xf32>
    %674 = arith.addf %672, %673 : vector<16x128xf32>
    %cst_180 = arith.constant 5.000000e-01 : f32
    %675 = vector.broadcast %cst_180 : f32 to vector<16x128xf32>
    %676 = arith.mulf %675, %674 : vector<16x128xf32>
    %677 = vector.extract_strided_slice %652 {offsets = [0, 256], sizes = [16, 128], strides = [1, 1]} : vector<16x384xf32> to vector<16x128xf32>
    %678 = vector.extract_strided_slice %656 {offsets = [0, 256], sizes = [16, 128], strides = [1, 1]} : vector<16x384xf32> to vector<16x128xf32>
    %679 = arith.mulf %666, %678 : vector<16x128xf32>
    %680 = arith.addf %677, %679 : vector<16x128xf32>
    %681 = math.tanh %680 : vector<16x128xf32>
    %cst_181 = arith.constant 1.000000e+00 : f32
    %682 = vector.broadcast %cst_181 : f32 to vector<16x128xf32>
    %683 = arith.subf %682, %676 : vector<16x128xf32>
    %684 = arith.mulf %683, %681 : vector<16x128xf32>
    %685 = arith.mulf %676, %603 : vector<16x128xf32>
    %686 = arith.addf %684, %685 : vector<16x128xf32>
    %687 = vector.broadcast %c7_i32 : i32 to vector<16x1xi32>
    %688 = arith.cmpi sgt, %5, %687 : vector<16x1xi32>
    %cst_182 = arith.constant 0.000000e+00 : f32
    %689 = vector.shape_cast %688 : vector<16x1xi1> to vector<16x1xi1>
    %690 = vector.broadcast %689 : vector<16x1xi1> to vector<16x128xi1>
    %691 = vector.broadcast %cst_182 : f32 to vector<16x128xf32>
    %692 = arith.select %690, %686, %691 : vector<16x128xi1>, vector<16x128xf32>
    %693 = arith.addf %610, %692 : vector<16x128xf32>
    %c8_i32 = arith.constant 8 : i32
    %694 = arith.sitofp %5 : vector<16x1xi32> to vector<16x1xf32>
    %cst_183 = arith.constant 1.000000e+00 : f32
    %695 = vector.broadcast %cst_183 : f32 to vector<16x1xf32>
    %696 = arith.maximumf %694, %695 : vector<16x1xf32>
    %697 = vector.broadcast %696 : vector<16x1xf32> to vector<16x128xf32>
    %698 = arith.divf %693, %697 : vector<16x128xf32>
    %c0_184 = arith.constant 0 : index
    %c0_185 = arith.constant 0 : index
    %699 = vector.load %arg10[%c0_184, %c0_185] : memref<16x128xf32, #tpu.memory_space<vmem>>, vector<16x128xf32>
    tpu.vector_store %arg10[%c0_184, %c0_185], %698 {strides = array<i32>} : memref<16x128xf32, #tpu.memory_space<vmem>>, vector<16x128xf32>,
    return
  }
  func.func @transform_0(%arg0: i32) -> (i32, i32) {
    %c0_i32 = arith.constant 0 : i32
    %c0_i32_0 = arith.constant 0 : i32
    return %arg0, %c0_i32 : i32, i32
  }
  func.func @transform_1(%arg0: i32) -> (i32, i32) {
    %c0_i32 = arith.constant 0 : i32
    %c0_i32_0 = arith.constant 0 : i32
    %c0_i32_1 = arith.constant 0 : i32
    return %c0_i32, %c0_i32_0 : i32, i32
  }
  func.func @transform_2(%arg0: i32) -> (i32, i32) {
    %c0_i32 = arith.constant 0 : i32
    %c0_i32_0 = arith.constant 0 : i32
    %c0_i32_1 = arith.constant 0 : i32
    return %c0_i32, %c0_i32_0 : i32, i32
  }
  func.func @transform_3(%arg0: i32) -> (i32, i32) {
    %c0_i32 = arith.constant 0 : i32
    %c0_i32_0 = arith.constant 0 : i32
    %c0_i32_1 = arith.constant 0 : i32
    return %c0_i32, %c0_i32_0 : i32, i32
  }
  func.func @transform_4(%arg0: i32) -> (i32, i32) {
    %c0_i32 = arith.constant 0 : i32
    %c0_i32_0 = arith.constant 0 : i32
    %c0_i32_1 = arith.constant 0 : i32
    return %c0_i32, %c0_i32_0 : i32, i32
  }
  func.func @transform_5(%arg0: i32) -> (i32, i32) {
    %c0_i32 = arith.constant 0 : i32
    %c0_i32_0 = arith.constant 0 : i32
    %c0_i32_1 = arith.constant 0 : i32
    return %c0_i32, %c0_i32_0 : i32, i32
  }
  func.func @transform_6(%arg0: i32) -> (i32, i32) {
    %c0_i32 = arith.constant 0 : i32
    %c0_i32_0 = arith.constant 0 : i32
    %c0_i32_1 = arith.constant 0 : i32
    return %c0_i32, %c0_i32_0 : i32, i32
  }
  func.func @transform_7(%arg0: i32) -> (i32, i32) {
    %c0_i32 = arith.constant 0 : i32
    %c0_i32_0 = arith.constant 0 : i32
    %c0_i32_1 = arith.constant 0 : i32
    return %c0_i32, %c0_i32_0 : i32, i32
  }
  func.func @transform_8(%arg0: i32) -> (i32, i32) {
    %c0_i32 = arith.constant 0 : i32
    %c0_i32_0 = arith.constant 0 : i32
    %c0_i32_1 = arith.constant 0 : i32
    return %c0_i32, %c0_i32_0 : i32, i32
  }
  func.func @transform_9(%arg0: i32) -> (i32, i32) {
    %c0_i32 = arith.constant 0 : i32
    %c0_i32_0 = arith.constant 0 : i32
    return %arg0, %c0_i32 : i32, i32
  }
}

</mosaic_0001>

<llo_original>
// kernel: forward.3
$region0: #{forward.3}
  #allocation0 [shape = 'u32[]', space=smem, size = 0x4, offset = 0x4, fixed_abs, tag = 'smem constant byte address 0x4 - core index']
  #allocation1 [shape = 'u32[144,128]{1,0:T(1,128)}', space=vmem, size = 0x12000, scoped, tag = 'internal scratch']
  %s0 = inlined_call_operand.vmem [shape: f32[16,128], index: 0, kind: input, shape index: {}]
  %s1 = inlined_call_operand.vmem [shape: f32[128,128], index: 1, kind: input, shape index: {}]
  %s2 = inlined_call_operand.hbm [shape: f32[16,128], index: 2, kind: output, shape index: {0}]
  %s3 = inlined_call_operand.hbm [shape: f32[1,1], index: 3, kind: output, shape index: {1}]
  %4 = xla_tuple %s2, %s3
  %s5 = sld [smem:[#allocation0]]
  $region26: #{forward.3} parent=0
    _
  %s7 = ssub.s32 1, %s5
  %s8 = scalar_select 0, %s7, %s5
  $region1: #{forward.3} parent=0
    #allocation2 [shape = 'u8[8192]{0}', space=vmem, size = 0x2000, scoped, tag = 'output window, operand 0, single buffered']
    #allocation3 [shape = 's32[1]{0}', space=sflag, size = 0x4, scoped, tag = 'scoped memory for forward.3']
    #allocation4 [shape = 's32[1]{0}', space=sflag, size = 0x4, scoped, tag = 'scoped memory for forward.3']
    #allocation5 [shape = 'u8[512]{0}', space=smem, size = 0x200, scoped, tag = 'output window, operand 1, single buffered']
    %9 = vsyncpa [#allocation3], 0
    %10 = vsyncpa [#allocation4], 0
    // Predicated region
    $region2: #{forward.3} parent=1 // pred_check
      _
    $region3: #{forward.3} parent=1 // pred_check_branch
      %12 = sbr.rel (0) target = $region5
    $region4: #{forward.3} parent=1 // pred_region
      _
    $region5: #{forward.3} parent=1 // pred_fallthru
      _
    // Predicated region
    $region6: #{forward.3} parent=1 // pred_check
      _
    $region7: #{forward.3} parent=1 // pred_check_branch
      %14 = sbr.rel (0) target = $region9
    $region8: #{forward.3} parent=1 // pred_region
      _
    $region9: #{forward.3} parent=1 // pred_fallthru
      _
    %v16 = vld [vmem:[%s0] sm:$0xff]
    %v17 = vld [vmem:[%s0 + $0x8] sm:$0xff]
    %v18 = vpack.c.bf16 %v17, %v16
    %v19 = vld [vmem:[%s1] sm:$0xff]
    %v20 = vld [vmem:[%s1 + $0x8] sm:$0xff]
    %v21 = vld [vmem:[%s1 + $0x10] sm:$0xff]
    %v22 = vld [vmem:[%s1 + $0x18] sm:$0xff]
    %v23 = vld [vmem:[%s1 + $0x20] sm:$0xff]
    %v24 = vld [vmem:[%s1 + $0x28] sm:$0xff]
    %v25 = vld [vmem:[%s1 + $0x30] sm:$0xff]
    %v26 = vld [vmem:[%s1 + $0x38] sm:$0xff]
    %v27 = vld [vmem:[%s1 + $0x40] sm:$0xff]
    %v28 = vld [vmem:[%s1 + $0x48] sm:$0xff]
    %v29 = vld [vmem:[%s1 + $0x50] sm:$0xff]
    %v30 = vld [vmem:[%s1 + $0x58] sm:$0xff]
    %v31 = vld [vmem:[%s1 + $0x60] sm:$0xff]
    %v32 = vld [vmem:[%s1 + $0x68] sm:$0xff]
    %v33 = vld [vmem:[%s1 + $0x70] sm:$0xff]
    %v34 = vld [vmem:[%s1 + $0x78] sm:$0xff]
    %v35 = vpack.c.bf16 %v20, %v19
    %v36 = vpack.c.bf16 %v22, %v21
    %v37 = vpack.c.bf16 %v24, %v23
    %v38 = vpack.c.bf16 %v26, %v25
    %v39 = vpack.c.bf16 %v28, %v27
    %v40 = vpack.c.bf16 %v30, %v29
    %v41 = vpack.c.bf16 %v32, %v31
    %v42 = vpack.c.bf16 %v34, %v33
    %43 = vmatprep.subr.bf16.mxu0 0
    %44 = vmatpush1.bf16.xpose.msra.mxu0 %v42
    %45 = vmatprep.subr.bf16.mxu0 0
    %46 = vmatpush1.bf16.xpose.msra.mxu0 %v41
    %47 = vmatprep.subr.bf16.mxu0 0
    %48 = vmatpush1.bf16.xpose.msra.mxu0 %v40
    %49 = vmatprep.subr.bf16.mxu0 0
    %50 = vmatpush1.bf16.xpose.msra.mxu0 %v39
    %51 = vmatprep.subr.bf16.mxu0 0
    %52 = vmatpush1.bf16.xpose.msra.mxu0 %v38
    %53 = vmatprep.subr.bf16.mxu0 0
    %54 = vmatpush1.bf16.xpose.msra.mxu0 %v37
    %55 = vmatprep.subr.bf16.mxu0 0
    %56 = vmatpush1.bf16.xpose.msra.mxu0 %v36
    %57 = vmatprep.subr.bf16.mxu0 0
    %58 = vmatpush1.bf16.xpose.msra.mxu0 %v35
    %59 = vmatprep.subr.bf16.mxu0 0
    %60 = vmatpush2.bf16.xpose.msra.mxu0 0
    %61 = vmatprep.subr.bf16.mxu0 0
    %62 = vmatpush2.bf16.xpose.msra.mxu0 0
    %63 = vmatprep.subr.bf16.mxu0 0
    %64 = vmatpush2.bf16.xpose.msra.mxu0 0
    %65 = vmatprep.subr.bf16.mxu0 0
    %66 = vmatpush2.bf16.xpose.msra.mxu0 0
    %67 = vmatprep.subr.bf16.mxu0 0
    %68 = vmatpush2.bf16.xpose.msra.mxu0 0
    %69 = vmatprep.subr.bf16.mxu0 0
    %70 = vmatpush2.bf16.xpose.msra.mxu0 0
    %71 = vmatprep.subr.bf16.mxu0 0
    %72 = vmatpush2.bf16.xpose.msra.mxu0 0
    %73 = vmatprep.subr.bf16.mxu0 0
    %74 = vmatpush2.bf16.xpose.msra.mxu0 0
    %75 = vmatprep.mubr.bf16.mxu0 0
    %76 = vmatmul.mubr.bf16.gmra.mxu0 %v18
    %v77 = vpop.f32.mrf.mxu0
    %v78 = vadd.f32 0.0, %v77
    %v79 = vpop.f32.mrf.mxu0
    %v80 = vpop.f32.mrf.mxu0
    %v81 = vadd.f32 0.0, %v80
    %v82 = vpop.f32.mrf.mxu0
    %83 = vdwg.mxu0
    %84 = vst [vmem:[#allocation2] sm:$0xff] %v78
    %85 = vst [vmem:[#allocation2 + $0x8] sm:$0xff] %v81
    %v86 = vlaneseq
    %v87 = vshrl.u32 %v86, 7
    %v88 = vadd.s32 %v87, 8
    %v89 = vlaneseq
    %v90 = vand.u32 %v89, 127
    %vm91 = vcmp.lt.s32.totalorder %v90, 16
    %v92 = vsel %vm91, %v78, -1e+30
    %v93 = vsel %vm91, %v81, -1e+30
    %94 = vmax.xlane.f32.xlu0 %v92
    %v95 = vpop.xlane.xlu0 %94
    %96 = vmax.xlane.f32.xlu0 %v93
    %v97 = vpop.xlane.xlu0 %96
    %v98 = vsub.f32 %v92, %v95
    %v99 = vsub.f32 %v93, %v97
    %v100 = vmul.f32 %v98, 1.442695
    %v101 = vpow.pop %v100
    %v102 = vmul.f32 %v99, 1.442695
    %v103 = vpow.pop %v102
    %104 = vadd.xlane.f32.xlu0 %v101
    %v105 = vpop.xlane.xlu0 %104
    %106 = vadd.xlane.f32.xlu0 %v103
    %v107 = vpop.xlane.xlu0 %106
    %v108 = vlog2.pop %v105
    %v109 = vmul.f32 %v108, 0.6931472
    %v110 = vlog2.pop %v107
    %v111 = vmul.f32 %v110, 0.6931472
    %v112 = vadd.f32 %v95, %v109
    %v113 = vadd.f32 %v97, %v111
    %vm114 = vcmp.eq.s32.totalorder %v87, %v90
    %vm115 = vcmp.eq.s32.totalorder %v88, %v90
    %v116 = vsel %vm114, %v78, 0.0
    %v117 = vsel %vm115, %v81, 0.0
    %118 = vadd.xlane.f32.xlu0 %v116
    %v119 = vpop.xlane.xlu0 %118
    %120 = vadd.xlane.f32.xlu0 %v117
    %v121 = vpop.xlane.xlu0 %120
    %vm122 = vcmp.lt.s32.totalorder %v87, 16
    %vm123 = vcmp.lt.s32.totalorder %v88, 16
    %v124 = vsub.f32 %v112, %v119
    %v125 = vsub.f32 %v113, %v121
    %v126 = vsel %vm122, %v124, 0.0
    %v127 = vsel %vm123, %v125, 0.0
    %vm128 = vcmask 7168
    %v129 = vsel %vm128, %v126, 0.0
    %v130 = vsel %vm128, %v127, 0.0
    %v131 = vadd.f32 %v129, %v130
    %132 = vadd.xlane.f32.xlu0 %v131
    %v133 = vpop.xlane.xlu0 %132
    %v134 = vrot.slane %v133, 4
    %v135 = vadd.f32 %v133, %v134
    %v136 = vrot.slane %v135, 2
    %v137 = vadd.f32 %v135, %v136
    %v138 = vrot.slane %v137, 1
    %v139 = vadd.f32 %v137, %v138
    %s140 = vtos %v139
    %v141 = vrcp.pop 16.0
    %s142 = vtos %v141
    %s143 = smul.f32 %s140, %s142
    %s144 = scalar_lea.smem [#allocation5], 0
    %145 = sst [smem:[%s144]] %s143
    // Predicated region
    $region10: #{forward.3} parent=1 // pred_check
      _
    $region11: #{forward.3} parent=1 // pred_check_branch
      %147 = sbr.rel (0) target = $region13
    $region12: #{forward.3} parent=1 // pred_region
      %s149 = ssub.s32 256, 256
      %150 = vsyncadd [#allocation3], %s149
      %s151 = sshll.u32 [#allocation2], 4
      %s152 = int_to_ptr.vmem [resolvable:$true] %s151
      %157 = dma.vmem_to_hbm [thread:$0]  %s152, 256, %s2, [#allocation3], 128, 128, 8
    $region13: #{forward.3} parent=1 // pred_fallthru
      _
    // Predicated region
    $region14: #{forward.3} parent=1 // pred_check
      _
    $region15: #{forward.3} parent=1 // pred_check_branch
      %159 = sbr.rel (0) target = $region17
    $region16: #{forward.3} parent=1 // pred_region
      %s161 = ssub.s32 16, 16
      %162 = vsyncadd [#allocation4], %s161
      %165 = dma.smem_to_hbm [#allocation5], 16, %s3, [#allocation4]
    $region17: #{forward.3} parent=1 // pred_fallthru
      _
    // Predicated region
    $region18: #{forward.3} parent=1 // pred_check
      _
    $region19: #{forward.3} parent=1 // pred_check_branch
      %167 = sbr.rel (0) target = $region21
    $region20: #{forward.3} parent=1 // pred_region
      %168 = dma.done [#allocation3], 256
    $region21: #{forward.3} parent=1 // pred_fallthru
      _
    // Predicated region
    $region22: #{forward.3} parent=1 // pred_check
      _
    $region23: #{forward.3} parent=1 // pred_check_branch
      %170 = sbr.rel (0) target = $region25
    $region24: #{forward.3} parent=1 // pred_region
      %171 = dma.done [#allocation4], 16
    $region25: #{forward.3} parent=1 // pred_fallthru
      _
    %172 = sfence
    %173 = vsyncpa [#allocation3], 1
    %174 = vsyncpa [#allocation4], 1

// kernel: forward.2
$region0: #{forward.2}
  #allocation0 [shape = 'u32[]', space=smem, size = 0x4, offset = 0x4, fixed_abs, tag = 'smem constant byte address 0x4 - core index']
  #allocation1 [shape = 'u32[144,128]{1,0:T(1,128)}', space=vmem, size = 0x12000, scoped, tag = 'internal scratch']
  #allocation2 [shape = 'bf16[8,16,384]{2,1,0:T(8,128)(2,1)}', space=vmem, size = 0x18000, scoped, tag = 'scratch operand']
  %s0 = inlined_call_operand.vmem [shape: s32[32,8], index: 0, kind: input, shape index: {}]
  %s1 = inlined_call_operand.vmem [shape: bf16[128,384], index: 1, kind: input, shape index: {}]
  %s2 = inlined_call_operand.vmem [shape: f32[1,384], index: 2, kind: input, shape index: {}]
  %s3 = inlined_call_operand.vmem [shape: bf16[128,384], index: 3, kind: input, shape index: {}]
  %s4 = inlined_call_operand.vmem [shape: f32[1,384], index: 4, kind: input, shape index: {}]
  %s5 = inlined_call_operand.vmem [shape: bf16[128,384], index: 5, kind: input, shape index: {}]
  %s6 = inlined_call_operand.vmem [shape: bf16[128,384], index: 6, kind: input, shape index: {}]
  %s7 = inlined_call_operand.vmem [shape: f32[1,384], index: 7, kind: input, shape index: {}]
  %s8 = inlined_call_operand.vmem [shape: f32[1,384], index: 8, kind: input, shape index: {}]
  %s9 = inlined_call_operand.vmem [shape: f32[32,128], index: 9, kind: output, shape index: {}]
  %s10 = sld [smem:[#allocation0]]
  $region69: #{forward.2} parent=0
    _
  %s12 = ssub.s32 1, %s10
  %s13 = scalar_select 0, %s12, %s10
  loop: start=0, step=1, limit=4
  $region2: #{forward.2} parent=0 // loop_pre_header
    _
  $region3: #{forward.2} parent=0 // loop_header
    %s15 = sphi 0, %s19
    %p16 = scmp.ge.s32.totalorder %s15, 4
    %s25 = sphi 0, %s27
    %s28 = sphi 0, %s25
    %s29 = sphi 0, %s28
    %s45 = sphi 0, %s29
    %s49 = sphi 0, %s49
    %s51 = sphi 0, %s49
    %s52 = sphi 0, %s51
    %s66 = sphi 0, %s52
    %s70 = sphi 0, %s70
    %s72 = sphi 0, %s70
    %s73 = sphi 0, %s72
    %s87 = sphi 0, %s73
    %s91 = sphi 0, %s91
    %s93 = sphi 0, %s91
    %s94 = sphi 0, %s93
    %s108 = sphi 0, %s94
    %s112 = sphi 0, %s112
    %s114 = sphi 0, %s112
    %s115 = sphi 0, %s114
    %s129 = sphi 0, %s115
    %s133 = sphi 0, %s133
    %s135 = sphi 0, %s133
    %s136 = sphi 0, %s135
    %s150 = sphi 0, %s136
    %s154 = sphi 0, %s154
    %s156 = sphi 0, %s154
    %s157 = sphi 0, %s156
    %s171 = sphi 0, %s157
    %s175 = sphi 0, %s175
    %s177 = sphi 0, %s175
    %s178 = sphi 0, %s177
    %s192 = sphi 0, %s178
    %s196 = sphi 0, %s196
    %s198 = sphi 0, %s196
    %s199 = sphi 0, %s198
    %s213 = sphi 0, %s199
    %s219 = sphi 0, %s221
    %s222 = sphi 0, %s219
    %s223 = sphi 0, %s222
    %s239 = sphi 0, %s223
  $region4: #{forward.2} parent=0 // loop_header_branch
    %18 = sbr.rel (%p16) target = $region8
  $region5: #{forward.2} parent=0 // loop_body
    %s20 = ssub.s32 %s15, 1
    %s21 = ssub.s32 %s15, 2
    %s22 = sadd.s32 %s15, 1
    %s23 = ssub.s32 %s15, %s22
    %p24 = scmp.eq.s32.totalorder %s23, 0
    %s26 = sadd.s32 %s25, 1
    %s27 = scalar_select %p24, %s25, %s26
    %p30 = pneg %p24
    %p31 = scmp.eq.s32.totalorder %s15, 1
    %p32 = por %p30, %p31
    %p33 = scmp.ne.s32.totalorder %s25, %s28
    %p34 = scmp.eq.s32.totalorder %s15, 0
    %p35 = por %p33, %p34
    %p36 = scmp.ne.s32.totalorder %s25, %s28
    %p37 = scmp.eq.s32.totalorder %s20, 1
    %p38 = por %p36, %p37
    %p39 = scmp.ne.s32.totalorder %s28, %s29
    %p40 = scmp.eq.s32.totalorder %s20, 0
    %p41 = por %p39, %p40
    %p42 = scmp.ne.s32.totalorder %s28, %s29
    %p43 = scmp.eq.s32.totalorder %s21, 1
    %p44 = por %p42, %p43
    %p46 = scmp.ne.s32.totalorder %s29, %s45
    %p47 = scmp.eq.s32.totalorder %s21, 0
    %p48 = por %p46, %p47
    %s50 = sadd.s32 %s49, 1
    %p53 = scmp.eq.s32.totalorder %s15, 1
    %p54 = scmp.ne.s32.totalorder %s49, %s51
    %p55 = scmp.eq.s32.totalorder %s15, 0
    %p56 = por %p54, %p55
    %p57 = scmp.ne.s32.totalorder %s49, %s51
    %p58 = scmp.eq.s32.totalorder %s20, 1
    %p59 = por %p57, %p58
    %p60 = scmp.ne.s32.totalorder %s51, %s52
    %p61 = scmp.eq.s32.totalorder %s20, 0
    %p62 = por %p60, %p61
    %p63 = scmp.ne.s32.totalorder %s51, %s52
    %p64 = scmp.eq.s32.totalorder %s21, 1
    %p65 = por %p63, %p64
    %p67 = scmp.ne.s32.totalorder %s52, %s66
    %p68 = scmp.eq.s32.totalorder %s21, 0
    %p69 = por %p67, %p68
    %s71 = sadd.s32 %s70, 1
    %p74 = scmp.eq.s32.totalorder %s15, 1
    %p75 = scmp.ne.s32.totalorder %s70, %s72
    %p76 = scmp.eq.s32.totalorder %s15, 0
    %p77 = por %p75, %p76
    %p78 = scmp.ne.s32.totalorder %s70, %s72
    %p79 = scmp.eq.s32.totalorder %s20, 1
    %p80 = por %p78, %p79
    %p81 = scmp.ne.s32.totalorder %s72, %s73
    %p82 = scmp.eq.s32.totalorder %s20, 0
    %p83 = por %p81, %p82
    %p84 = scmp.ne.s32.totalorder %s72, %s73
    %p85 = scmp.eq.s32.totalorder %s21, 1
    %p86 = por %p84, %p85
    %p88 = scmp.ne.s32.totalorder %s73, %s87
    %p89 = scmp.eq.s32.totalorder %s21, 0
    %p90 = por %p88, %p89
    %s92 = sadd.s32 %s91, 1
    %p95 = scmp.eq.s32.totalorder %s15, 1
    %p96 = scmp.ne.s32.totalorder %s91, %s93
    %p97 = scmp.eq.s32.totalorder %s15, 0
    %p98 = por %p96, %p97
    %p99 = scmp.ne.s32.totalorder %s91, %s93
    %p100 = scmp.eq.s32.totalorder %s20, 1
    %p101 = por %p99, %p100
    %p102 = scmp.ne.s32.totalorder %s93, %s94
    %p103 = scmp.eq.s32.totalorder %s20, 0
    %p104 = por %p102, %p103
    %p105 = scmp.ne.s32.totalorder %s93, %s94
    %p106 = scmp.eq.s32.totalorder %s21, 1
    %p107 = por %p105, %p106
    %p109 = scmp.ne.s32.totalorder %s94, %s108
    %p110 = scmp.eq.s32.totalorder %s21, 0
    %p111 = por %p109, %p110
    %s113 = sadd.s32 %s112, 1
    %p116 = scmp.eq.s32.totalorder %s15, 1
    %p117 = scmp.ne.s32.totalorder %s112, %s114
    %p118 = scmp.eq.s32.totalorder %s15, 0
    %p119 = por %p117, %p118
    %p120 = scmp.ne.s32.totalorder %s112, %s114
    %p121 = scmp.eq.s32.totalorder %s20, 1
    %p122 = por %p120, %p121
    %p123 = scmp.ne.s32.totalorder %s114, %s115
    %p124 = scmp.eq.s32.totalorder %s20, 0
    %p125 = por %p123, %p124
    %p126 = scmp.ne.s32.totalorder %s114, %s115
    %p127 = scmp.eq.s32.totalorder %s21, 1
    %p128 = por %p126, %p127
    %p130 = scmp.ne.s32.totalorder %s115, %s129
    %p131 = scmp.eq.s32.totalorder %s21, 0
    %p132 = por %p130, %p131
    %s134 = sadd.s32 %s133, 1
    %p137 = scmp.eq.s32.totalorder %s15, 1
    %p138 = scmp.ne.s32.totalorder %s133, %s135
    %p139 = scmp.eq.s32.totalorder %s15, 0
    %p140 = por %p138, %p139
    %p141 = scmp.ne.s32.totalorder %s133, %s135
    %p142 = scmp.eq.s32.totalorder %s20, 1
    %p143 = por %p141, %p142
    %p144 = scmp.ne.s32.totalorder %s135, %s136
    %p145 = scmp.eq.s32.totalorder %s20, 0
    %p146 = por %p144, %p145
    %p147 = scmp.ne.s32.totalorder %s135, %s136
    %p148 = scmp.eq.s32.totalorder %s21, 1
    %p149 = por %p147, %p148
    %p151 = scmp.ne.s32.totalorder %s136, %s150
    %p152 = scmp.eq.s32.totalorder %s21, 0
    %p153 = por %p151, %p152
    %s155 = sadd.s32 %s154, 1
    %p158 = scmp.eq.s32.totalorder %s15, 1
    %p159 = scmp.ne.s32.totalorder %s154, %s156
    %p160 = scmp.eq.s32.totalorder %s15, 0
    %p161 = por %p159, %p160
    %p162 = scmp.ne.s32.totalorder %s154, %s156
    %p163 = scmp.eq.s32.totalorder %s20, 1
    %p164 = por %p162, %p163
    %p165 = scmp.ne.s32.totalorder %s156, %s157
    %p166 = scmp.eq.s32.totalorder %s20, 0
    %p167 = por %p165, %p166
    %p168 = scmp.ne.s32.totalorder %s156, %s157
    %p169 = scmp.eq.s32.totalorder %s21, 1
    %p170 = por %p168, %p169
    %p172 = scmp.ne.s32.totalorder %s157, %s171
    %p173 = scmp.eq.s32.totalorder %s21, 0
    %p174 = por %p172, %p173
    %s176 = sadd.s32 %s175, 1
    %p179 = scmp.eq.s32.totalorder %s15, 1
    %p180 = scmp.ne.s32.totalorder %s175, %s177
    %p181 = scmp.eq.s32.totalorder %s15, 0
    %p182 = por %p180, %p181
    %p183 = scmp.ne.s32.totalorder %s175, %s177
    %p184 = scmp.eq.s32.totalorder %s20, 1
    %p185 = por %p183, %p184
    %p186 = scmp.ne.s32.totalorder %s177, %s178
    %p187 = scmp.eq.s32.totalorder %s20, 0
    %p188 = por %p186, %p187
    %p189 = scmp.ne.s32.totalorder %s177, %s178
    %p190 = scmp.eq.s32.totalorder %s21, 1
    %p191 = por %p189, %p190
    %p193 = scmp.ne.s32.totalorder %s178, %s192
    %p194 = scmp.eq.s32.totalorder %s21, 0
    %p195 = por %p193, %p194
    %s197 = sadd.s32 %s196, 1
    %p200 = scmp.eq.s32.totalorder %s15, 1
    %p201 = scmp.ne.s32.totalorder %s196, %s198
    %p202 = scmp.eq.s32.totalorder %s15, 0
    %p203 = por %p201, %p202
    %p204 = scmp.ne.s32.totalorder %s196, %s198
    %p205 = scmp.eq.s32.totalorder %s20, 1
    %p206 = por %p204, %p205
    %p207 = scmp.ne.s32.totalorder %s198, %s199
    %p208 = scmp.eq.s32.totalorder %s20, 0
    %p209 = por %p207, %p208
    %p210 = scmp.ne.s32.totalorder %s198, %s199
    %p211 = scmp.eq.s32.totalorder %s21, 1
    %p212 = por %p210, %p211
    %p214 = scmp.ne.s32.totalorder %s199, %s213
    %p215 = scmp.eq.s32.totalorder %s21, 0
    %p216 = por %p214, %p215
    %s217 = ssub.s32 %s15, %s22
    %p218 = scmp.eq.s32.totalorder %s217, 0
    %s220 = sadd.s32 %s219, 1
    %s221 = scalar_select %p218, %s219, %s220
    %p224 = pneg %p218
    %p225 = scmp.eq.s32.totalorder %s15, 1
    %p226 = por %p224, %p225
    %p227 = scmp.ne.s32.totalorder %s219, %s222
    %p228 = scmp.eq.s32.totalorder %s15, 0
    %p229 = por %p227, %p228
    %p230 = scmp.ne.s32.totalorder %s219, %s222
    %p231 = scmp.eq.s32.totalorder %s20, 1
    %p232 = por %p230, %p231
    %p233 = scmp.ne.s32.totalorder %s222, %s223
    %p234 = scmp.eq.s32.totalorder %s20, 0
    %p235 = por %p233, %p234
    %p236 = scmp.ne.s32.totalorder %s222, %s223
    %p237 = scmp.eq.s32.totalorder %s21, 1
    %p238 = por %p236, %p237
    %p240 = scmp.ne.s32.totalorder %s223, %s239
    %p241 = scmp.eq.s32.totalorder %s21, 0
    %p242 = por %p240, %p241
    %p243 = scmp.le.s32.totalorder 1, %s15
    %p244 = scmp.lt.s32.totalorder %s15, 3
    %p245 = pnand %p243, %p244
    %p246 = pneg %p245
    // Predicated region
    $region9: #{forward.2} parent=5 // pred_check
      _
    $region10: #{forward.2} parent=5 // pred_check_branch
      %248 = sbr.rel (%p245) target = $region12
    $region11: #{forward.2} parent=5 // pred_region
      %s249 = ssub.s32 %s15, 1
      // Predicated region
      $region13: #{forward.2} parent=11 // pred_check
        %p250 = pneg %p62
      $region14: #{forward.2} parent=11 // pred_check_branch
        %252 = sbr.rel (%p250) target = $region16
      $region15: #{forward.2} parent=11 // pred_region
        _
      $region16: #{forward.2} parent=11 // pred_fallthru
        _
      // Predicated region
      $region17: #{forward.2} parent=11 // pred_check
        %p253 = pneg %p83
      $region18: #{forward.2} parent=11 // pred_check_branch
        %255 = sbr.rel (%p253) target = $region20
      $region19: #{forward.2} parent=11 // pred_region
        _
      $region20: #{forward.2} parent=11 // pred_fallthru
        _
      // Predicated region
      $region21: #{forward.2} parent=11 // pred_check
        %p256 = pneg %p104
      $region22: #{forward.2} parent=11 // pred_check_branch
        %258 = sbr.rel (%p256) target = $region24
      $region23: #{forward.2} parent=11 // pred_region
        _
      $region24: #{forward.2} parent=11 // pred_fallthru
        _
      // Predicated region
      $region25: #{forward.2} parent=11 // pred_check
        %p259 = pneg %p125
      $region26: #{forward.2} parent=11 // pred_check_branch
        %261 = sbr.rel (%p259) target = $region28
      $region27: #{forward.2} parent=11 // pred_region
        _
      $region28: #{forward.2} parent=11 // pred_fallthru
        _
      // Predicated region
      $region29: #{forward.2} parent=11 // pred_check
        %p262 = pneg %p146
      $region30: #{forward.2} parent=11 // pred_check_branch
        %264 = sbr.rel (%p262) target = $region32
      $region31: #{forward.2} parent=11 // pred_region
        _
      $region32: #{forward.2} parent=11 // pred_fallthru
        _
      // Predicated region
      $region33: #{forward.2} parent=11 // pred_check
        %p265 = pneg %p167
      $region34: #{forward.2} parent=11 // pred_check_branch
        %267 = sbr.rel (%p265) target = $region36
      $region35: #{forward.2} parent=11 // pred_region
        _
      $region36: #{forward.2} parent=11 // pred_fallthru
        _
      // Predicated region
      $region37: #{forward.2} parent=11 // pred_check
        %p268 = pneg %p188
      $region38: #{forward.2} parent=11 // pred_check_branch
        %270 = sbr.rel (%p268) target = $region40
      $region39: #{forward.2} parent=11 // pred_region
        _
      $region40: #{forward.2} parent=11 // pred_fallthru
        _
      // Predicated region
      $region41: #{forward.2} parent=11 // pred_check
        %p271 = pneg %p209
      $region42: #{forward.2} parent=11 // pred_check_branch
        %273 = sbr.rel (%p271) target = $region44
      $region43: #{forward.2} parent=11 // pred_region
        _
      $region44: #{forward.2} parent=11 // pred_fallthru
        _
    $region12: #{forward.2} parent=5 // pred_fallthru
      _
    %p274 = scmp.lt.s32.totalorder %s15, 2
    // Predicated region
    $region45: #{forward.2} parent=5 // pred_check
      %p275 = pneg %p274
    $region46: #{forward.2} parent=5 // pred_check_branch
      %277 = sbr.rel (%p275) target = $region48
    $region47: #{forward.2} parent=5 // pred_region
      // Predicated region
      $region49: #{forward.2} parent=47 // pred_check
        %p278 = pneg %p35
      $region50: #{forward.2} parent=47 // pred_check_branch
        %280 = sbr.rel (%p278) target = $region52
      $region51: #{forward.2} parent=47 // pred_region
        %s281 = smul.u32 2, %s15
        %p282 = scmp.lt.s32.totalorder %s281, 3
        %s283 = scalar_select %p282, %s281, 3
        %s284 = smul.addr %s283, 8
        %s285 = scalar_lea.vmem %s0, %s284
        %s286 = smul.u32 2, %s15
      $region52: #{forward.2} parent=47 // pred_fallthru
        _
    $region48: #{forward.2} parent=5 // pred_fallthru
      _
    %p287 = scmp.le.s32.totalorder 1, %s15
    %p288 = scmp.lt.s32.totalorder %s15, 3
    %p289 = pnand %p287, %p288
    %p290 = pneg %p289
    // Predicated region
    $region53: #{forward.2} parent=5 // pred_check
      _
    $region54: #{forward.2} parent=5 // pred_check_branch
      %292 = sbr.rel (%p289) target = $region56
    $region55: #{forward.2} parent=5 // pred_region
      %s293 = ssub.s32 %s15, 1
      %s294 = smul.u32 2, %s20
      %p295 = scmp.lt.s32.totalorder %s294, 3
      %s296 = scalar_select %p295, %s294, 3
      %s297 = smul.addr %s296, 8
      %s298 = scalar_lea.vmem %s0, %s297
      %p299 = pneg %p41
      %p300 = pneg %p38
      %p301 = pneg %p62
      %p302 = pneg %p59
      %p303 = pneg %p83
      %p304 = pneg %p80
      %p305 = pneg %p104
      %p306 = pneg %p101
      %p307 = pneg %p125
      %p308 = pneg %p122
      %p309 = pneg %p146
      %p310 = pneg %p143
      %p311 = pneg %p167
      %p312 = pneg %p164
      %p313 = pneg %p188
      %p314 = pneg %p185
      %p315 = pneg %p209
      %p316 = pneg %p206
      %p317 = pneg %p235
      %p318 = pneg %p232
      %s319 = smul.u32 2, %s20
      %p320 = scmp.lt.s32.totalorder %s319, 3
      %s321 = scalar_select %p320, %s319, 3
      %s322 = smul.addr %s321, 8
      %s323 = scalar_lea.vmem %s9, %s322
      %s324 = smul.u32 2, %s20
      %p325 = scmp.lt.s32.totalorder %s324, 3
      %s326 = scalar_select %p325, %s324, 3
      %s327 = smul.addr %s326, 8
      %s328 = scalar_lea.vmem %s0, %s327
      %s329 = smul.u32 2, %s20
      %s330 = smul.u32 2, %s20
      %p331 = scmp.lt.s32.totalorder %s330, 3
      %s332 = scalar_select %p331, %s330, 3
      %s333 = smul.addr %s332, 8
      %s334 = scalar_lea.vmem %s9, %s333
      %s335 = smul.u32 2, %s20
      %v337 = vld [vmem:[%s328] sm:$0xff]
      %v338 = vld [vmem:[%s328 + $0x8] sm:$0xff]
      %vm339 = vcmp.ne.s32.totalorder %v337, 1
      %vm340 = vcmp.ne.s32.totalorder %v338, 1
      %v341 = vsel %vm339, 1, 0
      %v342 = vsel %vm340, 1, 0
      %vm343 = vcmask 64512
      %v344 = vsel %vm343, %v341, 0
      %v345 = vand.u32 %v344, 65535
      %v346 = vshrl.u32 %v344, 16
      %v347 = vcvt.s32.f32 %v345
      %v348 = vcvt.s32.f32 %v346
      %349 = vadd.xlane.f32.xlu0 %v347
      %v350 = vpop.xlane.xlu0 %349
      %351 = vadd.xlane.f32.xlu0 %v348
      %v352 = vpop.xlane.xlu0 %351
      %v353 = vcvt.f32.s32 %v350
      %v354 = vcvt.f32.s32 %v352
      %v355 = vshll.u32 %v354, 16
      %v356 = vadd.s32 %v355, %v353
      %v357 = vsel %vm343, %v342, 0
      %v358 = vand.u32 %v357, 65535
      %v359 = vshrl.u32 %v357, 16
      %v360 = vcvt.s32.f32 %v358
      %v361 = vcvt.s32.f32 %v359
      %362 = vadd.xlane.f32.xlu0 %v360
      %v363 = vpop.xlane.xlu0 %362
      %364 = vadd.xlane.f32.xlu0 %v361
      %v365 = vpop.xlane.xlu0 %364
      %v366 = vcvt.f32.s32 %v363
      %v367 = vcvt.f32.s32 %v365
      %v368 = vshll.u32 %v367, 16
      %v369 = vadd.s32 %v368, %v366
      %370 = vxpose.xlu0.b32.start [1/16] %v337, 128
      %371 = vxpose.xlu0.b32.cont [2/16] %v338, 128
      %372 = vxpose.xlu0.b32.cont [3/16] 0, 128
      %373 = vxpose.xlu0.b32.cont [4/16] 0, 128
      %374 = vxpose.xlu0.b32.cont [5/16] 0, 128
      %375 = vxpose.xlu0.b32.cont [6/16] 0, 128
      %376 = vxpose.xlu0.b32.cont [7/16] 0, 128
      %377 = vxpose.xlu0.b32.cont [8/16] 0, 128
      %378 = vxpose.xlu0.b32.cont [9/16] 0, 128
      %379 = vxpose.xlu0.b32.cont [10/16] 0, 128
      %380 = vxpose.xlu0.b32.cont [11/16] 0, 128
      %381 = vxpose.xlu0.b32.cont [12/16] 0, 128
      %382 = vxpose.xlu0.b32.cont [13/16] 0, 128
      %383 = vxpose.xlu0.b32.cont [14/16] 0, 128
      %384 = vxpose.xlu0.b32.cont [15/16] 0, 128
      %385 = vxpose.xlu0.b32.end [16/16] 0, 128
      %v386 = vpop.trf.xlu0
      %v387 = vpop.trf.xlu0
      %v388 = vpop.trf.xlu0
      %v389 = vpop.trf.xlu0
      %v390 = vpop.trf.xlu0
      %v391 = vpop.trf.xlu0
      %v392 = vpop.trf.xlu0
      %v393 = vpop.trf.xlu0
      %v394 = vpop.trf.xlu0
      %v395 = vpop.trf.xlu0
      %v396 = vpop.trf.xlu0
      %v397 = vpop.trf.xlu0
      %v398 = vpop.trf.xlu0
      %v399 = vpop.trf.xlu0
      %v400 = vpop.trf.xlu0
      %v401 = vpop.trf.xlu0
      %v402 = vlaneseq
      %v403 = vshrl.u32 %v402, 7
      %v404 = vsub.s32 0, %v403
      %v405 = vrot.slane %v386, %v404
      %407 = vbcast.lane.b32.xlu0 %v405, 256
      %v408 = vpop.permute.xlu0 %407
      %s410 = sor.u32 256, 8
      %411 = vbcast.lane.b32.xlu0 %v405, %s410
      %v412 = vpop.permute.xlu0 %411
      %v413 = vlaneseq
      %v414 = vshrl.u32 %v413, 7
      %v415 = vsub.s32 1, %v414
      %v416 = vrot.slane %v386, %v415
      %418 = vbcast.lane.b32.xlu0 %v416, 256
      %v419 = vpop.permute.xlu0 %418
      %s421 = sor.u32 256, 8
      %422 = vbcast.lane.b32.xlu0 %v416, %s421
      %v423 = vpop.permute.xlu0 %422
      %v424 = vlaneseq
      %v425 = vshrl.u32 %v424, 7
      %v426 = vsub.s32 2, %v425
      %v427 = vrot.slane %v386, %v426
      %429 = vbcast.lane.b32.xlu0 %v427, 256
      %v430 = vpop.permute.xlu0 %429
      %s432 = sor.u32 256, 8
      %433 = vbcast.lane.b32.xlu0 %v427, %s432
      %v434 = vpop.permute.xlu0 %433
      %v435 = vlaneseq
      %v436 = vshrl.u32 %v435, 7
      %v437 = vsub.s32 3, %v436
      %v438 = vrot.slane %v386, %v437
      %440 = vbcast.lane.b32.xlu0 %v438, 256
      %v441 = vpop.permute.xlu0 %440
      %s443 = sor.u32 256, 8
      %444 = vbcast.lane.b32.xlu0 %v438, %s443
      %v445 = vpop.permute.xlu0 %444
      %v446 = vlaneseq
      %v447 = vshrl.u32 %v446, 7
      %v448 = vsub.s32 4, %v447
      %v449 = vrot.slane %v386, %v448
      %451 = vbcast.lane.b32.xlu0 %v449, 256
      %v452 = vpop.permute.xlu0 %451
      %s454 = sor.u32 256, 8
      %455 = vbcast.lane.b32.xlu0 %v449, %s454
      %v456 = vpop.permute.xlu0 %455
      %v457 = vlaneseq
      %v458 = vshrl.u32 %v457, 7
      %v459 = vsub.s32 5, %v458
      %v460 = vrot.slane %v386, %v459
      %462 = vbcast.lane.b32.xlu0 %v460, 256
      %v463 = vpop.permute.xlu0 %462
      %s465 = sor.u32 256, 8
      %466 = vbcast.lane.b32.xlu0 %v460, %s465
      %v467 = vpop.permute.xlu0 %466
      %v468 = vlaneseq
      %v469 = vshrl.u32 %v468, 7
      %v470 = vsub.s32 6, %v469
      %v471 = vrot.slane %v386, %v470
      %473 = vbcast.lane.b32.xlu0 %v471, 256
      %v474 = vpop.permute.xlu0 %473
      %s476 = sor.u32 256, 8
      %477 = vbcast.lane.b32.xlu0 %v471, %s476
      %v478 = vpop.permute.xlu0 %477
      %v479 = vlaneseq
      %v480 = vshrl.u32 %v479, 7
      %v481 = vsub.s32 7, %v480
      %v482 = vrot.slane %v386, %v481
      %484 = vbcast.lane.b32.xlu0 %v482, 256
      %v485 = vpop.permute.xlu0 %484
      %s487 = sor.u32 256, 8
      %488 = vbcast.lane.b32.xlu0 %v482, %s487
      %v489 = vpop.permute.xlu0 %488
      %v490 = vlaneseq
      %v491 = vand.u32 %v490, 127
      %vm492 = vcmp.eq.s32.totalorder %v408, %v491
      %vm493 = vcmp.eq.s32.totalorder %v412, %v491
      %vm494 = vcmp.eq.s32.totalorder %v419, %v491
      %vm495 = vcmp.eq.s32.totalorder %v423, %v491
      %vm496 = vcmp.eq.s32.totalorder %v430, %v491
      %vm497 = vcmp.eq.s32.totalorder %v434, %v491
      %vm498 = vcmp.eq.s32.totalorder %v441, %v491
      %vm499 = vcmp.eq.s32.totalorder %v445, %v491
      %vm500 = vcmp.eq.s32.totalorder %v452, %v491
      %vm501 = vcmp.eq.s32.totalorder %v456, %v491
      %vm502 = vcmp.eq.s32.totalorder %v463, %v491
      %vm503 = vcmp.eq.s32.totalorder %v467, %v491
      %vm504 = vcmp.eq.s32.totalorder %v474, %v491
      %vm505 = vcmp.eq.s32.totalorder %v478, %v491
      %vm506 = vcmp.eq.s32.totalorder %v485, %v491
      %vm507 = vcmp.eq.s32.totalorder %v489, %v491
      %v508 = vsel %vm492, 1, 0
      %v509 = vsel %vm493, 1, 0
      %v510 = vsel %vm494, 1, 0
      %v511 = vsel %vm495, 1, 0
      %v512 = vsel %vm496, 1, 0
      %v513 = vsel %vm497, 1, 0
      %v514 = vsel %vm498, 1, 0
      %v515 = vsel %vm499, 1, 0
      %v516 = vsel %vm500, 1, 0
      %v517 = vsel %vm501, 1, 0
      %v518 = vsel %vm502, 1, 0
      %v519 = vsel %vm503, 1, 0
      %v520 = vsel %vm504, 1, 0
      %v521 = vsel %vm505, 1, 0
      %v522 = vsel %vm506, 1, 0
      %v523 = vsel %vm507, 1, 0
      %v524 = vcvt.s32.f32 %v508
      %v525 = vcvt.s32.f32 %v509
      %v526 = vcvt.s32.f32 %v510
      %v527 = vcvt.s32.f32 %v511
      %v528 = vcvt.s32.f32 %v512
      %v529 = vcvt.s32.f32 %v513
      %v530 = vcvt.s32.f32 %v514
      %v531 = vcvt.s32.f32 %v515
      %v532 = vcvt.s32.f32 %v516
      %v533 = vcvt.s32.f32 %v517
      %v534 = vcvt.s32.f32 %v518
      %v535 = vcvt.s32.f32 %v519
      %v536 = vcvt.s32.f32 %v520
      %v537 = vcvt.s32.f32 %v521
      %v538 = vcvt.s32.f32 %v522
      %v539 = vcvt.s32.f32 %v523
      %v540 = vpack.c.bf16 %v525, %v524
      %v541 = vpack.c.bf16 %v527, %v526
      %v542 = vpack.c.bf16 %v529, %v528
      %v543 = vpack.c.bf16 %v531, %v530
      %v544 = vpack.c.bf16 %v533, %v532
      %v545 = vpack.c.bf16 %v535, %v534
      %v546 = vpack.c.bf16 %v537, %v536
      %v547 = vpack.c.bf16 %v539, %v538
      %v548 = vld [vmem:[%s1] sm:$0xff]
      %v549 = vld [vmem:[%s1 + $0x8] sm:$0xf]
      %v550 = vld [vmem:[%s1 + $0xc] sm:$0xff]
      %v551 = vld [vmem:[%s1 + $0x14] sm:$0xf]
      %v552 = vld [vmem:[%s1 + $0x18] sm:$0xff]
      %v553 = vld [vmem:[%s1 + $0x20] sm:$0xf]
      %v554 = vld [vmem:[%s1 + $0x24] sm:$0xff]
      %v555 = vld [vmem:[%s1 + $0x2c] sm:$0xf]
      %v556 = vld [vmem:[%s1 + $0x30] sm:$0xff]
      %v557 = vld [vmem:[%s1 + $0x38] sm:$0xf]
      %v558 = vld [vmem:[%s1 + $0x3c] sm:$0xff]
      %v559 = vld [vmem:[%s1 + $0x44] sm:$0xf]
      %v560 = vld [vmem:[%s1 + $0x48] sm:$0xff]
      %v561 = vld [vmem:[%s1 + $0x50] sm:$0xf]
      %v562 = vld [vmem:[%s1 + $0x54] sm:$0xff]
      %v563 = vld [vmem:[%s1 + $0x5c] sm:$0xf]
      %v564 = vld [vmem:[%s1 + $0x60] sm:$0xff]
      %v565 = vld [vmem:[%s1 + $0x68] sm:$0xf]
      %v566 = vld [vmem:[%s1 + $0x6c] sm:$0xff]
      %v567 = vld [vmem:[%s1 + $0x74] sm:$0xf]
      %v568 = vld [vmem:[%s1 + $0x78] sm:$0xff]
      %v569 = vld [vmem:[%s1 + $0x80] sm:$0xf]
      %v570 = vld [vmem:[%s1 + $0x84] sm:$0xff]
      %v571 = vld [vmem:[%s1 + $0x8c] sm:$0xf]
      %v572 = vld [vmem:[%s1 + $0x90] sm:$0xff]
      %v573 = vld [vmem:[%s1 + $0x98] sm:$0xf]
      %v574 = vld [vmem:[%s1 + $0x9c] sm:$0xff]
      %v575 = vld [vmem:[%s1 + $0xa4] sm:$0xf]
      %v576 = vld [vmem:[%s1 + $0xa8] sm:$0xff]
      %v577 = vld [vmem:[%s1 + $0xb0] sm:$0xf]
      %v578 = vld [vmem:[%s1 + $0xb4] sm:$0xff]
      %v579 = vld [vmem:[%s1 + $0xbc] sm:$0xf]
      %v580 = vld [vmem:[%s2] sm:$0x7]
      %v582 = vlaneseq
      %v583 = vshrl.u32 %v582, 7
      %v584 = vsub.s32 0, %v583
      %v585 = vrot.slane %v580, %v584
      %v586 = vlaneseq
      %v587 = vshrl.u32 %v586, 7
      %v588 = vsub.s32 1, %v587
      %v589 = vrot.slane %v580, %v588
      %v590 = vlaneseq
      %v591 = vshrl.u32 %v590, 7
      %v592 = vsub.s32 2, %v591
      %v593 = vrot.slane %v580, %v592
      %v629 = vunpack.c.l.b16 %v548
      %v630 = vunpack.c.h.b16 %v548
      %v631 = vunpack.c.l.b16 %v549
      %v632 = vunpack.c.l.b16 %v550
      %v633 = vunpack.c.h.b16 %v550
      %v634 = vunpack.c.l.b16 %v551
      %v635 = vunpack.c.l.b16 %v552
      %v636 = vunpack.c.h.b16 %v552
      %v637 = vunpack.c.l.b16 %v553
      %v638 = vunpack.c.l.b16 %v554
      %v639 = vunpack.c.h.b16 %v554
      %v640 = vunpack.c.l.b16 %v555
      %v641 = vunpack.c.l.b16 %v556
      %v642 = vunpack.c.h.b16 %v556
      %v643 = vunpack.c.l.b16 %v557
      %v644 = vunpack.c.l.b16 %v558
      %v645 = vunpack.c.h.b16 %v558
      %v646 = vunpack.c.l.b16 %v559
      %v647 = vunpack.c.l.b16 %v560
      %v648 = vunpack.c.h.b16 %v560
      %v649 = vunpack.c.l.b16 %v561
      %v650 = vunpack.c.l.b16 %v562
      %v651 = vunpack.c.h.b16 %v562
      %v652 = vunpack.c.l.b16 %v563
      %v653 = vunpack.c.l.b16 %v564
      %v654 = vunpack.c.h.b16 %v564
      %v655 = vunpack.c.l.b16 %v565
      %v656 = vunpack.c.l.b16 %v566
      %v657 = vunpack.c.h.b16 %v566
      %v658 = vunpack.c.l.b16 %v567
      %v659 = vunpack.c.l.b16 %v568
      %v660 = vunpack.c.h.b16 %v568
      %v661 = vunpack.c.l.b16 %v569
      %v662 = vunpack.c.l.b16 %v570
      %v663 = vunpack.c.h.b16 %v570
      %v664 = vunpack.c.l.b16 %v571
      %v665 = vunpack.c.l.b16 %v572
      %v666 = vunpack.c.h.b16 %v572
      %v667 = vunpack.c.l.b16 %v573
      %v668 = vunpack.c.l.b16 %v574
      %v669 = vunpack.c.h.b16 %v574
      %v670 = vunpack.c.l.b16 %v575
      %v671 = vunpack.c.l.b16 %v576
      %v672 = vunpack.c.h.b16 %v576
      %v673 = vunpack.c.l.b16 %v577
      %v674 = vunpack.c.l.b16 %v578
      %v675 = vunpack.c.h.b16 %v578
      %v676 = vunpack.c.l.b16 %v579
      %v677 = vpack.c.b16 %v632, %v629
      %v678 = vpack.c.b16 %v633, %v630
      %v679 = vpack.c.b16 %v634, %v631
      %v680 = vpack.c.b16 %v638, %v635
      %v681 = vpack.c.b16 %v639, %v636
      %v682 = vpack.c.b16 %v640, %v637
      %v683 = vpack.c.b16 %v644, %v641
      %v684 = vpack.c.b16 %v645, %v642
      %v685 = vpack.c.b16 %v646, %v643
      %v686 = vpack.c.b16 %v650, %v647
      %v687 = vpack.c.b16 %v651, %v648
      %v688 = vpack.c.b16 %v652, %v649
      %v689 = vpack.c.b16 %v656, %v653
      %v690 = vpack.c.b16 %v657, %v654
      %v691 = vpack.c.b16 %v658, %v655
      %v692 = vpack.c.b16 %v662, %v659
      %v693 = vpack.c.b16 %v663, %v660
      %v694 = vpack.c.b16 %v664, %v661
      %v695 = vpack.c.b16 %v668, %v665
      %v696 = vpack.c.b16 %v669, %v666
      %v697 = vpack.c.b16 %v670, %v667
      %v698 = vpack.c.b16 %v674, %v671
      %v699 = vpack.c.b16 %v675, %v672
      %v700 = vpack.c.b16 %v676, %v673
      %725 = vmatprep.subr.bf16.mxu0 %v699
      %726 = vmatpush1.bf16.msra.mxu0 %v698
      %727 = vmatprep.subr.bf16.mxu0 %v696
      %728 = vmatpush1.bf16.msra.mxu0 %v695
      %729 = vmatprep.subr.bf16.mxu0 %v693
      %730 = vmatpush1.bf16.msra.mxu0 %v692
      %731 = vmatprep.subr.bf16.mxu0 %v690
      %732 = vmatpush1.bf16.msra.mxu0 %v689
      %733 = vmatprep.subr.bf16.mxu0 %v687
      %734 = vmatpush1.bf16.msra.mxu0 %v686
      %735 = vmatprep.subr.bf16.mxu0 %v684
      %736 = vmatpush1.bf16.msra.mxu0 %v683
      %737 = vmatprep.subr.bf16.mxu0 %v681
      %738 = vmatpush1.bf16.msra.mxu0 %v680
      %739 = vmatprep.subr.bf16.mxu0 %v678
      %740 = vmatpush1.bf16.msra.mxu0 %v677
      %741 = vmatprep.subr.bf16.mxu0 0
      %742 = vmatpush2.bf16.msra.mxu0 0
      %743 = vmatprep.subr.bf16.mxu0 0
      %744 = vmatpush2.bf16.msra.mxu0 0
      %745 = vmatprep.subr.bf16.mxu0 0
      %746 = vmatpush2.bf16.msra.mxu0 0
      %747 = vmatprep.subr.bf16.mxu0 0
      %748 = vmatpush2.bf16.msra.mxu0 0
      %749 = vmatprep.subr.bf16.mxu0 0
      %750 = vmatpush2.bf16.msra.mxu0 0
      %751 = vmatprep.subr.bf16.mxu0 0
      %752 = vmatpush2.bf16.msra.mxu0 0
      %753 = vmatprep.subr.bf16.mxu0 0
      %754 = vmatpush2.bf16.msra.mxu0 0
      %755 = vmatprep.subr.bf16.mxu0 0
      %756 = vmatpush2.bf16.msra.mxu0 0
      %757 = vmatprep.mubr.bf16.mxu0 0
      %758 = vmatmul.mubr.bf16.gmra.mxu0 %v540
      %v759 = vpop.f32.mrf.mxu0
      %v760 = vadd.f32 %v585, %v759
      %v761 = vpop.f32.mrf.mxu0
      %v762 = vadd.f32 %v589, %v761
      %v763 = vpop.f32.mrf.mxu0
      %v764 = vadd.f32 %v585, %v763
      %v765 = vpop.f32.mrf.mxu0
      %v766 = vadd.f32 %v589, %v765
      %767 = vmatprep.mubr.bf16.mxu0 0
      %768 = vmatmul.mubr.bf16.gmra.mxu0 %v541
      %v769 = vpop.f32.mrf.mxu0
      %v770 = vadd.f32 %v585, %v769
      %v771 = vpop.f32.mrf.mxu0
      %v772 = vadd.f32 %v589, %v771
      %v773 = vpop.f32.mrf.mxu0
      %v774 = vadd.f32 %v585, %v773
      %v775 = vpop.f32.mrf.mxu0
      %v776 = vadd.f32 %v589, %v775
      %777 = vmatprep.mubr.bf16.mxu0 0
      %778 = vmatmul.mubr.bf16.gmra.mxu0 %v542
      %v779 = vpop.f32.mrf.mxu0
      %v780 = vadd.f32 %v585, %v779
      %v781 = vpop.f32.mrf.mxu0
      %v782 = vadd.f32 %v589, %v781
      %v783 = vpop.f32.mrf.mxu0
      %v784 = vadd.f32 %v585, %v783
      %v785 = vpop.f32.mrf.mxu0
      %v786 = vadd.f32 %v589, %v785
      %787 = vmatprep.mubr.bf16.mxu0 0
      %788 = vmatmul.mubr.bf16.gmra.mxu0 %v543
      %v789 = vpop.f32.mrf.mxu0
      %v790 = vadd.f32 %v585, %v789
      %v791 = vpop.f32.mrf.mxu0
      %v792 = vadd.f32 %v589, %v791
      %v793 = vpop.f32.mrf.mxu0
      %v794 = vadd.f32 %v585, %v793
      %v795 = vpop.f32.mrf.mxu0
      %v796 = vadd.f32 %v589, %v795
      %797 = vmatprep.mubr.bf16.mxu0 0
      %798 = vmatmul.mubr.bf16.gmra.mxu0 %v544
      %v799 = vpop.f32.mrf.mxu0
      %v800 = vadd.f32 %v585, %v799
      %v801 = vpop.f32.mrf.mxu0
      %v802 = vadd.f32 %v589, %v801
      %v803 = vpop.f32.mrf.mxu0
      %v804 = vadd.f32 %v585, %v803
      %v805 = vpop.f32.mrf.mxu0
      %v806 = vadd.f32 %v589, %v805
      %807 = vmatprep.mubr.bf16.mxu0 0
      %808 = vmatmul.mubr.bf16.gmra.mxu0 %v545
      %v809 = vpop.f32.mrf.mxu0
      %v810 = vadd.f32 %v585, %v809
      %v811 = vpop.f32.mrf.mxu0
      %v812 = vadd.f32 %v589, %v811
      %v813 = vpop.f32.mrf.mxu0
      %v814 = vadd.f32 %v585, %v813
      %v815 = vpop.f32.mrf.mxu0
      %v816 = vadd.f32 %v589, %v815
      %817 = vmatprep.mubr.bf16.mxu0 0
      %818 = vmatmul.mubr.bf16.gmra.mxu0 %v546
      %v819 = vpop.f32.mrf.mxu0
      %v820 = vadd.f32 %v585, %v819
      %v821 = vpop.f32.mrf.mxu0
      %v822 = vadd.f32 %v589, %v821
      %v823 = vpop.f32.mrf.mxu0
      %v824 = vadd.f32 %v585, %v823
      %v825 = vpop.f32.mrf.mxu0
      %v826 = vadd.f32 %v589, %v825
      %827 = vmatprep.mubr.bf16.mxu0 0
      %828 = vmatmul.mubr.bf16.gmra.mxu0 %v547
      %v829 = vpop.f32.mrf.mxu0
      %v830 = vadd.f32 %v585, %v829
      %v831 = vpop.f32.mrf.mxu0
      %v832 = vadd.f32 %v589, %v831
      %v833 = vpop.f32.mrf.mxu0
      %v834 = vadd.f32 %v585, %v833
      %v835 = vpop.f32.mrf.mxu0
      %v836 = vadd.f32 %v589, %v835
      %837 = vdwg.mxu0
      %838 = vmatprep.subr.bf16.mxu0 0
      %839 = vmatpush1.bf16.msra.mxu0 %v700
      %840 = vmatprep.subr.bf16.mxu0 0
      %841 = vmatpush1.bf16.msra.mxu0 %v697
      %842 = vmatprep.subr.bf16.mxu0 0
      %843 = vmatpush1.bf16.msra.mxu0 %v694
      %844 = vmatprep.subr.bf16.mxu0 0
      %845 = vmatpush1.bf16.msra.mxu0 %v691
      %846 = vmatprep.subr.bf16.mxu0 0
      %847 = vmatpush1.bf16.msra.mxu0 %v688
      %848 = vmatprep.subr.bf16.mxu0 0
      %849 = vmatpush1.bf16.msra.mxu0 %v685
      %850 = vmatprep.subr.bf16.mxu0 0
      %851 = vmatpush1.bf16.msra.mxu0 %v682
      %852 = vmatprep.subr.bf16.mxu0 0
      %853 = vmatpush1.bf16.msra.mxu0 %v679
      %854 = vmatprep.subr.bf16.mxu0 0
      %855 = vmatpush2.bf16.msra.mxu0 0
      %856 = vmatprep.subr.bf16.mxu0 0
      %857 = vmatpush2.bf16.msra.mxu0 0
      %858 = vmatprep.subr.bf16.mxu0 0
      %859 = vmatpush2.bf16.msra.mxu0 0
      %860 = vmatprep.subr.bf16.mxu0 0
      %861 = vmatpush2.bf16.msra.mxu0 0
      %862 = vmatprep.subr.bf16.mxu0 0
      %863 = vmatpush2.bf16.msra.mxu0 0
      %864 = vmatprep.subr.bf16.mxu0 0
      %865 = vmatpush2.bf16.msra.mxu0 0
      %866 = vmatprep.subr.bf16.mxu0 0
      %867 = vmatpush2.bf16.msra.mxu0 0
      %868 = vmatprep.subr.bf16.mxu0 0
      %869 = vmatpush2.bf16.msra.mxu0 0
      %870 = vmatprep.mubr.bf16.mxu0 0
      %871 = vmatmul.mubr.bf16.gmra.mxu0 %v540
      %v872 = vpop.f32.mrf.mxu0
      %v873 = vadd.f32 %v593, %v872
      %v874 = vpop.f32.mrf.mxu0
      %v875 = vpop.f32.mrf.mxu0
      %v876 = vadd.f32 %v593, %v875
      %v877 = vpop.f32.mrf.mxu0
      %878 = vmatprep.mubr.bf16.mxu0 0
      %879 = vmatmul.mubr.bf16.gmra.mxu0 %v541
      %v880 = vpop.f32.mrf.mxu0
      %v881 = vadd.f32 %v593, %v880
      %v882 = vpop.f32.mrf.mxu0
      %v883 = vpop.f32.mrf.mxu0
      %v884 = vadd.f32 %v593, %v883
      %v885 = vpop.f32.mrf.mxu0
      %886 = vmatprep.mubr.bf16.mxu0 0
      %887 = vmatmul.mubr.bf16.gmra.mxu0 %v542
      %v888 = vpop.f32.mrf.mxu0
      %v889 = vadd.f32 %v593, %v888
      %v890 = vpop.f32.mrf.mxu0
      %v891 = vpop.f32.mrf.mxu0
      %v892 = vadd.f32 %v593, %v891
      %v893 = vpop.f32.mrf.mxu0
      %894 = vmatprep.mubr.bf16.mxu0 0
      %895 = vmatmul.mubr.bf16.gmra.mxu0 %v543
      %v896 = vpop.f32.mrf.mxu0
      %v897 = vadd.f32 %v593, %v896
      %v898 = vpop.f32.mrf.mxu0
      %v899 = vpop.f32.mrf.mxu0
      %v900 = vadd.f32 %v593, %v899
      %v901 = vpop.f32.mrf.mxu0
      %902 = vmatprep.mubr.bf16.mxu0 0
      %903 = vmatmul.mubr.bf16.gmra.mxu0 %v544
      %v904 = vpop.f32.mrf.mxu0
      %v905 = vadd.f32 %v593, %v904
      %v906 = vpop.f32.mrf.mxu0
      %v907 = vpop.f32.mrf.mxu0
      %v908 = vadd.f32 %v593, %v907
      %v909 = vpop.f32.mrf.mxu0
      %910 = vmatprep.mubr.bf16.mxu0 0
      %911 = vmatmul.mubr.bf16.gmra.mxu0 %v545
      %v912 = vpop.f32.mrf.mxu0
      %v913 = vadd.f32 %v593, %v912
      %v914 = vpop.f32.mrf.mxu0
      %v915 = vpop.f32.mrf.mxu0
      %v916 = vadd.f32 %v593, %v915
      %v917 = vpop.f32.mrf.mxu0
      %918 = vmatprep.mubr.bf16.mxu0 0
      %919 = vmatmul.mubr.bf16.gmra.mxu0 %v546
      %v920 = vpop.f32.mrf.mxu0
      %v921 = vadd.f32 %v593, %v920
      %v922 = vpop.f32.mrf.mxu0
      %v923 = vpop.f32.mrf.mxu0
      %v924 = vadd.f32 %v593, %v923
      %v925 = vpop.f32.mrf.mxu0
      %926 = vmatprep.mubr.bf16.mxu0 0
      %927 = vmatmul.mubr.bf16.gmra.mxu0 %v547
      %v928 = vpop.f32.mrf.mxu0
      %v929 = vadd.f32 %v593, %v928
      %v930 = vpop.f32.mrf.mxu0
      %v931 = vpop.f32.mrf.mxu0
      %v932 = vadd.f32 %v593, %v931
      %v933 = vpop.f32.mrf.mxu0
      %934 = vdwg.mxu0
      %v935 = vpack.c.bf16 %v764, %v760
      %v936 = vpack.c.bf16 %v766, %v762
      %v937 = vpack.c.bf16 %v876, %v873
      %v938 = vpack.c.bf16 %v774, %v770
      %v939 = vpack.c.bf16 %v776, %v772
      %v940 = vpack.c.bf16 %v884, %v881
      %v941 = vpack.c.bf16 %v784, %v780
      %v942 = vpack.c.bf16 %v786, %v782
      %v943 = vpack.c.bf16 %v892, %v889
      %v944 = vpack.c.bf16 %v794, %v790
      %v945 = vpack.c.bf16 %v796, %v792
      %v946 = vpack.c.bf16 %v900, %v897
      %v947 = vpack.c.bf16 %v804, %v800
      %v948 = vpack.c.bf16 %v806, %v802
      %v949 = vpack.c.bf16 %v908, %v905
      %v950 = vpack.c.bf16 %v814, %v810
      %v951 = vpack.c.bf16 %v816, %v812
      %v952 = vpack.c.bf16 %v916, %v913
      %v953 = vpack.c.bf16 %v824, %v820
      %v954 = vpack.c.bf16 %v826, %v822
      %v955 = vpack.c.bf16 %v924, %v921
      %v956 = vpack.c.bf16 %v834, %v830
      %v957 = vpack.c.bf16 %v836, %v832
      %v958 = vpack.c.bf16 %v932, %v929
      %v983 = vunpack.c.l.b16 %v935
      %v984 = vunpack.c.l.b16 %v936
      %v985 = vunpack.c.l.b16 %v937
      %v986 = vunpack.c.h.b16 %v935
      %v987 = vunpack.c.h.b16 %v936
      %v988 = vunpack.c.h.b16 %v937
      %v989 = vunpack.c.l.b16 %v938
      %v990 = vunpack.c.l.b16 %v939
      %v991 = vunpack.c.l.b16 %v940
      %v992 = vunpack.c.h.b16 %v938
      %v993 = vunpack.c.h.b16 %v939
      %v994 = vunpack.c.h.b16 %v940
      %v995 = vunpack.c.l.b16 %v941
      %v996 = vunpack.c.l.b16 %v942
      %v997 = vunpack.c.l.b16 %v943
      %v998 = vunpack.c.h.b16 %v941
      %v999 = vunpack.c.h.b16 %v942
      %v1000 = vunpack.c.h.b16 %v943
      %v1001 = vunpack.c.l.b16 %v944
      %v1002 = vunpack.c.l.b16 %v945
      %v1003 = vunpack.c.l.b16 %v946
      %v1004 = vunpack.c.h.b16 %v944
      %v1005 = vunpack.c.h.b16 %v945
      %v1006 = vunpack.c.h.b16 %v946
      %v1007 = vunpack.c.l.b16 %v947
      %v1008 = vunpack.c.l.b16 %v948
      %v1009 = vunpack.c.l.b16 %v949
      %v1010 = vunpack.c.h.b16 %v947
      %v1011 = vunpack.c.h.b16 %v948
      %v1012 = vunpack.c.h.b16 %v949
      %v1013 = vunpack.c.l.b16 %v950
      %v1014 = vunpack.c.l.b16 %v951
      %v1015 = vunpack.c.l.b16 %v952
      %v1016 = vunpack.c.h.b16 %v950
      %v1017 = vunpack.c.h.b16 %v951
      %v1018 = vunpack.c.h.b16 %v952
      %v1019 = vunpack.c.l.b16 %v953
      %v1020 = vunpack.c.l.b16 %v954
      %v1021 = vunpack.c.l.b16 %v955
      %v1022 = vunpack.c.h.b16 %v953
      %v1023 = vunpack.c.h.b16 %v954
      %v1024 = vunpack.c.h.b16 %v955
      %v1025 = vunpack.c.l.b16 %v956
      %v1026 = vunpack.c.l.b16 %v957
      %v1027 = vunpack.c.l.b16 %v958
      %v1028 = vunpack.c.h.b16 %v956
      %v1029 = vunpack.c.h.b16 %v957
      %v1030 = vunpack.c.h.b16 %v958
      %v1031 = vpack.c.b16 %v984, %v983
      %v1032 = vpack.c.b16 %v985, %v985
      %v1033 = vpack.c.b16 %v987, %v986
      %v1034 = vpack.c.b16 %v988, %v988
      %v1035 = vpack.c.b16 %v990, %v989
      %v1036 = vpack.c.b16 %v991, %v991
      %v1037 = vpack.c.b16 %v993, %v992
      %v1038 = vpack.c.b16 %v994, %v994
      %v1039 = vpack.c.b16 %v996, %v995
      %v1040 = vpack.c.b16 %v997, %v997
      %v1041 = vpack.c.b16 %v999, %v998
      %v1042 = vpack.c.b16 %v1000, %v1000
      %v1043 = vpack.c.b16 %v1002, %v1001
      %v1044 = vpack.c.b16 %v1003, %v1003
      %v1045 = vpack.c.b16 %v1005, %v1004
      %v1046 = vpack.c.b16 %v1006, %v1006
      %v1047 = vpack.c.b16 %v1008, %v1007
      %v1048 = vpack.c.b16 %v1009, %v1009
      %v1049 = vpack.c.b16 %v1011, %v1010
      %v1050 = vpack.c.b16 %v1012, %v1012
      %v1051 = vpack.c.b16 %v1014, %v1013
      %v1052 = vpack.c.b16 %v1015, %v1015
      %v1053 = vpack.c.b16 %v1017, %v1016
      %v1054 = vpack.c.b16 %v1018, %v1018
      %v1055 = vpack.c.b16 %v1020, %v1019
      %v1056 = vpack.c.b16 %v1021, %v1021
      %v1057 = vpack.c.b16 %v1023, %v1022
      %v1058 = vpack.c.b16 %v1024, %v1024
      %v1059 = vpack.c.b16 %v1026, %v1025
      %v1060 = vpack.c.b16 %v1027, %v1027
      %v1061 = vpack.c.b16 %v1029, %v1028
      %v1062 = vpack.c.b16 %v1030, %v1030
      %1095 = vst [vmem:[#allocation2] sm:$0xff] %v1031
      %1096 = vst [vmem:[#allocation2 + $0x8] sm:$0xf] %v1032
      %1097 = vst [vmem:[#allocation2 + $0xc] sm:$0xff] %v1033
      %1098 = vst [vmem:[#allocation2 + $0x14] sm:$0xf] %v1034
      %1099 = vst [vmem:[#allocation2 + $0x18] sm:$0xff] %v1035
      %1100 = vst [vmem:[#allocation2 + $0x20] sm:$0xf] %v1036
      %1101 = vst [vmem:[#allocation2 + $0x24] sm:$0xff] %v1037
      %1102 = vst [vmem:[#allocation2 + $0x2c] sm:$0xf] %v1038
      %1103 = vst [vmem:[#allocation2 + $0x30] sm:$0xff] %v1039
      %1104 = vst [vmem:[#allocation2 + $0x38] sm:$0xf] %v1040
      %1105 = vst [vmem:[#allocation2 + $0x3c] sm:$0xff] %v1041
      %1106 = vst [vmem:[#allocation2 + $0x44] sm:$0xf] %v1042
      %1107 = vst [vmem:[#allocation2 + $0x48] sm:$0xff] %v1043
      %1108 = vst [vmem:[#allocation2 + $0x50] sm:$0xf] %v1044
      %1109 = vst [vmem:[#allocation2 + $0x54] sm:$0xff] %v1045
      %1110 = vst [vmem:[#allocation2 + $0x5c] sm:$0xf] %v1046
      %1111 = vst [vmem:[#allocation2 + $0x60] sm:$0xff] %v1047
      %1112 = vst [vmem:[#allocation2 + $0x68] sm:$0xf] %v1048
      %1113 = vst [vmem:[#allocation2 + $0x6c] sm:$0xff] %v1049
      %1114 = vst [vmem:[#allocation2 + $0x74] sm:$0xf] %v1050
      %1115 = vst [vmem:[#allocation2 + $0x78] sm:$0xff] %v1051
      %1116 = vst [vmem:[#allocation2 + $0x80] sm:$0xf] %v1052
      %1117 = vst [vmem:[#allocation2 + $0x84] sm:$0xff] %v1053
      %1118 = vst [vmem:[#allocation2 + $0x8c] sm:$0xf] %v1054
      %1119 = vst [vmem:[#allocation2 + $0x90] sm:$0xff] %v1055
      %1120 = vst [vmem:[#allocation2 + $0x98] sm:$0xf] %v1056
      %1121 = vst [vmem:[#allocation2 + $0x9c] sm:$0xff] %v1057
      %1122 = vst [vmem:[#allocation2 + $0xa4] sm:$0xf] %v1058
      %1123 = vst [vmem:[#allocation2 + $0xa8] sm:$0xff] %v1059
      %1124 = vst [vmem:[#allocation2 + $0xb0] sm:$0xf] %v1060
      %1125 = vst [vmem:[#allocation2 + $0xb4] sm:$0xff] %v1061
      %1126 = vst [vmem:[#allocation2 + $0xbc] sm:$0xf] %v1062
      %v1127 = vld [vmem:[%s3] sm:$0xff]
      %v1128 = vld [vmem:[%s3 + $0x8] sm:$0xf]
      %v1129 = vld [vmem:[%s3 + $0xc] sm:$0xff]
      %v1130 = vld [vmem:[%s3 + $0x14] sm:$0xf]
      %v1131 = vld [vmem:[%s3 + $0x18] sm:$0xff]
      %v1132 = vld [vmem:[%s3 + $0x20] sm:$0xf]
      %v1133 = vld [vmem:[%s3 + $0x24] sm:$0xff]
      %v1134 = vld [vmem:[%s3 + $0x2c] sm:$0xf]
      %v1135 = vld [vmem:[%s3 + $0x30] sm:$0xff]
      %v1136 = vld [vmem:[%s3 + $0x38] sm:$0xf]
      %v1137 = vld [vmem:[%s3 + $0x3c] sm:$0xff]
      %v1138 = vld [vmem:[%s3 + $0x44] sm:$0xf]
      %v1139 = vld [vmem:[%s3 + $0x48] sm:$0xff]
      %v1140 = vld [vmem:[%s3 + $0x50] sm:$0xf]
      %v1141 = vld [vmem:[%s3 + $0x54] sm:$0xff]
      %v1142 = vld [vmem:[%s3 + $0x5c] sm:$0xf]
      %v1143 = vld [vmem:[%s3 + $0x60] sm:$0xff]
      %v1144 = vld [vmem:[%s3 + $0x68] sm:$0xf]
      %v1145 = vld [vmem:[%s3 + $0x6c] sm:$0xff]
      %v1146 = vld [vmem:[%s3 + $0x74] sm:$0xf]
      %v1147 = vld [vmem:[%s3 + $0x78] sm:$0xff]
      %v1148 = vld [vmem:[%s3 + $0x80] sm:$0xf]
      %v1149 = vld [vmem:[%s3 + $0x84] sm:$0xff]
      %v1150 = vld [vmem:[%s3 + $0x8c] sm:$0xf]
      %v1151 = vld [vmem:[%s3 + $0x90] sm:$0xff]
      %v1152 = vld [vmem:[%s3 + $0x98] sm:$0xf]
      %v1153 = vld [vmem:[%s3 + $0x9c] sm:$0xff]
      %v1154 = vld [vmem:[%s3 + $0xa4] sm:$0xf]
      %v1155 = vld [vmem:[%s3 + $0xa8] sm:$0xff]
      %v1156 = vld [vmem:[%s3 + $0xb0] sm:$0xf]
      %v1157 = vld [vmem:[%s3 + $0xb4] sm:$0xff]
      %v1158 = vld [vmem:[%s3 + $0xbc] sm:$0xf]
      %v1159 = vld [vmem:[%s4] sm:$0x7]
      %v1160 = vld [vmem:[%s5] sm:$0xff]
      %v1161 = vld [vmem:[%s5 + $0x8] sm:$0xf]
      %v1162 = vld [vmem:[%s5 + $0xc] sm:$0xff]
      %v1163 = vld [vmem:[%s5 + $0x14] sm:$0xf]
      %v1164 = vld [vmem:[%s5 + $0x18] sm:$0xff]
      %v1165 = vld [vmem:[%s5 + $0x20] sm:$0xf]
      %v1166 = vld [vmem:[%s5 + $0x24] sm:$0xff]
      %v1167 = vld [vmem:[%s5 + $0x2c] sm:$0xf]
      %v1168 = vld [vmem:[%s5 + $0x30] sm:$0xff]
      %v1169 = vld [vmem:[%s5 + $0x38] sm:$0xf]
      %v1170 = vld [vmem:[%s5 + $0x3c] sm:$0xff]
      %v1171 = vld [vmem:[%s5 + $0x44] sm:$0xf]
      %v1172 = vld [vmem:[%s5 + $0x48] sm:$0xff]
      %v1173 = vld [vmem:[%s5 + $0x50] sm:$0xf]
      %v1174 = vld [vmem:[%s5 + $0x54] sm:$0xff]
      %v1175 = vld [vmem:[%s5 + $0x5c] sm:$0xf]
      %v1176 = vld [vmem:[%s5 + $0x60] sm:$0xff]
      %v1177 = vld [vmem:[%s5 + $0x68] sm:$0xf]
      %v1178 = vld [vmem:[%s5 + $0x6c] sm:$0xff]
      %v1179 = vld [vmem:[%s5 + $0x74] sm:$0xf]
      %v1180 = vld [vmem:[%s5 + $0x78] sm:$0xff]
      %v1181 = vld [vmem:[%s5 + $0x80] sm:$0xf]
      %v1182 = vld [vmem:[%s5 + $0x84] sm:$0xff]
      %v1183 = vld [vmem:[%s5 + $0x8c] sm:$0xf]
      %v1184 = vld [vmem:[%s5 + $0x90] sm:$0xff]
      %v1185 = vld [vmem:[%s5 + $0x98] sm:$0xf]
      %v1186 = vld [vmem:[%s5 + $0x9c] sm:$0xff]
      %v1187 = vld [vmem:[%s5 + $0xa4] sm:$0xf]
      %v1188 = vld [vmem:[%s5 + $0xa8] sm:$0xff]
      %v1189 = vld [vmem:[%s5 + $0xb0] sm:$0xf]
      %v1190 = vld [vmem:[%s5 + $0xb4] sm:$0xff]
      %v1191 = vld [vmem:[%s5 + $0xbc] sm:$0xf]
      %v1192 = vld [vmem:[%s6] sm:$0xff]
      %v1193 = vld [vmem:[%s6 + $0x8] sm:$0xf]
      %v1194 = vld [vmem:[%s6 + $0xc] sm:$0xff]
      %v1195 = vld [vmem:[%s6 + $0x14] sm:$0xf]
      %v1196 = vld [vmem:[%s6 + $0x18] sm:$0xff]
      %v1197 = vld [vmem:[%s6 + $0x20] sm:$0xf]
      %v1198 = vld [vmem:[%s6 + $0x24] sm:$0xff]
      %v1199 = vld [vmem:[%s6 + $0x2c] sm:$0xf]
      %v1200 = vld [vmem:[%s6 + $0x30] sm:$0xff]
      %v1201 = vld [vmem:[%s6 + $0x38] sm:$0xf]
      %v1202 = vld [vmem:[%s6 + $0x3c] sm:$0xff]
      %v1203 = vld [vmem:[%s6 + $0x44] sm:$0xf]
      %v1204 = vld [vmem:[%s6 + $0x48] sm:$0xff]
      %v1205 = vld [vmem:[%s6 + $0x50] sm:$0xf]
      %v1206 = vld [vmem:[%s6 + $0x54] sm:$0xff]
      %v1207 = vld [vmem:[%s6 + $0x5c] sm:$0xf]
      %v1208 = vld [vmem:[%s6 + $0x60] sm:$0xff]
      %v1209 = vld [vmem:[%s6 + $0x68] sm:$0xf]
      %v1210 = vld [vmem:[%s6 + $0x6c] sm:$0xff]
      %v1211 = vld [vmem:[%s6 + $0x74] sm:$0xf]
      %v1212 = vld [vmem:[%s6 + $0x78] sm:$0xff]
      %v1213 = vld [vmem:[%s6 + $0x80] sm:$0xf]
      %v1214 = vld [vmem:[%s6 + $0x84] sm:$0xff]
      %v1215 = vld [vmem:[%s6 + $0x8c] sm:$0xf]
      %v1216 = vld [vmem:[%s6 + $0x90] sm:$0xff]
      %v1217 = vld [vmem:[%s6 + $0x98] sm:$0xf]
      %v1218 = vld [vmem:[%s6 + $0x9c] sm:$0xff]
      %v1219 = vld [vmem:[%s6 + $0xa4] sm:$0xf]
      %v1220 = vld [vmem:[%s6 + $0xa8] sm:$0xff]
      %v1221 = vld [vmem:[%s6 + $0xb0] sm:$0xf]
      %v1222 = vld [vmem:[%s6 + $0xb4] sm:$0xff]
      %v1223 = vld [vmem:[%s6 + $0xbc] sm:$0xf]
      %v1224 = vld [vmem:[%s7] sm:$0x7]
      %v1225 = vld [vmem:[%s8] sm:$0x7]
      %v1226 = vld [vmem:[#allocation2] sm:$0xff]
      %v1227 = vld [vmem:[#allocation2 + $0x8] sm:$0xf]
      %v1228 = vld [vmem:[#allocation2 + $0xc] sm:$0xff]
      %v1229 = vld [vmem:[#allocation2 + $0x14] sm:$0xf]
      %v1230 = vunpack.c.l.bf16 %v1226
      %v1231 = vunpack.c.h.bf16 %v1226
      %v1232 = vunpack.c.l.bf16 %v1227
      %v1233 = vunpack.c.l.bf16 %v1228
      %v1234 = vunpack.c.h.bf16 %v1228
      %v1235 = vunpack.c.l.bf16 %v1229
      %v1237 = vlaneseq
      %v1238 = vshrl.u32 %v1237, 7
      %v1239 = vsub.s32 0, %v1238
      %v1240 = vrot.slane %v1159, %v1239
      %v1241 = vlaneseq
      %v1242 = vshrl.u32 %v1241, 7
      %v1243 = vsub.s32 1, %v1242
      %v1244 = vrot.slane %v1159, %v1243
      %v1245 = vlaneseq
      %v1246 = vshrl.u32 %v1245, 7
      %v1247 = vsub.s32 2, %v1246
      %v1248 = vrot.slane %v1159, %v1247
      %v1284 = vunpack.c.l.b16 %v1127
      %v1285 = vunpack.c.h.b16 %v1127
      %v1286 = vunpack.c.l.b16 %v1128
      %v1287 = vunpack.c.l.b16 %v1129
      %v1288 = vunpack.c.h.b16 %v1129
      %v1289 = vunpack.c.l.b16 %v1130
      %v1290 = vunpack.c.l.b16 %v1131
      %v1291 = vunpack.c.h.b16 %v1131
      %v1292 = vunpack.c.l.b16 %v1132
      %v1293 = vunpack.c.l.b16 %v1133
      %v1294 = vunpack.c.h.b16 %v1133
      %v1295 = vunpack.c.l.b16 %v1134
      %v1296 = vunpack.c.l.b16 %v1135
      %v1297 = vunpack.c.h.b16 %v1135
      %v1298 = vunpack.c.l.b16 %v1136
      %v1299 = vunpack.c.l.b16 %v1137
      %v1300 = vunpack.c.h.b16 %v1137
      %v1301 = vunpack.c.l.b16 %v1138
      %v1302 = vunpack.c.l.b16 %v1139
      %v1303 = vunpack.c.h.b16 %v1139
      %v1304 = vunpack.c.l.b16 %v1140
      %v1305 = vunpack.c.l.b16 %v1141
      %v1306 = vunpack.c.h.b16 %v1141
      %v1307 = vunpack.c.l.b16 %v1142
      %v1308 = vunpack.c.l.b16 %v1143
      %v1309 = vunpack.c.h.b16 %v1143
      %v1310 = vunpack.c.l.b16 %v1144
      %v1311 = vunpack.c.l.b16 %v1145
      %v1312 = vunpack.c.h.b16 %v1145
      %v1313 = vunpack.c.l.b16 %v1146
      %v1314 = vunpack.c.l.b16 %v1147
      %v1315 = vunpack.c.h.b16 %v1147
      %v1316 = vunpack.c.l.b16 %v1148
      %v1317 = vunpack.c.l.b16 %v1149
      %v1318 = vunpack.c.h.b16 %v1149
      %v1319 = vunpack.c.l.b16 %v1150
      %v1320 = vunpack.c.l.b16 %v1151
      %v1321 = vunpack.c.h.b16 %v1151
      %v1322 = vunpack.c.l.b16 %v1152
      %v1323 = vunpack.c.l.b16 %v1153
      %v1324 = vunpack.c.h.b16 %v1153
      %v1325 = vunpack.c.l.b16 %v1154
      %v1326 = vunpack.c.l.b16 %v1155
      %v1327 = vunpack.c.h.b16 %v1155
      %v1328 = vunpack.c.l.b16 %v1156
      %v1329 = vunpack.c.l.b16 %v1157
      %v1330 = vunpack.c.h.b16 %v1157
      %v1331 = vunpack.c.l.b16 %v1158
      %v1332 = vpack.c.b16 %v1287, %v1284
      %v1333 = vpack.c.b16 %v1288, %v1285
      %v1334 = vpack.c.b16 %v1289, %v1286
      %v1335 = vpack.c.b16 %v1293, %v1290
      %v1336 = vpack.c.b16 %v1294, %v1291
      %v1337 = vpack.c.b16 %v1295, %v1292
      %v1338 = vpack.c.b16 %v1299, %v1296
      %v1339 = vpack.c.b16 %v1300, %v1297
      %v1340 = vpack.c.b16 %v1301, %v1298
      %v1341 = vpack.c.b16 %v1305, %v1302
      %v1342 = vpack.c.b16 %v1306, %v1303
      %v1343 = vpack.c.b16 %v1307, %v1304
      %v1344 = vpack.c.b16 %v1311, %v1308
      %v1345 = vpack.c.b16 %v1312, %v1309
      %v1346 = vpack.c.b16 %v1313, %v1310
      %v1347 = vpack.c.b16 %v1317, %v1314
      %v1348 = vpack.c.b16 %v1318, %v1315
      %v1349 = vpack.c.b16 %v1319, %v1316
      %v1350 = vpack.c.b16 %v1323, %v1320
      %v1351 = vpack.c.b16 %v1324, %v1321
      %v1352 = vpack.c.b16 %v1325, %v1322
      %v1353 = vpack.c.b16 %v1329, %v1326
      %v1354 = vpack.c.b16 %v1330, %v1327
      %v1355 = vpack.c.b16 %v1331, %v1328
      %1380 = vmatprep.subr.bf16.mxu0 %v1354
      %1381 = vmatpush1.bf16.msra.mxu0 %v1353
      %1382 = vmatprep.subr.bf16.mxu0 %v1351
      %1383 = vmatpush1.bf16.msra.mxu0 %v1350
      %1384 = vmatprep.subr.bf16.mxu0 %v1348
      %1385 = vmatpush1.bf16.msra.mxu0 %v1347
      %1386 = vmatprep.subr.bf16.mxu0 %v1345
      %1387 = vmatpush1.bf16.msra.mxu0 %v1344
      %1388 = vmatprep.subr.bf16.mxu0 %v1342
      %1389 = vmatpush1.bf16.msra.mxu0 %v1341
      %1390 = vmatprep.subr.bf16.mxu0 %v1339
      %1391 = vmatpush1.bf16.msra.mxu0 %v1338
      %1392 = vmatprep.subr.bf16.mxu0 %v1336
      %1393 = vmatpush1.bf16.msra.mxu0 %v1335
      %1394 = vmatprep.subr.bf16.mxu0 %v1333
      %1395 = vmatpush1.bf16.msra.mxu0 %v1332
      %1396 = vmatprep.subr.bf16.mxu0 0
      %1397 = vmatpush2.bf16.msra.mxu0 0
      %1398 = vmatprep.subr.bf16.mxu0 0
      %1399 = vmatpush2.bf16.msra.mxu0 0
      %1400 = vmatprep.subr.bf16.mxu0 0
      %1401 = vmatpush2.bf16.msra.mxu0 0
      %1402 = vmatprep.subr.bf16.mxu0 0
      %1403 = vmatpush2.bf16.msra.mxu0 0
      %1404 = vmatprep.subr.bf16.mxu0 0
      %1405 = vmatpush2.bf16.msra.mxu0 0
      %1406 = vmatprep.subr.bf16.mxu0 0
      %1407 = vmatpush2.bf16.msra.mxu0 0
      %1408 = vmatprep.subr.bf16.mxu0 0
      %1409 = vmatpush2.bf16.msra.mxu0 0
      %1410 = vmatprep.subr.bf16.mxu0 0
      %1411 = vmatpush2.bf16.msra.mxu0 0
      %1412 = vmatprep.mubr.bf16.mxu0 0
      %1413 = vmatmul.mubr.bf16.gmra.mxu0 0
      %v1414 = vpop.f32.mrf.mxu0
      %v1415 = vadd.f32 %v1240, %v1414
      %v1416 = vpop.f32.mrf.mxu0
      %v1417 = vadd.f32 %v1244, %v1416
      %v1418 = vpop.f32.mrf.mxu0
      %v1419 = vadd.f32 %v1240, %v1418
      %v1420 = vpop.f32.mrf.mxu0
      %v1421 = vadd.f32 %v1244, %v1420
      %1422 = vdwg.mxu0
      %1423 = vmatprep.subr.bf16.mxu0 0
      %1424 = vmatpush1.bf16.msra.mxu0 %v1355
      %1425 = vmatprep.subr.bf16.mxu0 0
      %1426 = vmatpush1.bf16.msra.mxu0 %v1352
      %1427 = vmatprep.subr.bf16.mxu0 0
      %1428 = vmatpush1.bf16.msra.mxu0 %v1349
      %1429 = vmatprep.subr.bf16.mxu0 0
      %1430 = vmatpush1.bf16.msra.mxu0 %v1346
      %1431 = vmatprep.subr.bf16.mxu0 0
      %1432 = vmatpush1.bf16.msra.mxu0 %v1343
      %1433 = vmatprep.subr.bf16.mxu0 0
      %1434 = vmatpush1.bf16.msra.mxu0 %v1340
      %1435 = vmatprep.subr.bf16.mxu0 0
      %1436 = vmatpush1.bf16.msra.mxu0 %v1337
      %1437 = vmatprep.subr.bf16.mxu0 0
      %1438 = vmatpush1.bf16.msra.mxu0 %v1334
      %1439 = vmatprep.subr.bf16.mxu0 0
      %1440 = vmatpush2.bf16.msra.mxu0 0
      %1441 = vmatprep.subr.bf16.mxu0 0
      %1442 = vmatpush2.bf16.msra.mxu0 0
      %1443 = vmatprep.subr.bf16.mxu0 0
      %1444 = vmatpush2.bf16.msra.mxu0 0
      %1445 = vmatprep.subr.bf16.mxu0 0
      %1446 = vmatpush2.bf16.msra.mxu0 0
      %1447 = vmatprep.subr.bf16.mxu0 0
      %1448 = vmatpush2.bf16.msra.mxu0 0
      %1449 = vmatprep.subr.bf16.mxu0 0
      %1450 = vmatpush2.bf16.msra.mxu0 0
      %1451 = vmatprep.subr.bf16.mxu0 0
      %1452 = vmatpush2.bf16.msra.mxu0 0
      %1453 = vmatprep.subr.bf16.mxu0 0
      %1454 = vmatpush2.bf16.msra.mxu0 0
      %1455 = vmatprep.mubr.bf16.mxu0 0
      %1456 = vmatmul.mubr.bf16.gmra.mxu0 0
      %v1457 = vpop.f32.mrf.mxu0
      %v1458 = vadd.f32 %v1248, %v1457
      %v1459 = vpop.f32.mrf.mxu0
      %v1460 = vpop.f32.mrf.mxu0
      %v1461 = vadd.f32 %v1248, %v1460
      %v1462 = vpop.f32.mrf.mxu0
      %1463 = vdwg.mxu0
      %v1464 = vadd.f32 %v1230, %v1415
      %v1465 = vadd.f32 %v1233, %v1419
      %v1466 = vmul.f32 %v1464, 0.5
      %v1467 = vmul.f32 %v1465, 0.5
      %v1468 = vtanh.pop %v1466
      %v1469 = vtanh.pop %v1467
      %v1470 = vadd.f32 %v1468, 1.0
      %v1471 = vadd.f32 %v1469, 1.0
      %v1472 = vmul.f32 %v1470, 0.5
      %v1473 = vmul.f32 %v1471, 0.5
      %v1474 = vadd.f32 %v1231, %v1417
      %v1475 = vadd.f32 %v1234, %v1421
      %v1476 = vmul.f32 %v1474, 0.5
      %v1477 = vmul.f32 %v1475, 0.5
      %v1478 = vtanh.pop %v1476
      %v1479 = vtanh.pop %v1477
      %v1480 = vadd.f32 %v1478, 1.0
      %v1481 = vadd.f32 %v1479, 1.0
      %v1482 = vmul.f32 %v1480, 0.5
      %v1483 = vmul.f32 %v1481, 0.5
      %v1484 = vmul.f32 %v1472, %v1458
      %v1485 = vmul.f32 %v1473, %v1461
      %v1486 = vadd.f32 %v1232, %v1484
      %v1487 = vadd.f32 %v1235, %v1485
      %v1488 = vtanh.pop %v1486
      %v1489 = vtanh.pop %v1487
      %v1490 = vsub.f32 1.0, %v1482
      %v1491 = vsub.f32 1.0, %v1483
      %v1492 = vmul.f32 %v1490, %v1488
      %v1493 = vmul.f32 %v1491, %v1489
      %v1494 = vmul.f32 %v1482, 0.0
      %v1495 = vmul.f32 %v1483, 0.0
      %v1496 = vadd.f32 %v1492, %v1494
      %v1497 = vadd.f32 %v1493, %v1495
      %v1498 = vpack.c.bf16 %v1497, %v1496
      %v1500 = vlaneseq
      %v1501 = vshrl.u32 %v1500, 7
      %v1502 = vsub.s32 0, %v1501
      %v1503 = vrot.slane %v1224, %v1502
      %v1504 = vlaneseq
      %v1505 = vshrl.u32 %v1504, 7
      %v1506 = vsub.s32 1, %v1505
      %v1507 = vrot.slane %v1224, %v1506
      %v1508 = vlaneseq
      %v1509 = vshrl.u32 %v1508, 7
      %v1510 = vsub.s32 2, %v1509
      %v1511 = vrot.slane %v1224, %v1510
      %v1547 = vunpack.c.l.b16 %v1160
      %v1548 = vunpack.c.h.b16 %v1160
      %v1549 = vunpack.c.l.b16 %v1161
      %v1550 = vunpack.c.l.b16 %v1162
      %v1551 = vunpack.c.h.b16 %v1162
      %v1552 = vunpack.c.l.b16 %v1163
      %v1553 = vunpack.c.l.b16 %v1164
      %v1554 = vunpack.c.h.b16 %v1164
      %v1555 = vunpack.c.l.b16 %v1165
      %v1556 = vunpack.c.l.b16 %v1166
      %v1557 = vunpack.c.h.b16 %v1166
      %v1558 = vunpack.c.l.b16 %v1167
      %v1559 = vunpack.c.l.b16 %v1168
      %v1560 = vunpack.c.h.b16 %v1168
      %v1561 = vunpack.c.l.b16 %v1169
      %v1562 = vunpack.c.l.b16 %v1170
      %v1563 = vunpack.c.h.b16 %v1170
      %v1564 = vunpack.c.l.b16 %v1171
      %v1565 = vunpack.c.l.b16 %v1172
      %v1566 = vunpack.c.h.b16 %v1172
      %v1567 = vunpack.c.l.b16 %v1173
      %v1568 = vunpack.c.l.b16 %v1174
      %v1569 = vunpack.c.h.b16 %v1174
      %v1570 = vunpack.c.l.b16 %v1175
      %v1571 = vunpack.c.l.b16 %v1176
      %v1572 = vunpack.c.h.b16 %v1176
      %v1573 = vunpack.c.l.b16 %v1177
      %v1574 = vunpack.c.l.b16 %v1178
      %v1575 = vunpack.c.h.b16 %v1178
      %v1576 = vunpack.c.l.b16 %v1179
      %v1577 = vunpack.c.l.b16 %v1180
      %v1578 = vunpack.c.h.b16 %v1180
      %v1579 = vunpack.c.l.b16 %v1181
      %v1580 = vunpack.c.l.b16 %v1182
      %v1581 = vunpack.c.h.b16 %v1182
      %v1582 = vunpack.c.l.b16 %v1183
      %v1583 = vunpack.c.l.b16 %v1184
      %v1584 = vunpack.c.h.b16 %v1184
      %v1585 = vunpack.c.l.b16 %v1185
      %v1586 = vunpack.c.l.b16 %v1186
      %v1587 = vunpack.c.h.b16 %v1186
      %v1588 = vunpack.c.l.b16 %v1187
      %v1589 = vunpack.c.l.b16 %v1188
      %v1590 = vunpack.c.h.b16 %v1188
      %v1591 = vunpack.c.l.b16 %v1189
      %v1592 = vunpack.c.l.b16 %v1190
      %v1593 = vunpack.c.h.b16 %v1190
      %v1594 = vunpack.c.l.b16 %v1191
      %v1595 = vpack.c.b16 %v1550, %v1547
      %v1596 = vpack.c.b16 %v1551, %v1548
      %v1597 = vpack.c.b16 %v1552, %v1549
      %v1598 = vpack.c.b16 %v1556, %v1553
      %v1599 = vpack.c.b16 %v1557, %v1554
      %v1600 = vpack.c.b16 %v1558, %v1555
      %v1601 = vpack.c.b16 %v1562, %v1559
      %v1602 = vpack.c.b16 %v1563, %v1560
      %v1603 = vpack.c.b16 %v1564, %v1561
      %v1604 = vpack.c.b16 %v1568, %v1565
      %v1605 = vpack.c.b16 %v1569, %v1566
      %v1606 = vpack.c.b16 %v1570, %v1567
      %v1607 = vpack.c.b16 %v1574, %v1571
      %v1608 = vpack.c.b16 %v1575, %v1572
      %v1609 = vpack.c.b16 %v1576, %v1573
      %v1610 = vpack.c.b16 %v1580, %v1577
      %v1611 = vpack.c.b16 %v1581, %v1578
      %v1612 = vpack.c.b16 %v1582, %v1579
      %v1613 = vpack.c.b16 %v1586, %v1583
      %v1614 = vpack.c.b16 %v1587, %v1584
      %v1615 = vpack.c.b16 %v1588, %v1585
      %v1616 = vpack.c.b16 %v1592, %v1589
      %v1617 = vpack.c.b16 %v1593, %v1590
      %v1618 = vpack.c.b16 %v1594, %v1591
      %1643 = vmatprep.subr.bf16.mxu0 %v1617
      %1644 = vmatpush1.bf16.msra.mxu0 %v1616
      %1645 = vmatprep.subr.bf16.mxu0 %v1614
      %1646 = vmatpush1.bf16.msra.mxu0 %v1613
      %1647 = vmatprep.subr.bf16.mxu0 %v1611
      %1648 = vmatpush1.bf16.msra.mxu0 %v1610
      %1649 = vmatprep.subr.bf16.mxu0 %v1608
      %1650 = vmatpush1.bf16.msra.mxu0 %v1607
      %1651 = vmatprep.subr.bf16.mxu0 %v1605
      %1652 = vmatpush1.bf16.msra.mxu0 %v1604
      %1653 = vmatprep.subr.bf16.mxu0 %v1602
      %1654 = vmatpush1.bf16.msra.mxu0 %v1601
      %1655 = vmatprep.subr.bf16.mxu0 %v1599
      %1656 = vmatpush1.bf16.msra.mxu0 %v1598
      %1657 = vmatprep.subr.bf16.mxu0 %v1596
      %1658 = vmatpush1.bf16.msra.mxu0 %v1595
      %1659 = vmatprep.subr.bf16.mxu0 0
      %1660 = vmatpush2.bf16.msra.mxu0 0
      %1661 = vmatprep.subr.bf16.mxu0 0
      %1662 = vmatpush2.bf16.msra.mxu0 0
      %1663 = vmatprep.subr.bf16.mxu0 0
      %1664 = vmatpush2.bf16.msra.mxu0 0
      %1665 = vmatprep.subr.bf16.mxu0 0
      %1666 = vmatpush2.bf16.msra.mxu0 0
      %1667 = vmatprep.subr.bf16.mxu0 0
      %1668 = vmatpush2.bf16.msra.mxu0 0
      %1669 = vmatprep.subr.bf16.mxu0 0
      %1670 = vmatpush2.bf16.msra.mxu0 0
      %1671 = vmatprep.subr.bf16.mxu0 0
      %1672 = vmatpush2.bf16.msra.mxu0 0
      %1673 = vmatprep.subr.bf16.mxu0 0
      %1674 = vmatpush2.bf16.msra.mxu0 0
      %1675 = vmatprep.mubr.bf16.mxu0 0
      %1676 = vmatmul.mubr.bf16.gmra.mxu0 %v1498
      %v1677 = vpop.f32.mrf.mxu0
      %v1678 = vadd.f32 %v1503, %v1677
      %v1679 = vpop.f32.mrf.mxu0
      %v1680 = vadd.f32 %v1507, %v1679
      %v1681 = vpop.f32.mrf.mxu0
      %v1682 = vadd.f32 %v1503, %v1681
      %v1683 = vpop.f32.mrf.mxu0
      %v1684 = vadd.f32 %v1507, %v1683
      %1685 = vdwg.mxu0
      %1686 = vmatprep.subr.bf16.mxu0 0
      %1687 = vmatpush1.bf16.msra.mxu0 %v1618
      %1688 = vmatprep.subr.bf16.mxu0 0
      %1689 = vmatpush1.bf16.msra.mxu0 %v1615
      %1690 = vmatprep.subr.bf16.mxu0 0
      %1691 = vmatpush1.bf16.msra.mxu0 %v1612
      %1692 = vmatprep.subr.bf16.mxu0 0
      %1693 = vmatpush1.bf16.msra.mxu0 %v1609
      %1694 = vmatprep.subr.bf16.mxu0 0
      %1695 = vmatpush1.bf16.msra.mxu0 %v1606
      %1696 = vmatprep.subr.bf16.mxu0 0
      %1697 = vmatpush1.bf16.msra.mxu0 %v1603
      %1698 = vmatprep.subr.bf16.mxu0 0
      %1699 = vmatpush1.bf16.msra.mxu0 %v1600
      %1700 = vmatprep.subr.bf16.mxu0 0
      %1701 = vmatpush1.bf16.msra.mxu0 %v1597
      %1702 = vmatprep.subr.bf16.mxu0 0
      %1703 = vmatpush2.bf16.msra.mxu0 0
      %1704 = vmatprep.subr.bf16.mxu0 0
      %1705 = vmatpush2.bf16.msra.mxu0 0
      %1706 = vmatprep.subr.bf16.mxu0 0
      %1707 = vmatpush2.bf16.msra.mxu0 0
      %1708 = vmatprep.subr.bf16.mxu0 0
      %1709 = vmatpush2.bf16.msra.mxu0 0
      %1710 = vmatprep.subr.bf16.mxu0 0
      %1711 = vmatpush2.bf16.msra.mxu0 0
      %1712 = vmatprep.subr.bf16.mxu0 0
      %1713 = vmatpush2.bf16.msra.mxu0 0
      %1714 = vmatprep.subr.bf16.mxu0 0
      %1715 = vmatpush2.bf16.msra.mxu0 0
      %1716 = vmatprep.subr.bf16.mxu0 0
      %1717 = vmatpush2.bf16.msra.mxu0 0
      %1718 = vmatprep.mubr.bf16.mxu0 0
      %1719 = vmatmul.mubr.bf16.gmra.mxu0 %v1498
      %v1720 = vpop.f32.mrf.mxu0
      %v1721 = vadd.f32 %v1511, %v1720
      %v1722 = vpop.f32.mrf.mxu0
      %v1723 = vpop.f32.mrf.mxu0
      %v1724 = vadd.f32 %v1511, %v1723
      %v1725 = vpop.f32.mrf.mxu0
      %1726 = vdwg.mxu0
      %v1728 = vlaneseq
      %v1729 = vshrl.u32 %v1728, 7
      %v1730 = vsub.s32 0, %v1729
      %v1731 = vrot.slane %v1225, %v1730
      %v1732 = vlaneseq
      %v1733 = vshrl.u32 %v1732, 7
      %v1734 = vsub.s32 1, %v1733
      %v1735 = vrot.slane %v1225, %v1734
      %v1736 = vlaneseq
      %v1737 = vshrl.u32 %v1736, 7
      %v1738 = vsub.s32 2, %v1737
      %v1739 = vrot.slane %v1225, %v1738
      %v1775 = vunpack.c.l.b16 %v1192
      %v1776 = vunpack.c.h.b16 %v1192
      %v1777 = vunpack.c.l.b16 %v1193
      %v1778 = vunpack.c.l.b16 %v1194
      %v1779 = vunpack.c.h.b16 %v1194
      %v1780 = vunpack.c.l.b16 %v1195
      %v1781 = vunpack.c.l.b16 %v1196
      %v1782 = vunpack.c.h.b16 %v1196
      %v1783 = vunpack.c.l.b16 %v1197
      %v1784 = vunpack.c.l.b16 %v1198
      %v1785 = vunpack.c.h.b16 %v1198
      %v1786 = vunpack.c.l.b16 %v1199
      %v1787 = vunpack.c.l.b16 %v1200
      %v1788 = vunpack.c.h.b16 %v1200
      %v1789 = vunpack.c.l.b16 %v1201
      %v1790 = vunpack.c.l.b16 %v1202
      %v1791 = vunpack.c.h.b16 %v1202
      %v1792 = vunpack.c.l.b16 %v1203
      %v1793 = vunpack.c.l.b16 %v1204
      %v1794 = vunpack.c.h.b16 %v1204
      %v1795 = vunpack.c.l.b16 %v1205
      %v1796 = vunpack.c.l.b16 %v1206
      %v1797 = vunpack.c.h.b16 %v1206
      %v1798 = vunpack.c.l.b16 %v1207
      %v1799 = vunpack.c.l.b16 %v1208
      %v1800 = vunpack.c.h.b16 %v1208
      %v1801 = vunpack.c.l.b16 %v1209
      %v1802 = vunpack.c.l.b16 %v1210
      %v1803 = vunpack.c.h.b16 %v1210
      %v1804 = vunpack.c.l.b16 %v1211
      %v1805 = vunpack.c.l.b16 %v1212
      %v1806 = vunpack.c.h.b16 %v1212
      %v1807 = vunpack.c.l.b16 %v1213
      %v1808 = vunpack.c.l.b16 %v1214
      %v1809 = vunpack.c.h.b16 %v1214
      %v1810 = vunpack.c.l.b16 %v1215
      %v1811 = vunpack.c.l.b16 %v1216
      %v1812 = vunpack.c.h.b16 %v1216
      %v1813 = vunpack.c.l.b16 %v1217
      %v1814 = vunpack.c.l.b16 %v1218
      %v1815 = vunpack.c.h.b16 %v1218
      %v1816 = vunpack.c.l.b16 %v1219
      %v1817 = vunpack.c.l.b16 %v1220
      %v1818 = vunpack.c.h.b16 %v1220
      %v1819 = vunpack.c.l.b16 %v1221
      %v1820 = vunpack.c.l.b16 %v1222
      %v1821 = vunpack.c.h.b16 %v1222
      %v1822 = vunpack.c.l.b16 %v1223
      %v1823 = vpack.c.b16 %v1778, %v1775
      %v1824 = vpack.c.b16 %v1779, %v1776
      %v1825 = vpack.c.b16 %v1780, %v1777
      %v1826 = vpack.c.b16 %v1784, %v1781
      %v1827 = vpack.c.b16 %v1785, %v1782
      %v1828 = vpack.c.b16 %v1786, %v1783
      %v1829 = vpack.c.b16 %v1790, %v1787
      %v1830 = vpack.c.b16 %v1791, %v1788
      %v1831 = vpack.c.b16 %v1792, %v1789
      %v1832 = vpack.c.b16 %v1796, %v1793
      %v1833 = vpack.c.b16 %v1797, %v1794
      %v1834 = vpack.c.b16 %v1798, %v1795
      %v1835 = vpack.c.b16 %v1802, %v1799
      %v1836 = vpack.c.b16 %v1803, %v1800
      %v1837 = vpack.c.b16 %v1804, %v1801
      %v1838 = vpack.c.b16 %v1808, %v1805
      %v1839 = vpack.c.b16 %v1809, %v1806
      %v1840 = vpack.c.b16 %v1810, %v1807
      %v1841 = vpack.c.b16 %v1814, %v1811
      %v1842 = vpack.c.b16 %v1815, %v1812
      %v1843 = vpack.c.b16 %v1816, %v1813
      %v1844 = vpack.c.b16 %v1820, %v1817
      %v1845 = vpack.c.b16 %v1821, %v1818
      %v1846 = vpack.c.b16 %v1822, %v1819
      %1871 = vmatprep.subr.bf16.mxu0 %v1845
      %1872 = vmatpush1.bf16.msra.mxu0 %v1844
      %1873 = vmatprep.subr.bf16.mxu0 %v1842
      %1874 = vmatpush1.bf16.msra.mxu0 %v1841
      %1875 = vmatprep.subr.bf16.mxu0 %v1839
      %1876 = vmatpush1.bf16.msra.mxu0 %v1838
      %1877 = vmatprep.subr.bf16.mxu0 %v1836
      %1878 = vmatpush1.bf16.msra.mxu0 %v1835
      %1879 = vmatprep.subr.bf16.mxu0 %v1833
      %1880 = vmatpush1.bf16.msra.mxu0 %v1832
      %1881 = vmatprep.subr.bf16.mxu0 %v1830
      %1882 = vmatpush1.bf16.msra.mxu0 %v1829
      %1883 = vmatprep.subr.bf16.mxu0 %v1827
      %1884 = vmatpush1.bf16.msra.mxu0 %v1826
      %1885 = vmatprep.subr.bf16.mxu0 %v1824
      %1886 = vmatpush1.bf16.msra.mxu0 %v1823
      %1887 = vmatprep.subr.bf16.mxu0 0
      %1888 = vmatpush2.bf16.msra.mxu0 0
      %1889 = vmatprep.subr.bf16.mxu0 0
      %1890 = vmatpush2.bf16.msra.mxu0 0
      %1891 = vmatprep.subr.bf16.mxu0 0
      %1892 = vmatpush2.bf16.msra.mxu0 0
      %1893 = vmatprep.subr.bf16.mxu0 0
      %1894 = vmatpush2.bf16.msra.mxu0 0
      %1895 = vmatprep.subr.bf16.mxu0 0
      %1896 = vmatpush2.bf16.msra.mxu0 0
      %1897 = vmatprep.subr.bf16.mxu0 0
      %1898 = vmatpush2.bf16.msra.mxu0 0
      %1899 = vmatprep.subr.bf16.mxu0 0
      %1900 = vmatpush2.bf16.msra.mxu0 0
      %1901 = vmatprep.subr.bf16.mxu0 0
      %1902 = vmatpush2.bf16.msra.mxu0 0
      %1903 = vmatprep.mubr.bf16.mxu0 0
      %1904 = vmatmul.mubr.bf16.gmra.mxu0 0
      %v1905 = vpop.f32.mrf.mxu0
      %v1906 = vadd.f32 %v1731, %v1905
      %v1907 = vpop.f32.mrf.mxu0
      %v1908 = vadd.f32 %v1735, %v1907
      %v1909 = vpop.f32.mrf.mxu0
      %v1910 = vadd.f32 %v1731, %v1909
      %v1911 = vpop.f32.mrf.mxu0
      %v1912 = vadd.f32 %v1735, %v1911
      %1913 = vdwg.mxu0
      %1914 = vmatprep.subr.bf16.mxu0 0
      %1915 = vmatpush1.bf16.msra.mxu0 %v1846
      %1916 = vmatprep.subr.bf16.mxu0 0
      %1917 = vmatpush1.bf16.msra.mxu0 %v1843
      %1918 = vmatprep.subr.bf16.mxu0 0
      %1919 = vmatpush1.bf16.msra.mxu0 %v1840
      %1920 = vmatprep.subr.bf16.mxu0 0
      %1921 = vmatpush1.bf16.msra.mxu0 %v1837
      %1922 = vmatprep.subr.bf16.mxu0 0
      %1923 = vmatpush1.bf16.msra.mxu0 %v1834
      %1924 = vmatprep.subr.bf16.mxu0 0
      %1925 = vmatpush1.bf16.msra.mxu0 %v1831
      %1926 = vmatprep.subr.bf16.mxu0 0
      %1927 = vmatpush1.bf16.msra.mxu0 %v1828
      %1928 = vmatprep.subr.bf16.mxu0 0
      %1929 = vmatpush1.bf16.msra.mxu0 %v1825
      %1930 = vmatprep.subr.bf16.mxu0 0
      %1931 = vmatpush2.bf16.msra.mxu0 0
      %1932 = vmatprep.subr.bf16.mxu0 0
      %1933 = vmatpush2.bf16.msra.mxu0 0
      %1934 = vmatprep.subr.bf16.mxu0 0
      %1935 = vmatpush2.bf16.msra.mxu0 0
      %1936 = vmatprep.subr.bf16.mxu0 0
      %1937 = vmatpush2.bf16.msra.mxu0 0
      %1938 = vmatprep.subr.bf16.mxu0 0
      %1939 = vmatpush2.bf16.msra.mxu0 0
      %1940 = vmatprep.subr.bf16.mxu0 0
      %1941 = vmatpush2.bf16.msra.mxu0 0
      %1942 = vmatprep.subr.bf16.mxu0 0
      %1943 = vmatpush2.bf16.msra.mxu0 0
      %1944 = vmatprep.subr.bf16.mxu0 0
      %1945 = vmatpush2.bf16.msra.mxu0 0
      %1946 = vmatprep.mubr.bf16.mxu0 0
      %1947 = vmatmul.mubr.bf16.gmra.mxu0 0
      %v1948 = vpop.f32.mrf.mxu0
      %v1949 = vadd.f32 %v1739, %v1948
      %v1950 = vpop.f32.mrf.mxu0
      %v1951 = vpop.f32.mrf.mxu0
      %v1952 = vadd.f32 %v1739, %v1951
      %v1953 = vpop.f32.mrf.mxu0
      %1954 = vdwg.mxu0
      %v1955 = vadd.f32 %v1678, %v1906
      %v1956 = vadd.f32 %v1682, %v1910
      %v1957 = vmul.f32 %v1955, 0.5
      %v1958 = vmul.f32 %v1956, 0.5
      %v1959 = vtanh.pop %v1957
      %v1960 = vtanh.pop %v1958
      %v1961 = vadd.f32 %v1959, 1.0
      %v1962 = vadd.f32 %v1960, 1.0
      %v1963 = vmul.f32 %v1961, 0.5
      %v1964 = vmul.f32 %v1962, 0.5
      %v1965 = vadd.f32 %v1680, %v1908
      %v1966 = vadd.f32 %v1684, %v1912
      %v1967 = vmul.f32 %v1965, 0.5
      %v1968 = vmul.f32 %v1966, 0.5
      %v1969 = vtanh.pop %v1967
      %v1970 = vtanh.pop %v1968
      %v1971 = vadd.f32 %v1969, 1.0
      %v1972 = vadd.f32 %v1970, 1.0
      %v1973 = vmul.f32 %v1971, 0.5
      %v1974 = vmul.f32 %v1972, 0.5
      %v1975 = vmul.f32 %v1963, %v1949
      %v1976 = vmul.f32 %v1964, %v1952
      %v1977 = vadd.f32 %v1721, %v1975
      %v1978 = vadd.f32 %v1724, %v1976
      %v1979 = vtanh.pop %v1977
      %v1980 = vtanh.pop %v1978
      %v1981 = vsub.f32 1.0, %v1973
      %v1982 = vsub.f32 1.0, %v1974
      %v1983 = vmul.f32 %v1981, %v1979
      %v1984 = vmul.f32 %v1982, %v1980
      %v1985 = vmul.f32 %v1973, 0.0
      %v1986 = vmul.f32 %v1974, 0.0
      %v1987 = vadd.f32 %v1983, %v1985
      %v1988 = vadd.f32 %v1984, %v1986
      %vm1989 = vcmp.gt.s32.totalorder %v356, 0
      %vm1990 = vcmp.gt.s32.totalorder %v369, 0
      %v1991 = vsel %vm1989, 1, 0
      %v1992 = vsel %vm1990, 1, 0
      %vm1993 = vcmp.eq.s32.totalorder %v1991, 1
      %vm1994 = vcmp.eq.s32.totalorder %v1992, 1
      %v1995 = vsel %vm1993, %v1987, 0.0
      %v1996 = vsel %vm1994, %v1988, 0.0
      %v1997 = vadd.f32 %v1995, 0.0
      %v1998 = vadd.f32 %v1996, 0.0
      %s1999 = scalar_lea.vmem [#allocation2], 24
      %v2000 = vld [vmem:[%s1999] sm:$0xff]
      %v2001 = vld [vmem:[%s1999 + $0x8] sm:$0xf]
      %v2002 = vld [vmem:[%s1999 + $0xc] sm:$0xff]
      %v2003 = vld [vmem:[%s1999 + $0x14] sm:$0xf]
      %v2004 = vunpack.c.l.bf16 %v2000
      %v2005 = vunpack.c.h.bf16 %v2000
      %v2006 = vunpack.c.l.bf16 %v2001
      %v2007 = vunpack.c.l.bf16 %v2002
      %v2008 = vunpack.c.h.bf16 %v2002
      %v2009 = vunpack.c.l.bf16 %v2003
      %2010 = vmatprep.subr.bf16.mxu0 %v1354
      %2011 = vmatpush1.bf16.msra.mxu0 %v1353
      %2012 = vmatprep.subr.bf16.mxu0 %v1351
      %2013 = vmatpush1.bf16.msra.mxu0 %v1350
      %2014 = vmatprep.subr.bf16.mxu0 %v1348
      %2015 = vmatpush1.bf16.msra.mxu0 %v1347
      %2016 = vmatprep.subr.bf16.mxu0 %v1345
      %2017 = vmatpush1.bf16.msra.mxu0 %v1344
      %2018 = vmatprep.subr.bf16.mxu0 %v1342
      %2019 = vmatpush1.bf16.msra.mxu0 %v1341
      %2020 = vmatprep.subr.bf16.mxu0 %v1339
      %2021 = vmatpush1.bf16.msra.mxu0 %v1338
      %2022 = vmatprep.subr.bf16.mxu0 %v1336
      %2023 = vmatpush1.bf16.msra.mxu0 %v1335
      %2024 = vmatprep.subr.bf16.mxu0 %v1333
      %2025 = vmatpush1.bf16.msra.mxu0 %v1332
      %2026 = vmatprep.subr.bf16.mxu0 0
      %2027 = vmatpush2.bf16.msra.mxu0 0
      %2028 = vmatprep.subr.bf16.mxu0 0
      %2029 = vmatpush2.bf16.msra.mxu0 0
      %2030 = vmatprep.subr.bf16.mxu0 0
      %2031 = vmatpush2.bf16.msra.mxu0 0
      %2032 = vmatprep.subr.bf16.mxu0 0
      %2033 = vmatpush2.bf16.msra.mxu0 0
      %2034 = vmatprep.subr.bf16.mxu0 0
      %2035 = vmatpush2.bf16.msra.mxu0 0
      %2036 = vmatprep.subr.bf16.mxu0 0
      %2037 = vmatpush2.bf16.msra.mxu0 0
      %2038 = vmatprep.subr.bf16.mxu0 0
      %2039 = vmatpush2.bf16.msra.mxu0 0
      %2040 = vmatprep.subr.bf16.mxu0 0
      %2041 = vmatpush2.bf16.msra.mxu0 0
      %2042 = vmatprep.mubr.bf16.mxu0 0
      %2043 = vmatmul.mubr.bf16.gmra.mxu0 %v1498
      %v2044 = vpop.f32.mrf.mxu0
      %v2045 = vadd.f32 %v1240, %v2044
      %v2046 = vpop.f32.mrf.mxu0
      %v2047 = vadd.f32 %v1244, %v2046
      %v2048 = vpop.f32.mrf.mxu0
      %v2049 = vadd.f32 %v1240, %v2048
      %v2050 = vpop.f32.mrf.mxu0
      %v2051 = vadd.f32 %v1244, %v2050
      %2052 = vdwg.mxu0
      %2053 = vmatprep.subr.bf16.mxu0 0
      %2054 = vmatpush1.bf16.msra.mxu0 %v1355
      %2055 = vmatprep.subr.bf16.mxu0 0
      %2056 = vmatpush1.bf16.msra.mxu0 %v1352
      %2057 = vmatprep.subr.bf16.mxu0 0
      %2058 = vmatpush1.bf16.msra.mxu0 %v1349
      %2059 = vmatprep.subr.bf16.mxu0 0
      %2060 = vmatpush1.bf16.msra.mxu0 %v1346
      %2061 = vmatprep.subr.bf16.mxu0 0
      %2062 = vmatpush1.bf16.msra.mxu0 %v1343
      %2063 = vmatprep.subr.bf16.mxu0 0
      %2064 = vmatpush1.bf16.msra.mxu0 %v1340
      %2065 = vmatprep.subr.bf16.mxu0 0
      %2066 = vmatpush1.bf16.msra.mxu0 %v1337
      %2067 = vmatprep.subr.bf16.mxu0 0
      %2068 = vmatpush1.bf16.msra.mxu0 %v1334
      %2069 = vmatprep.subr.bf16.mxu0 0
      %2070 = vmatpush2.bf16.msra.mxu0 0
      %2071 = vmatprep.subr.bf16.mxu0 0
      %2072 = vmatpush2.bf16.msra.mxu0 0
      %2073 = vmatprep.subr.bf16.mxu0 0
      %2074 = vmatpush2.bf16.msra.mxu0 0
      %2075 = vmatprep.subr.bf16.mxu0 0
      %2076 = vmatpush2.bf16.msra.mxu0 0
      %2077 = vmatprep.subr.bf16.mxu0 0
      %2078 = vmatpush2.bf16.msra.mxu0 0
      %2079 = vmatprep.subr.bf16.mxu0 0
      %2080 = vmatpush2.bf16.msra.mxu0 0
      %2081 = vmatprep.subr.bf16.mxu0 0
      %2082 = vmatpush2.bf16.msra.mxu0 0
      %2083 = vmatprep.subr.bf16.mxu0 0
      %2084 = vmatpush2.bf16.msra.mxu0 0
      %2085 = vmatprep.mubr.bf16.mxu0 0
      %2086 = vmatmul.mubr.bf16.gmra.mxu0 %v1498
      %v2087 = vpop.f32.mrf.mxu0
      %v2088 = vadd.f32 %v1248, %v2087
      %v2089 = vpop.f32.mrf.mxu0
      %v2090 = vpop.f32.mrf.mxu0
      %v2091 = vadd.f32 %v1248, %v2090
      %v2092 = vpop.f32.mrf.mxu0
      %2093 = vdwg.mxu0
      %v2094 = vadd.f32 %v2004, %v2045
      %v2095 = vadd.f32 %v2007, %v2049
      %v2096 = vmul.f32 %v2094, 0.5
      %v2097 = vmul.f32 %v2095, 0.5
      %v2098 = vtanh.pop %v2096
      %v2099 = vtanh.pop %v2097
      %v2100 = vadd.f32 %v2098, 1.0
      %v2101 = vadd.f32 %v2099, 1.0
      %v2102 = vmul.f32 %v2100, 0.5
      %v2103 = vmul.f32 %v2101, 0.5
      %v2104 = vadd.f32 %v2005, %v2047
      %v2105 = vadd.f32 %v2008, %v2051
      %v2106 = vmul.f32 %v2104, 0.5
      %v2107 = vmul.f32 %v2105, 0.5
      %v2108 = vtanh.pop %v2106
      %v2109 = vtanh.pop %v2107
      %v2110 = vadd.f32 %v2108, 1.0
      %v2111 = vadd.f32 %v2109, 1.0
      %v2112 = vmul.f32 %v2110, 0.5
      %v2113 = vmul.f32 %v2111, 0.5
      %v2114 = vmul.f32 %v2102, %v2088
      %v2115 = vmul.f32 %v2103, %v2091
      %v2116 = vadd.f32 %v2006, %v2114
      %v2117 = vadd.f32 %v2009, %v2115
      %v2118 = vtanh.pop %v2116
      %v2119 = vtanh.pop %v2117
      %v2120 = vsub.f32 1.0, %v2112
      %v2121 = vsub.f32 1.0, %v2113
      %v2122 = vmul.f32 %v2120, %v2118
      %v2123 = vmul.f32 %v2121, %v2119
      %v2124 = vmul.f32 %v2112, %v1496
      %v2125 = vmul.f32 %v2113, %v1497
      %v2126 = vadd.f32 %v2122, %v2124
      %v2127 = vadd.f32 %v2123, %v2125
      %v2128 = vpack.c.bf16 %v2127, %v2126
      %2129 = vmatprep.subr.bf16.mxu0 %v1617
      %2130 = vmatpush1.bf16.msra.mxu0 %v1616
      %2131 = vmatprep.subr.bf16.mxu0 %v1614
      %2132 = vmatpush1.bf16.msra.mxu0 %v1613
      %2133 = vmatprep.subr.bf16.mxu0 %v1611
      %2134 = vmatpush1.bf16.msra.mxu0 %v1610
      %2135 = vmatprep.subr.bf16.mxu0 %v1608
      %2136 = vmatpush1.bf16.msra.mxu0 %v1607
      %2137 = vmatprep.subr.bf16.mxu0 %v1605
      %2138 = vmatpush1.bf16.msra.mxu0 %v1604
      %2139 = vmatprep.subr.bf16.mxu0 %v1602
      %2140 = vmatpush1.bf16.msra.mxu0 %v1601
      %2141 = vmatprep.subr.bf16.mxu0 %v1599
      %2142 = vmatpush1.bf16.msra.mxu0 %v1598
      %2143 = vmatprep.subr.bf16.mxu0 %v1596
      %2144 = vmatpush1.bf16.msra.mxu0 %v1595
      %2145 = vmatprep.subr.bf16.mxu0 0
      %2146 = vmatpush2.bf16.msra.mxu0 0
      %2147 = vmatprep.subr.bf16.mxu0 0
      %2148 = vmatpush2.bf16.msra.mxu0 0
      %2149 = vmatprep.subr.bf16.mxu0 0
      %2150 = vmatpush2.bf16.msra.mxu0 0
      %2151 = vmatprep.subr.bf16.mxu0 0
      %2152 = vmatpush2.bf16.msra.mxu0 0
      %2153 = vmatprep.subr.bf16.mxu0 0
      %2154 = vmatpush2.bf16.msra.mxu0 0
      %2155 = vmatprep.subr.bf16.mxu0 0
      %2156 = vmatpush2.bf16.msra.mxu0 0
      %2157 = vmatprep.subr.bf16.mxu0 0
      %2158 = vmatpush2.bf16.msra.mxu0 0
      %2159 = vmatprep.subr.bf16.mxu0 0
      %2160 = vmatpush2.bf16.msra.mxu0 0
      %2161 = vmatprep.mubr.bf16.mxu0 0
      %2162 = vmatmul.mubr.bf16.gmra.mxu0 %v2128
      %v2163 = vpop.f32.mrf.mxu0
      %v2164 = vadd.f32 %v1503, %v2163
      %v2165 = vpop.f32.mrf.mxu0
      %v2166 = vadd.f32 %v1507, %v2165
      %v2167 = vpop.f32.mrf.mxu0
      %v2168 = vadd.f32 %v1503, %v2167
      %v2169 = vpop.f32.mrf.mxu0
      %v2170 = vadd.f32 %v1507, %v2169
      %2171 = vdwg.mxu0
      %2172 = vmatprep.subr.bf16.mxu0 0
      %2173 = vmatpush1.bf16.msra.mxu0 %v1618
      %2174 = vmatprep.subr.bf16.mxu0 0
      %2175 = vmatpush1.bf16.msra.mxu0 %v1615
      %2176 = vmatprep.subr.bf16.mxu0 0
      %2177 = vmatpush1.bf16.msra.mxu0 %v1612
      %2178 = vmatprep.subr.bf16.mxu0 0
      %2179 = vmatpush1.bf16.msra.mxu0 %v1609
      %2180 = vmatprep.subr.bf16.mxu0 0
      %2181 = vmatpush1.bf16.msra.mxu0 %v1606
      %2182 = vmatprep.subr.bf16.mxu0 0
      %2183 = vmatpush1.bf16.msra.mxu0 %v1603
      %2184 = vmatprep.subr.bf16.mxu0 0
      %2185 = vmatpush1.bf16.msra.mxu0 %v1600
      %2186 = vmatprep.subr.bf16.mxu0 0
      %2187 = vmatpush1.bf16.msra.mxu0 %v1597
      %2188 = vmatprep.subr.bf16.mxu0 0
      %2189 = vmatpush2.bf16.msra.mxu0 0
      %2190 = vmatprep.subr.bf16.mxu0 0
      %2191 = vmatpush2.bf16.msra.mxu0 0
      %2192 = vmatprep.subr.bf16.mxu0 0
      %2193 = vmatpush2.bf16.msra.mxu0 0
      %2194 = vmatprep.subr.bf16.mxu0 0
      %2195 = vmatpush2.bf16.msra.mxu0 0
      %2196 = vmatprep.subr.bf16.mxu0 0
      %2197 = vmatpush2.bf16.msra.mxu0 0
      %2198 = vmatprep.subr.bf16.mxu0 0
      %2199 = vmatpush2.bf16.msra.mxu0 0
      %2200 = vmatprep.subr.bf16.mxu0 0
      %2201 = vmatpush2.bf16.msra.mxu0 0
      %2202 = vmatprep.subr.bf16.mxu0 0
      %2203 = vmatpush2.bf16.msra.mxu0 0
      %2204 = vmatprep.mubr.bf16.mxu0 0
      %2205 = vmatmul.mubr.bf16.gmra.mxu0 %v2128
      %v2206 = vpop.f32.mrf.mxu0
      %v2207 = vadd.f32 %v1511, %v2206
      %v2208 = vpop.f32.mrf.mxu0
      %v2209 = vpop.f32.mrf.mxu0
      %v2210 = vadd.f32 %v1511, %v2209
      %v2211 = vpop.f32.mrf.mxu0
      %2212 = vdwg.mxu0
      %v2213 = vpack.c.bf16 %v1988, %v1987
      %2214 = vmatprep.subr.bf16.mxu0 %v1845
      %2215 = vmatpush1.bf16.msra.mxu0 %v1844
      %2216 = vmatprep.subr.bf16.mxu0 %v1842
      %2217 = vmatpush1.bf16.msra.mxu0 %v1841
      %2218 = vmatprep.subr.bf16.mxu0 %v1839
      %2219 = vmatpush1.bf16.msra.mxu0 %v1838
      %2220 = vmatprep.subr.bf16.mxu0 %v1836
      %2221 = vmatpush1.bf16.msra.mxu0 %v1835
      %2222 = vmatprep.subr.bf16.mxu0 %v1833
      %2223 = vmatpush1.bf16.msra.mxu0 %v1832
      %2224 = vmatprep.subr.bf16.mxu0 %v1830
      %2225 = vmatpush1.bf16.msra.mxu0 %v1829
      %2226 = vmatprep.subr.bf16.mxu0 %v1827
      %2227 = vmatpush1.bf16.msra.mxu0 %v1826
      %2228 = vmatprep.subr.bf16.mxu0 %v1824
      %2229 = vmatpush1.bf16.msra.mxu0 %v1823
      %2230 = vmatprep.subr.bf16.mxu0 0
      %2231 = vmatpush2.bf16.msra.mxu0 0
      %2232 = vmatprep.subr.bf16.mxu0 0
      %2233 = vmatpush2.bf16.msra.mxu0 0
      %2234 = vmatprep.subr.bf16.mxu0 0
      %2235 = vmatpush2.bf16.msra.mxu0 0
      %2236 = vmatprep.subr.bf16.mxu0 0
      %2237 = vmatpush2.bf16.msra.mxu0 0
      %2238 = vmatprep.subr.bf16.mxu0 0
      %2239 = vmatpush2.bf16.msra.mxu0 0
      %2240 = vmatprep.subr.bf16.mxu0 0
      %2241 = vmatpush2.bf16.msra.mxu0 0
      %2242 = vmatprep.subr.bf16.mxu0 0
      %2243 = vmatpush2.bf16.msra.mxu0 0
      %2244 = vmatprep.subr.bf16.mxu0 0
      %2245 = vmatpush2.bf16.msra.mxu0 0
      %2246 = vmatprep.mubr.bf16.mxu0 0
      %2247 = vmatmul.mubr.bf16.gmra.mxu0 %v2213
      %v2248 = vpop.f32.mrf.mxu0
      %v2249 = vadd.f32 %v1731, %v2248
      %v2250 = vpop.f32.mrf.mxu0
      %v2251 = vadd.f32 %v1735, %v2250
      %v2252 = vpop.f32.mrf.mxu0
      %v2253 = vadd.f32 %v1731, %v2252
      %v2254 = vpop.f32.mrf.mxu0
      %v2255 = vadd.f32 %v1735, %v2254
      %2256 = vdwg.mxu0
      %2257 = vmatprep.subr.bf16.mxu0 0
      %2258 = vmatpush1.bf16.msra.mxu0 %v1846
      %2259 = vmatprep.subr.bf16.mxu0 0
      %2260 = vmatpush1.bf16.msra.mxu0 %v1843
      %2261 = vmatprep.subr.bf16.mxu0 0
      %2262 = vmatpush1.bf16.msra.mxu0 %v1840
      %2263 = vmatprep.subr.bf16.mxu0 0
      %2264 = vmatpush1.bf16.msra.mxu0 %v1837
      %2265 = vmatprep.subr.bf16.mxu0 0
      %2266 = vmatpush1.bf16.msra.mxu0 %v1834
      %2267 = vmatprep.subr.bf16.mxu0 0
      %2268 = vmatpush1.bf16.msra.mxu0 %v1831
      %2269 = vmatprep.subr.bf16.mxu0 0
      %2270 = vmatpush1.bf16.msra.mxu0 %v1828
      %2271 = vmatprep.subr.bf16.mxu0 0
      %2272 = vmatpush1.bf16.msra.mxu0 %v1825
      %2273 = vmatprep.subr.bf16.mxu0 0
      %2274 = vmatpush2.bf16.msra.mxu0 0
      %2275 = vmatprep.subr.bf16.mxu0 0
      %2276 = vmatpush2.bf16.msra.mxu0 0
      %2277 = vmatprep.subr.bf16.mxu0 0
      %2278 = vmatpush2.bf16.msra.mxu0 0
      %2279 = vmatprep.subr.bf16.mxu0 0
      %2280 = vmatpush2.bf16.msra.mxu0 0
      %2281 = vmatprep.subr.bf16.mxu0 0
      %2282 = vmatpush2.bf16.msra.mxu0 0
      %2283 = vmatprep.subr.bf16.mxu0 0
      %2284 = vmatpush2.bf16.msra.mxu0 0
      %2285 = vmatprep.subr.bf16.mxu0 0
      %2286 = vmatpush2.bf16.msra.mxu0 0
      %2287 = vmatprep.subr.bf16.mxu0 0
      %2288 = vmatpush2.bf16.msra.mxu0 0
      %2289 = vmatprep.mubr.bf16.mxu0 0
      %2290 = vmatmul.mubr.bf16.gmra.mxu0 %v2213
      %v2291 = vpop.f32.mrf.mxu0
      %v2292 = vadd.f32 %v1739, %v2291
      %v2293 = vpop.f32.mrf.mxu0
      %v2294 = vpop.f32.mrf.mxu0
      %v2295 = vadd.f32 %v1739, %v2294
      %v2296 = vpop.f32.mrf.mxu0
      %2297 = vdwg.mxu0
      %v2298 = vadd.f32 %v2164, %v2249
      %v2299 = vadd.f32 %v2168, %v2253
      %v2300 = vmul.f32 %v2298, 0.5
      %v2301 = vmul.f32 %v2299, 0.5
      %v2302 = vtanh.pop %v2300
      %v2303 = vtanh.pop %v2301
      %v2304 = vadd.f32 %v2302, 1.0
      %v2305 = vadd.f32 %v2303, 1.0
      %v2306 = vmul.f32 %v2304, 0.5
      %v2307 = vmul.f32 %v2305, 0.5
      %v2308 = vadd.f32 %v2166, %v2251
      %v2309 = vadd.f32 %v2170, %v2255
      %v2310 = vmul.f32 %v2308, 0.5
      %v2311 = vmul.f32 %v2309, 0.5
      %v2312 = vtanh.pop %v2310
      %v2313 = vtanh.pop %v2311
      %v2314 = vadd.f32 %v2312, 1.0
      %v2315 = vadd.f32 %v2313, 1.0
      %v2316 = vmul.f32 %v2314, 0.5
      %v2317 = vmul.f32 %v2315, 0.5
      %v2318 = vmul.f32 %v2306, %v2292
      %v2319 = vmul.f32 %v2307, %v2295
      %v2320 = vadd.f32 %v2207, %v2318
      %v2321 = vadd.f32 %v2210, %v2319
      %v2322 = vtanh.pop %v2320
      %v2323 = vtanh.pop %v2321
      %v2324 = vsub.f32 1.0, %v2316
      %v2325 = vsub.f32 1.0, %v2317
      %v2326 = vmul.f32 %v2324, %v2322
      %v2327 = vmul.f32 %v2325, %v2323
      %v2328 = vmul.f32 %v2316, %v1987
      %v2329 = vmul.f32 %v2317, %v1988
      %v2330 = vadd.f32 %v2326, %v2328
      %v2331 = vadd.f32 %v2327, %v2329
      %vm2332 = vcmp.gt.s32.totalorder %v356, 1
      %vm2333 = vcmp.gt.s32.totalorder %v369, 1
      %v2334 = vsel %vm2332, 1, 0
      %v2335 = vsel %vm2333, 1, 0
      %vm2336 = vcmp.eq.s32.totalorder %v2334, 1
      %vm2337 = vcmp.eq.s32.totalorder %v2335, 1
      %v2338 = vsel %vm2336, %v2330, 0.0
      %v2339 = vsel %vm2337, %v2331, 0.0
      %v2340 = vadd.f32 %v1997, %v2338
      %v2341 = vadd.f32 %v1998, %v2339
      %s2342 = scalar_lea.vmem [#allocation2], 48
      %v2343 = vld [vmem:[%s2342] sm:$0xff]
      %v2344 = vld [vmem:[%s2342 + $0x8] sm:$0xf]
      %v2345 = vld [vmem:[%s2342 + $0xc] sm:$0xff]
      %v2346 = vld [vmem:[%s2342 + $0x14] sm:$0xf]
      %v2347 = vunpack.c.l.bf16 %v2343
      %v2348 = vunpack.c.h.bf16 %v2343
      %v2349 = vunpack.c.l.bf16 %v2344
      %v2350 = vunpack.c.l.bf16 %v2345
      %v2351 = vunpack.c.h.bf16 %v2345
      %v2352 = vunpack.c.l.bf16 %v2346
      %2353 = vmatprep.subr.bf16.mxu0 %v1354
      %2354 = vmatpush1.bf16.msra.mxu0 %v1353
      %2355 = vmatprep.subr.bf16.mxu0 %v1351
      %2356 = vmatpush1.bf16.msra.mxu0 %v1350
      %2357 = vmatprep.subr.bf16.mxu0 %v1348
      %2358 = vmatpush1.bf16.msra.mxu0 %v1347
      %2359 = vmatprep.subr.bf16.mxu0 %v1345
      %2360 = vmatpush1.bf16.msra.mxu0 %v1344
      %2361 = vmatprep.subr.bf16.mxu0 %v1342
      %2362 = vmatpush1.bf16.msra.mxu0 %v1341
      %2363 = vmatprep.subr.bf16.mxu0 %v1339
      %2364 = vmatpush1.bf16.msra.mxu0 %v1338
      %2365 = vmatprep.subr.bf16.mxu0 %v1336
      %2366 = vmatpush1.bf16.msra.mxu0 %v1335
      %2367 = vmatprep.subr.bf16.mxu0 %v1333
      %2368 = vmatpush1.bf16.msra.mxu0 %v1332
      %2369 = vmatprep.subr.bf16.mxu0 0
      %2370 = vmatpush2.bf16.msra.mxu0 0
      %2371 = vmatprep.subr.bf16.mxu0 0
      %2372 = vmatpush2.bf16.msra.mxu0 0
      %2373 = vmatprep.subr.bf16.mxu0 0
      %2374 = vmatpush2.bf16.msra.mxu0 0
      %2375 = vmatprep.subr.bf16.mxu0 0
      %2376 = vmatpush2.bf16.msra.mxu0 0
      %2377 = vmatprep.subr.bf16.mxu0 0
      %2378 = vmatpush2.bf16.msra.mxu0 0
      %2379 = vmatprep.subr.bf16.mxu0 0
      %2380 = vmatpush2.bf16.msra.mxu0 0
      %2381 = vmatprep.subr.bf16.mxu0 0
      %2382 = vmatpush2.bf16.msra.mxu0 0
      %2383 = vmatprep.subr.bf16.mxu0 0
      %2384 = vmatpush2.bf16.msra.mxu0 0
      %2385 = vmatprep.mubr.bf16.mxu0 0
      %2386 = vmatmul.mubr.bf16.gmra.mxu0 %v2128
      %v2387 = vpop.f32.mrf.mxu0
      %v2388 = vadd.f32 %v1240, %v2387
      %v2389 = vpop.f32.mrf.mxu0
      %v2390 = vadd.f32 %v1244, %v2389
      %v2391 = vpop.f32.mrf.mxu0
      %v2392 = vadd.f32 %v1240, %v2391
      %v2393 = vpop.f32.mrf.mxu0
      %v2394 = vadd.f32 %v1244, %v2393
      %2395 = vdwg.mxu0
      %2396 = vmatprep.subr.bf16.mxu0 0
      %2397 = vmatpush1.bf16.msra.mxu0 %v1355
      %2398 = vmatprep.subr.bf16.mxu0 0
      %2399 = vmatpush1.bf16.msra.mxu0 %v1352
      %2400 = vmatprep.subr.bf16.mxu0 0
      %2401 = vmatpush1.bf16.msra.mxu0 %v1349
      %2402 = vmatprep.subr.bf16.mxu0 0
      %2403 = vmatpush1.bf16.msra.mxu0 %v1346
      %2404 = vmatprep.subr.bf16.mxu0 0
      %2405 = vmatpush1.bf16.msra.mxu0 %v1343
      %2406 = vmatprep.subr.bf16.mxu0 0
      %2407 = vmatpush1.bf16.msra.mxu0 %v1340
      %2408 = vmatprep.subr.bf16.mxu0 0
      %2409 = vmatpush1.bf16.msra.mxu0 %v1337
      %2410 = vmatprep.subr.bf16.mxu0 0
      %2411 = vmatpush1.bf16.msra.mxu0 %v1334
      %2412 = vmatprep.subr.bf16.mxu0 0
      %2413 = vmatpush2.bf16.msra.mxu0 0
      %2414 = vmatprep.subr.bf16.mxu0 0
      %2415 = vmatpush2.bf16.msra.mxu0 0
      %2416 = vmatprep.subr.bf16.mxu0 0
      %2417 = vmatpush2.bf16.msra.mxu0 0
      %2418 = vmatprep.subr.bf16.mxu0 0
      %2419 = vmatpush2.bf16.msra.mxu0 0
      %2420 = vmatprep.subr.bf16.mxu0 0
      %2421 = vmatpush2.bf16.msra.mxu0 0
      %2422 = vmatprep.subr.bf16.mxu0 0
      %2423 = vmatpush2.bf16.msra.mxu0 0
      %2424 = vmatprep.subr.bf16.mxu0 0
      %2425 = vmatpush2.bf16.msra.mxu0 0
      %2426 = vmatprep.subr.bf16.mxu0 0
      %2427 = vmatpush2.bf16.msra.mxu0 0
      %2428 = vmatprep.mubr.bf16.mxu0 0
      %2429 = vmatmul.mubr.bf16.gmra.mxu0 %v2128
      %v2430 = vpop.f32.mrf.mxu0
      %v2431 = vadd.f32 %v1248, %v2430
      %v2432 = vpop.f32.mrf.mxu0
      %v2433 = vpop.f32.mrf.mxu0
      %v2434 = vadd.f32 %v1248, %v2433
      %v2435 = vpop.f32.mrf.mxu0
      %2436 = vdwg.mxu0
      %v2437 = vadd.f32 %v2347, %v2388
      %v2438 = vadd.f32 %v2350, %v2392
      %v2439 = vmul.f32 %v2437, 0.5
      %v2440 = vmul.f32 %v2438, 0.5
      %v2441 = vtanh.pop %v2439
      %v2442 = vtanh.pop %v2440
      %v2443 = vadd.f32 %v2441, 1.0
      %v2444 = vadd.f32 %v2442, 1.0
      %v2445 = vmul.f32 %v2443, 0.5
      %v2446 = vmul.f32 %v2444, 0.5
      %v2447 = vadd.f32 %v2348, %v2390
      %v2448 = vadd.f32 %v2351, %v2394
      %v2449 = vmul.f32 %v2447, 0.5
      %v2450 = vmul.f32 %v2448, 0.5
      %v2451 = vtanh.pop %v2449
      %v2452 = vtanh.pop %v2450
      %v2453 = vadd.f32 %v2451, 1.0
      %v2454 = vadd.f32 %v2452, 1.0
      %v2455 = vmul.f32 %v2453, 0.5
      %v2456 = vmul.f32 %v2454, 0.5
      %v2457 = vmul.f32 %v2445, %v2431
      %v2458 = vmul.f32 %v2446, %v2434
      %v2459 = vadd.f32 %v2349, %v2457
      %v2460 = vadd.f32 %v2352, %v2458
      %v2461 = vtanh.pop %v2459
      %v2462 = vtanh.pop %v2460
      %v2463 = vsub.f32 1.0, %v2455
      %v2464 = vsub.f32 1.0, %v2456
      %v2465 = vmul.f32 %v2463, %v2461
      %v2466 = vmul.f32 %v2464, %v2462
      %v2467 = vmul.f32 %v2455, %v2126
      %v2468 = vmul.f32 %v2456, %v2127
      %v2469 = vadd.f32 %v2465, %v2467
      %v2470 = vadd.f32 %v2466, %v2468
      %v2471 = vpack.c.bf16 %v2470, %v2469
      %2472 = vmatprep.subr.bf16.mxu0 %v1617
      %2473 = vmatpush1.bf16.msra.mxu0 %v1616
      %2474 = vmatprep.subr.bf16.mxu0 %v1614
      %2475 = vmatpush1.bf16.msra.mxu0 %v1613
      %2476 = vmatprep.subr.bf16.mxu0 %v1611
      %2477 = vmatpush1.bf16.msra.mxu0 %v1610
      %2478 = vmatprep.subr.bf16.mxu0 %v1608
      %2479 = vmatpush1.bf16.msra.mxu0 %v1607
      %2480 = vmatprep.subr.bf16.mxu0 %v1605
      %2481 = vmatpush1.bf16.msra.mxu0 %v1604
      %2482 = vmatprep.subr.bf16.mxu0 %v1602
      %2483 = vmatpush1.bf16.msra.mxu0 %v1601
      %2484 = vmatprep.subr.bf16.mxu0 %v1599
      %2485 = vmatpush1.bf16.msra.mxu0 %v1598
      %2486 = vmatprep.subr.bf16.mxu0 %v1596
      %2487 = vmatpush1.bf16.msra.mxu0 %v1595
      %2488 = vmatprep.subr.bf16.mxu0 0
      %2489 = vmatpush2.bf16.msra.mxu0 0
      %2490 = vmatprep.subr.bf16.mxu0 0
      %2491 = vmatpush2.bf16.msra.mxu0 0
      %2492 = vmatprep.subr.bf16.mxu0 0
      %2493 = vmatpush2.bf16.msra.mxu0 0
      %2494 = vmatprep.subr.bf16.mxu0 0
      %2495 = vmatpush2.bf16.msra.mxu0 0
      %2496 = vmatprep.subr.bf16.mxu0 0
      %2497 = vmatpush2.bf16.msra.mxu0 0
      %2498 = vmatprep.subr.bf16.mxu0 0
      %2499 = vmatpush2.bf16.msra.mxu0 0
      %2500 = vmatprep.subr.bf16.mxu0 0
      %2501 = vmatpush2.bf16.msra.mxu0 0
      %2502 = vmatprep.subr.bf16.mxu0 0
      %2503 = vmatpush2.bf16.msra.mxu0 0
      %2504 = vmatprep.mubr.bf16.mxu0 0
      %2505 = vmatmul.mubr.bf16.gmra.mxu0 %v2471
      %v2506 = vpop.f32.mrf.mxu0
      %v2507 = vadd.f32 %v1503, %v2506
      %v2508 = vpop.f32.mrf.mxu0
      %v2509 = vadd.f32 %v1507, %v2508
      %v2510 = vpop.f32.mrf.mxu0
      %v2511 = vadd.f32 %v1503, %v2510
      %v2512 = vpop.f32.mrf.mxu0
      %v2513 = vadd.f32 %v1507, %v2512
      %2514 = vdwg.mxu0
      %2515 = vmatprep.subr.bf16.mxu0 0
      %2516 = vmatpush1.bf16.msra.mxu0 %v1618
      %2517 = vmatprep.subr.bf16.mxu0 0
      %2518 = vmatpush1.bf16.msra.mxu0 %v1615
      %2519 = vmatprep.subr.bf16.mxu0 0
      %2520 = vmatpush1.bf16.msra.mxu0 %v1612
      %2521 = vmatprep.subr.bf16.mxu0 0
      %2522 = vmatpush1.bf16.msra.mxu0 %v1609
      %2523 = vmatprep.subr.bf16.mxu0 0
      %2524 = vmatpush1.bf16.msra.mxu0 %v1606
      %2525 = vmatprep.subr.bf16.mxu0 0
      %2526 = vmatpush1.bf16.msra.mxu0 %v1603
      %2527 = vmatprep.subr.bf16.mxu0 0
      %2528 = vmatpush1.bf16.msra.mxu0 %v1600
      %2529 = vmatprep.subr.bf16.mxu0 0
      %2530 = vmatpush1.bf16.msra.mxu0 %v1597
      %2531 = vmatprep.subr.bf16.mxu0 0
      %2532 = vmatpush2.bf16.msra.mxu0 0
      %2533 = vmatprep.subr.bf16.mxu0 0
      %2534 = vmatpush2.bf16.msra.mxu0 0
      %2535 = vmatprep.subr.bf16.mxu0 0
      %2536 = vmatpush2.bf16.msra.mxu0 0
      %2537 = vmatprep.subr.bf16.mxu0 0
      %2538 = vmatpush2.bf16.msra.mxu0 0
      %2539 = vmatprep.subr.bf16.mxu0 0
      %2540 = vmatpush2.bf16.msra.mxu0 0
      %2541 = vmatprep.subr.bf16.mxu0 0
      %2542 = vmatpush2.bf16.msra.mxu0 0
      %2543 = vmatprep.subr.bf16.mxu0 0
      %2544 = vmatpush2.bf16.msra.mxu0 0
      %2545 = vmatprep.subr.bf16.mxu0 0
      %2546 = vmatpush2.bf16.msra.mxu0 0
      %2547 = vmatprep.mubr.bf16.mxu0 0
      %2548 = vmatmul.mubr.bf16.gmra.mxu0 %v2471
      %v2549 = vpop.f32.mrf.mxu0
      %v2550 = vadd.f32 %v1511, %v2549
      %v2551 = vpop.f32.mrf.mxu0
      %v2552 = vpop.f32.mrf.mxu0
      %v2553 = vadd.f32 %v1511, %v2552
      %v2554 = vpop.f32.mrf.mxu0
      %2555 = vdwg.mxu0
      %v2556 = vpack.c.bf16 %v2331, %v2330
      %2557 = vmatprep.subr.bf16.mxu0 %v1845
      %2558 = vmatpush1.bf16.msra.mxu0 %v1844
      %2559 = vmatprep.subr.bf16.mxu0 %v1842
      %2560 = vmatpush1.bf16.msra.mxu0 %v1841
      %2561 = vmatprep.subr.bf16.mxu0 %v1839
      %2562 = vmatpush1.bf16.msra.mxu0 %v1838
      %2563 = vmatprep.subr.bf16.mxu0 %v1836
      %2564 = vmatpush1.bf16.msra.mxu0 %v1835
      %2565 = vmatprep.subr.bf16.mxu0 %v1833
      %2566 = vmatpush1.bf16.msra.mxu0 %v1832
      %2567 = vmatprep.subr.bf16.mxu0 %v1830
      %2568 = vmatpush1.bf16.msra.mxu0 %v1829
      %2569 = vmatprep.subr.bf16.mxu0 %v1827
      %2570 = vmatpush1.bf16.msra.mxu0 %v1826
      %2571 = vmatprep.subr.bf16.mxu0 %v1824
      %2572 = vmatpush1.bf16.msra.mxu0 %v1823
      %2573 = vmatprep.subr.bf16.mxu0 0
      %2574 = vmatpush2.bf16.msra.mxu0 0
      %2575 = vmatprep.subr.bf16.mxu0 0
      %2576 = vmatpush2.bf16.msra.mxu0 0
      %2577 = vmatprep.subr.bf16.mxu0 0
      %2578 = vmatpush2.bf16.msra.mxu0 0
      %2579 = vmatprep.subr.bf16.mxu0 0
      %2580 = vmatpush2.bf16.msra.mxu0 0
      %2581 = vmatprep.subr.bf16.mxu0 0
      %2582 = vmatpush2.bf16.msra.mxu0 0
      %2583 = vmatprep.subr.bf16.mxu0 0
      %2584 = vmatpush2.bf16.msra.mxu0 0
      %2585 = vmatprep.subr.bf16.mxu0 0
      %2586 = vmatpush2.bf16.msra.mxu0 0
      %2587 = vmatprep.subr.bf16.mxu0 0
      %2588 = vmatpush2.bf16.msra.mxu0 0
      %2589 = vmatprep.mubr.bf16.mxu0 0
      %2590 = vmatmul.mubr.bf16.gmra.mxu0 %v2556
      %v2591 = vpop.f32.mrf.mxu0
      %v2592 = vadd.f32 %v1731, %v2591
      %v2593 = vpop.f32.mrf.mxu0
      %v2594 = vadd.f32 %v1735, %v2593
      %v2595 = vpop.f32.mrf.mxu0
      %v2596 = vadd.f32 %v1731, %v2595
      %v2597 = vpop.f32.mrf.mxu0
      %v2598 = vadd.f32 %v1735, %v2597
      %2599 = vdwg.mxu0
      %2600 = vmatprep.subr.bf16.mxu0 0
      %2601 = vmatpush1.bf16.msra.mxu0 %v1846
      %2602 = vmatprep.subr.bf16.mxu0 0
      %2603 = vmatpush1.bf16.msra.mxu0 %v1843
      %2604 = vmatprep.subr.bf16.mxu0 0
      %2605 = vmatpush1.bf16.msra.mxu0 %v1840
      %2606 = vmatprep.subr.bf16.mxu0 0
      %2607 = vmatpush1.bf16.msra.mxu0 %v1837
      %2608 = vmatprep.subr.bf16.mxu0 0
      %2609 = vmatpush1.bf16.msra.mxu0 %v1834
      %2610 = vmatprep.subr.bf16.mxu0 0
      %2611 = vmatpush1.bf16.msra.mxu0 %v1831
      %2612 = vmatprep.subr.bf16.mxu0 0
      %2613 = vmatpush1.bf16.msra.mxu0 %v1828
      %2614 = vmatprep.subr.bf16.mxu0 0
      %2615 = vmatpush1.bf16.msra.mxu0 %v1825
      %2616 = vmatprep.subr.bf16.mxu0 0
      %2617 = vmatpush2.bf16.msra.mxu0 0
      %2618 = vmatprep.subr.bf16.mxu0 0
      %2619 = vmatpush2.bf16.msra.mxu0 0
      %2620 = vmatprep.subr.bf16.mxu0 0
      %2621 = vmatpush2.bf16.msra.mxu0 0
      %2622 = vmatprep.subr.bf16.mxu0 0
      %2623 = vmatpush2.bf16.msra.mxu0 0
      %2624 = vmatprep.subr.bf16.mxu0 0
      %2625 = vmatpush2.bf16.msra.mxu0 0
      %2626 = vmatprep.subr.bf16.mxu0 0
      %2627 = vmatpush2.bf16.msra.mxu0 0
      %2628 = vmatprep.subr.bf16.mxu0 0
      %2629 = vmatpush2.bf16.msra.mxu0 0
      %2630 = vmatprep.subr.bf16.mxu0 0
      %2631 = vmatpush2.bf16.msra.mxu0 0
      %2632 = vmatprep.mubr.bf16.mxu0 0
      %2633 = vmatmul.mubr.bf16.gmra.mxu0 %v2556
      %v2634 = vpop.f32.mrf.mxu0
      %v2635 = vadd.f32 %v1739, %v2634
      %v2636 = vpop.f32.mrf.mxu0
      %v2637 = vpop.f32.mrf.mxu0
      %v2638 = vadd.f32 %v1739, %v2637
      %v2639 = vpop.f32.mrf.mxu0
      %2640 = vdwg.mxu0
      %v2641 = vadd.f32 %v2507, %v2592
      %v2642 = vadd.f32 %v2511, %v2596
      %v2643 = vmul.f32 %v2641, 0.5
      %v2644 = vmul.f32 %v2642, 0.5
      %v2645 = vtanh.pop %v2643
      %v2646 = vtanh.pop %v2644
      %v2647 = vadd.f32 %v2645, 1.0
      %v2648 = vadd.f32 %v2646, 1.0
      %v2649 = vmul.f32 %v2647, 0.5
      %v2650 = vmul.f32 %v2648, 0.5
      %v2651 = vadd.f32 %v2509, %v2594
      %v2652 = vadd.f32 %v2513, %v2598
      %v2653 = vmul.f32 %v2651, 0.5
      %v2654 = vmul.f32 %v2652, 0.5
      %v2655 = vtanh.pop %v2653
      %v2656 = vtanh.pop %v2654
      %v2657 = vadd.f32 %v2655, 1.0
      %v2658 = vadd.f32 %v2656, 1.0
      %v2659 = vmul.f32 %v2657, 0.5
      %v2660 = vmul.f32 %v2658, 0.5
      %v2661 = vmul.f32 %v2649, %v2635
      %v2662 = vmul.f32 %v2650, %v2638
      %v2663 = vadd.f32 %v2550, %v2661
      %v2664 = vadd.f32 %v2553, %v2662
      %v2665 = vtanh.pop %v2663
      %v2666 = vtanh.pop %v2664
      %v2667 = vsub.f32 1.0, %v2659
      %v2668 = vsub.f32 1.0, %v2660
      %v2669 = vmul.f32 %v2667, %v2665
      %v2670 = vmul.f32 %v2668, %v2666
      %v2671 = vmul.f32 %v2659, %v2330
      %v2672 = vmul.f32 %v2660, %v2331
      %v2673 = vadd.f32 %v2669, %v2671
      %v2674 = vadd.f32 %v2670, %v2672
      %vm2675 = vcmp.gt.s32.totalorder %v356, 2
      %vm2676 = vcmp.gt.s32.totalorder %v369, 2
      %v2677 = vsel %vm2675, 1, 0
      %v2678 = vsel %vm2676, 1, 0
      %vm2679 = vcmp.eq.s32.totalorder %v2677, 1
      %vm2680 = vcmp.eq.s32.totalorder %v2678, 1
      %v2681 = vsel %vm2679, %v2673, 0.0
      %v2682 = vsel %vm2680, %v2674, 0.0
      %v2683 = vadd.f32 %v2340, %v2681
      %v2684 = vadd.f32 %v2341, %v2682
      %s2685 = scalar_lea.vmem [#allocation2], 72
      %v2686 = vld [vmem:[%s2685] sm:$0xff]
      %v2687 = vld [vmem:[%s2685 + $0x8] sm:$0xf]
      %v2688 = vld [vmem:[%s2685 + $0xc] sm:$0xff]
      %v2689 = vld [vmem:[%s2685 + $0x14] sm:$0xf]
      %v2690 = vunpack.c.l.bf16 %v2686
      %v2691 = vunpack.c.h.bf16 %v2686
      %v2692 = vunpack.c.l.bf16 %v2687
      %v2693 = vunpack.c.l.bf16 %v2688
      %v2694 = vunpack.c.h.bf16 %v2688
      %v2695 = vunpack.c.l.bf16 %v2689
      %2696 = vmatprep.subr.bf16.mxu0 %v1354
      %2697 = vmatpush1.bf16.msra.mxu0 %v1353
      %2698 = vmatprep.subr.bf16.mxu0 %v1351
      %2699 = vmatpush1.bf16.msra.mxu0 %v1350
      %2700 = vmatprep.subr.bf16.mxu0 %v1348
      %2701 = vmatpush1.bf16.msra.mxu0 %v1347
      %2702 = vmatprep.subr.bf16.mxu0 %v1345
      %2703 = vmatpush1.bf16.msra.mxu0 %v1344
      %2704 = vmatprep.subr.bf16.mxu0 %v1342
      %2705 = vmatpush1.bf16.msra.mxu0 %v1341
      %2706 = vmatprep.subr.bf16.mxu0 %v1339
      %2707 = vmatpush1.bf16.msra.mxu0 %v1338
      %2708 = vmatprep.subr.bf16.mxu0 %v1336
      %2709 = vmatpush1.bf16.msra.mxu0 %v1335
      %2710 = vmatprep.subr.bf16.mxu0 %v1333
      %2711 = vmatpush1.bf16.msra.mxu0 %v1332
      %2712 = vmatprep.subr.bf16.mxu0 0
      %2713 = vmatpush2.bf16.msra.mxu0 0
      %2714 = vmatprep.subr.bf16.mxu0 0
      %2715 = vmatpush2.bf16.msra.mxu0 0
      %2716 = vmatprep.subr.bf16.mxu0 0
      %2717 = vmatpush2.bf16.msra.mxu0 0
      %2718 = vmatprep.subr.bf16.mxu0 0
      %2719 = vmatpush2.bf16.msra.mxu0 0
      %2720 = vmatprep.subr.bf16.mxu0 0
      %2721 = vmatpush2.bf16.msra.mxu0 0
      %2722 = vmatprep.subr.bf16.mxu0 0
      %2723 = vmatpush2.bf16.msra.mxu0 0
      %2724 = vmatprep.subr.bf16.mxu0 0
      %2725 = vmatpush2.bf16.msra.mxu0 0
      %2726 = vmatprep.subr.bf16.mxu0 0
      %2727 = vmatpush2.bf16.msra.mxu0 0
      %2728 = vmatprep.mubr.bf16.mxu0 0
      %2729 = vmatmul.mubr.bf16.gmra.mxu0 %v2471
      %v2730 = vpop.f32.mrf.mxu0
      %v2731 = vadd.f32 %v1240, %v2730
      %v2732 = vpop.f32.mrf.mxu0
      %v2733 = vadd.f32 %v1244, %v2732
      %v2734 = vpop.f32.mrf.mxu0
      %v2735 = vadd.f32 %v1240, %v2734
      %v2736 = vpop.f32.mrf.mxu0
      %v2737 = vadd.f32 %v1244, %v2736
      %2738 = vdwg.mxu0
      %2739 = vmatprep.subr.bf16.mxu0 0
      %2740 = vmatpush1.bf16.msra.mxu0 %v1355
      %2741 = vmatprep.subr.bf16.mxu0 0
      %2742 = vmatpush1.bf16.msra.mxu0 %v1352
      %2743 = vmatprep.subr.bf16.mxu0 0
      %2744 = vmatpush1.bf16.msra.mxu0 %v1349
      %2745 = vmatprep.subr.bf16.mxu0 0
      %2746 = vmatpush1.bf16.msra.mxu0 %v1346
      %2747 = vmatprep.subr.bf16.mxu0 0
      %2748 = vmatpush1.bf16.msra.mxu0 %v1343
      %2749 = vmatprep.subr.bf16.mxu0 0
      %2750 = vmatpush1.bf16.msra.mxu0 %v1340
      %2751 = vmatprep.subr.bf16.mxu0 0
      %2752 = vmatpush1.bf16.msra.mxu0 %v1337
      %2753 = vmatprep.subr.bf16.mxu0 0
      %2754 = vmatpush1.bf16.msra.mxu0 %v1334
      %2755 = vmatprep.subr.bf16.mxu0 0
      %2756 = vmatpush2.bf16.msra.mxu0 0
      %2757 = vmatprep.subr.bf16.mxu0 0
      %2758 = vmatpush2.bf16.msra.mxu0 0
      %2759 = vmatprep.subr.bf16.mxu0 0
      %2760 = vmatpush2.bf16.msra.mxu0 0
      %2761 = vmatprep.subr.bf16.mxu0 0
      %2762 = vmatpush2.bf16.msra.mxu0 0
      %2763 = vmatprep.subr.bf16.mxu0 0
      %2764 = vmatpush2.bf16.msra.mxu0 0
      %2765 = vmatprep.subr.bf16.mxu0 0
      %2766 = vmatpush2.bf16.msra.mxu0 0
      %2767 = vmatprep.subr.bf16.mxu0 0
      %2768 = vmatpush2.bf16.msra.mxu0 0
      %2769 = vmatprep.subr.bf16.mxu0 0
      %2770 = vmatpush2.bf16.msra.mxu0 0
      %2771 = vmatprep.mubr.bf16.mxu0 0
      %2772 = vmatmul.mubr.bf16.gmra.mxu0 %v2471
      %v2773 = vpop.f32.mrf.mxu0
      %v2774 = vadd.f32 %v1248, %v2773
      %v2775 = vpop.f32.mrf.mxu0
      %v2776 = vpop.f32.mrf.mxu0
      %v2777 = vadd.f32 %v1248, %v2776
      %v2778 = vpop.f32.mrf.mxu0
      %2779 = vdwg.mxu0
      %v2780 = vadd.f32 %v2690, %v2731
      %v2781 = vadd.f32 %v2693, %v2735
      %v2782 = vmul.f32 %v2780, 0.5
      %v2783 = vmul.f32 %v2781, 0.5
      %v2784 = vtanh.pop %v2782
      %v2785 = vtanh.pop %v2783
      %v2786 = vadd.f32 %v2784, 1.0
      %v2787 = vadd.f32 %v2785, 1.0
      %v2788 = vmul.f32 %v2786, 0.5
      %v2789 = vmul.f32 %v2787, 0.5
      %v2790 = vadd.f32 %v2691, %v2733
      %v2791 = vadd.f32 %v2694, %v2737
      %v2792 = vmul.f32 %v2790, 0.5
      %v2793 = vmul.f32 %v2791, 0.5
      %v2794 = vtanh.pop %v2792
      %v2795 = vtanh.pop %v2793
      %v2796 = vadd.f32 %v2794, 1.0
      %v2797 = vadd.f32 %v2795, 1.0
      %v2798 = vmul.f32 %v2796, 0.5
      %v2799 = vmul.f32 %v2797, 0.5
      %v2800 = vmul.f32 %v2788, %v2774
      %v2801 = vmul.f32 %v2789, %v2777
      %v2802 = vadd.f32 %v2692, %v2800
      %v2803 = vadd.f32 %v2695, %v2801
      %v2804 = vtanh.pop %v2802
      %v2805 = vtanh.pop %v2803
      %v2806 = vsub.f32 1.0, %v2798
      %v2807 = vsub.f32 1.0, %v2799
      %v2808 = vmul.f32 %v2806, %v2804
      %v2809 = vmul.f32 %v2807, %v2805
      %v2810 = vmul.f32 %v2798, %v2469
      %v2811 = vmul.f32 %v2799, %v2470
      %v2812 = vadd.f32 %v2808, %v2810
      %v2813 = vadd.f32 %v2809, %v2811
      %v2814 = vpack.c.bf16 %v2813, %v2812
      %2815 = vmatprep.subr.bf16.mxu0 %v1617
      %2816 = vmatpush1.bf16.msra.mxu0 %v1616
      %2817 = vmatprep.subr.bf16.mxu0 %v1614
      %2818 = vmatpush1.bf16.msra.mxu0 %v1613
      %2819 = vmatprep.subr.bf16.mxu0 %v1611
      %2820 = vmatpush1.bf16.msra.mxu0 %v1610
      %2821 = vmatprep.subr.bf16.mxu0 %v1608
      %2822 = vmatpush1.bf16.msra.mxu0 %v1607
      %2823 = vmatprep.subr.bf16.mxu0 %v1605
      %2824 = vmatpush1.bf16.msra.mxu0 %v1604
      %2825 = vmatprep.subr.bf16.mxu0 %v1602
      %2826 = vmatpush1.bf16.msra.mxu0 %v1601
      %2827 = vmatprep.subr.bf16.mxu0 %v1599
      %2828 = vmatpush1.bf16.msra.mxu0 %v1598
      %2829 = vmatprep.subr.bf16.mxu0 %v1596
      %2830 = vmatpush1.bf16.msra.mxu0 %v1595
      %2831 = vmatprep.subr.bf16.mxu0 0
      %2832 = vmatpush2.bf16.msra.mxu0 0
      %2833 = vmatprep.subr.bf16.mxu0 0
      %2834 = vmatpush2.bf16.msra.mxu0 0
      %2835 = vmatprep.subr.bf16.mxu0 0
      %2836 = vmatpush2.bf16.msra.mxu0 0
      %2837 = vmatprep.subr.bf16.mxu0 0
      %2838 = vmatpush2.bf16.msra.mxu0 0
      %2839 = vmatprep.subr.bf16.mxu0 0
      %2840 = vmatpush2.bf16.msra.mxu0 0
      %2841 = vmatprep.subr.bf16.mxu0 0
      %2842 = vmatpush2.bf16.msra.mxu0 0
      %2843 = vmatprep.subr.bf16.mxu0 0
      %2844 = vmatpush2.bf16.msra.mxu0 0
      %2845 = vmatprep.subr.bf16.mxu0 0
      %2846 = vmatpush2.bf16.msra.mxu0 0
      %2847 = vmatprep.mubr.bf16.mxu0 0
      %2848 = vmatmul.mubr.bf16.gmra.mxu0 %v2814
      %v2849 = vpop.f32.mrf.mxu0
      %v2850 = vadd.f32 %v1503, %v2849
      %v2851 = vpop.f32.mrf.mxu0
      %v2852 = vadd.f32 %v1507, %v2851
      %v2853 = vpop.f32.mrf.mxu0
      %v2854 = vadd.f32 %v1503, %v2853
      %v2855 = vpop.f32.mrf.mxu0
      %v2856 = vadd.f32 %v1507, %v2855
      %2857 = vdwg.mxu0
      %2858 = vmatprep.subr.bf16.mxu0 0
      %2859 = vmatpush1.bf16.msra.mxu0 %v1618
      %2860 = vmatprep.subr.bf16.mxu0 0
      %2861 = vmatpush1.bf16.msra.mxu0 %v1615
      %2862 = vmatprep.subr.bf16.mxu0 0
      %2863 = vmatpush1.bf16.msra.mxu0 %v1612
      %2864 = vmatprep.subr.bf16.mxu0 0
      %2865 = vmatpush1.bf16.msra.mxu0 %v1609
      %2866 = vmatprep.subr.bf16.mxu0 0
      %2867 = vmatpush1.bf16.msra.mxu0 %v1606
      %2868 = vmatprep.subr.bf16.mxu0 0
      %2869 = vmatpush1.bf16.msra.mxu0 %v1603
      %2870 = vmatprep.subr.bf16.mxu0 0
      %2871 = vmatpush1.bf16.msra.mxu0 %v1600
      %2872 = vmatprep.subr.bf16.mxu0 0
      %2873 = vmatpush1.bf16.msra.mxu0 %v1597
      %2874 = vmatprep.subr.bf16.mxu0 0
      %2875 = vmatpush2.bf16.msra.mxu0 0
      %2876 = vmatprep.subr.bf16.mxu0 0
      %2877 = vmatpush2.bf16.msra.mxu0 0
      %2878 = vmatprep.subr.bf16.mxu0 0
      %2879 = vmatpush2.bf16.msra.mxu0 0
      %2880 = vmatprep.subr.bf16.mxu0 0
      %2881 = vmatpush2.bf16.msra.mxu0 0
      %2882 = vmatprep.subr.bf16.mxu0 0
      %2883 = vmatpush2.bf16.msra.mxu0 0
      %2884 = vmatprep.subr.bf16.mxu0 0
      %2885 = vmatpush2.bf16.msra.mxu0 0
      %2886 = vmatprep.subr.bf16.mxu0 0
      %2887 = vmatpush2.bf16.msra.mxu0 0
      %2888 = vmatprep.subr.bf16.mxu0 0
      %2889 = vmatpush2.bf16.msra.mxu0 0
      %2890 = vmatprep.mubr.bf16.mxu0 0
      %2891 = vmatmul.mubr.bf16.gmra.mxu0 %v2814
      %v2892 = vpop.f32.mrf.mxu0
      %v2893 = vadd.f32 %v1511, %v2892
      %v2894 = vpop.f32.mrf.mxu0
      %v2895 = vpop.f32.mrf.mxu0
      %v2896 = vadd.f32 %v1511, %v2895
      %v2897 = vpop.f32.mrf.mxu0
      %2898 = vdwg.mxu0
      %v2899 = vpack.c.bf16 %v2674, %v2673
      %2900 = vmatprep.subr.bf16.mxu0 %v1845
      %2901 = vmatpush1.bf16.msra.mxu0 %v1844
      %2902 = vmatprep.subr.bf16.mxu0 %v1842
      %2903 = vmatpush1.bf16.msra.mxu0 %v1841
      %2904 = vmatprep.subr.bf16.mxu0 %v1839
      %2905 = vmatpush1.bf16.msra.mxu0 %v1838
      %2906 = vmatprep.subr.bf16.mxu0 %v1836
      %2907 = vmatpush1.bf16.msra.mxu0 %v1835
      %2908 = vmatprep.subr.bf16.mxu0 %v1833
      %2909 = vmatpush1.bf16.msra.mxu0 %v1832
      %2910 = vmatprep.subr.bf16.mxu0 %v1830
      %2911 = vmatpush1.bf16.msra.mxu0 %v1829
      %2912 = vmatprep.subr.bf16.mxu0 %v1827
      %2913 = vmatpush1.bf16.msra.mxu0 %v1826
      %2914 = vmatprep.subr.bf16.mxu0 %v1824
      %2915 = vmatpush1.bf16.msra.mxu0 %v1823
      %2916 = vmatprep.subr.bf16.mxu0 0
      %2917 = vmatpush2.bf16.msra.mxu0 0
      %2918 = vmatprep.subr.bf16.mxu0 0
      %2919 = vmatpush2.bf16.msra.mxu0 0
      %2920 = vmatprep.subr.bf16.mxu0 0
      %2921 = vmatpush2.bf16.msra.mxu0 0
      %2922 = vmatprep.subr.bf16.mxu0 0
      %2923 = vmatpush2.bf16.msra.mxu0 0
      %2924 = vmatprep.subr.bf16.mxu0 0
      %2925 = vmatpush2.bf16.msra.mxu0 0
      %2926 = vmatprep.subr.bf16.mxu0 0
      %2927 = vmatpush2.bf16.msra.mxu0 0
      %2928 = vmatprep.subr.bf16.mxu0 0
      %2929 = vmatpush2.bf16.msra.mxu0 0
      %2930 = vmatprep.subr.bf16.mxu0 0
      %2931 = vmatpush2.bf16.msra.mxu0 0
      %2932 = vmatprep.mubr.bf16.mxu0 0
      %2933 = vmatmul.mubr.bf16.gmra.mxu0 %v2899
      %v2934 = vpop.f32.mrf.mxu0
      %v2935 = vadd.f32 %v1731, %v2934
      %v2936 = vpop.f32.mrf.mxu0
      %v2937 = vadd.f32 %v1735, %v2936
      %v2938 = vpop.f32.mrf.mxu0
      %v2939 = vadd.f32 %v1731, %v2938
      %v2940 = vpop.f32.mrf.mxu0
      %v2941 = vadd.f32 %v1735, %v2940
      %2942 = vdwg.mxu0
      %2943 = vmatprep.subr.bf16.mxu0 0
      %2944 = vmatpush1.bf16.msra.mxu0 %v1846
      %2945 = vmatprep.subr.bf16.mxu0 0
      %2946 = vmatpush1.bf16.msra.mxu0 %v1843
      %2947 = vmatprep.subr.bf16.mxu0 0
      %2948 = vmatpush1.bf16.msra.mxu0 %v1840
      %2949 = vmatprep.subr.bf16.mxu0 0
      %2950 = vmatpush1.bf16.msra.mxu0 %v1837
      %2951 = vmatprep.subr.bf16.mxu0 0
      %2952 = vmatpush1.bf16.msra.mxu0 %v1834
      %2953 = vmatprep.subr.bf16.mxu0 0
      %2954 = vmatpush1.bf16.msra.mxu0 %v1831
      %2955 = vmatprep.subr.bf16.mxu0 0
      %2956 = vmatpush1.bf16.msra.mxu0 %v1828
      %2957 = vmatprep.subr.bf16.mxu0 0
      %2958 = vmatpush1.bf16.msra.mxu0 %v1825
      %2959 = vmatprep.subr.bf16.mxu0 0
      %2960 = vmatpush2.bf16.msra.mxu0 0
      %2961 = vmatprep.subr.bf16.mxu0 0
      %2962 = vmatpush2.bf16.msra.mxu0 0
      %2963 = vmatprep.subr.bf16.mxu0 0
      %2964 = vmatpush2.bf16.msra.mxu0 0
      %2965 = vmatprep.subr.bf16.mxu0 0
      %2966 = vmatpush2.bf16.msra.mxu0 0
      %2967 = vmatprep.subr.bf16.mxu0 0
      %2968 = vmatpush2.bf16.msra.mxu0 0
      %2969 = vmatprep.subr.bf16.mxu0 0
      %2970 = vmatpush2.bf16.msra.mxu0 0
      %2971 = vmatprep.subr.bf16.mxu0 0
      %2972 = vmatpush2.bf16.msra.mxu0 0
      %2973 = vmatprep.subr.bf16.mxu0 0
      %2974 = vmatpush2.bf16.msra.mxu0 0
      %2975 = vmatprep.mubr.bf16.mxu0 0
      %2976 = vmatmul.mubr.bf16.gmra.mxu0 %v2899
      %v2977 = vpop.f32.mrf.mxu0
      %v2978 = vadd.f32 %v1739, %v2977
      %v2979 = vpop.f32.mrf.mxu0
      %v2980 = vpop.f32.mrf.mxu0
      %v2981 = vadd.f32 %v1739, %v2980
      %v2982 = vpop.f32.mrf.mxu0
      %2983 = vdwg.mxu0
      %v2984 = vadd.f32 %v2850, %v2935
      %v2985 = vadd.f32 %v2854, %v2939
      %v2986 = vmul.f32 %v2984, 0.5
      %v2987 = vmul.f32 %v2985, 0.5
      %v2988 = vtanh.pop %v2986
      %v2989 = vtanh.pop %v2987
      %v2990 = vadd.f32 %v2988, 1.0
      %v2991 = vadd.f32 %v2989, 1.0
      %v2992 = vmul.f32 %v2990, 0.5
      %v2993 = vmul.f32 %v2991, 0.5
      %v2994 = vadd.f32 %v2852, %v2937
      %v2995 = vadd.f32 %v2856, %v2941
      %v2996 = vmul.f32 %v2994, 0.5
      %v2997 = vmul.f32 %v2995, 0.5
      %v2998 = vtanh.pop %v2996
      %v2999 = vtanh.pop %v2997
      %v3000 = vadd.f32 %v2998, 1.0
      %v3001 = vadd.f32 %v2999, 1.0
      %v3002 = vmul.f32 %v3000, 0.5
      %v3003 = vmul.f32 %v3001, 0.5
      %v3004 = vmul.f32 %v2992, %v2978
      %v3005 = vmul.f32 %v2993, %v2981
      %v3006 = vadd.f32 %v2893, %v3004
      %v3007 = vadd.f32 %v2896, %v3005
      %v3008 = vtanh.pop %v3006
      %v3009 = vtanh.pop %v3007
      %v3010 = vsub.f32 1.0, %v3002
      %v3011 = vsub.f32 1.0, %v3003
      %v3012 = vmul.f32 %v3010, %v3008
      %v3013 = vmul.f32 %v3011, %v3009
      %v3014 = vmul.f32 %v3002, %v2673
      %v3015 = vmul.f32 %v3003, %v2674
      %v3016 = vadd.f32 %v3012, %v3014
      %v3017 = vadd.f32 %v3013, %v3015
      %vm3018 = vcmp.gt.s32.totalorder %v356, 3
      %vm3019 = vcmp.gt.s32.totalorder %v369, 3
      %v3020 = vsel %vm3018, 1, 0
      %v3021 = vsel %vm3019, 1, 0
      %vm3022 = vcmp.eq.s32.totalorder %v3020, 1
      %vm3023 = vcmp.eq.s32.totalorder %v3021, 1
      %v3024 = vsel %vm3022, %v3016, 0.0
      %v3025 = vsel %vm3023, %v3017, 0.0
      %v3026 = vadd.f32 %v2683, %v3024
      %v3027 = vadd.f32 %v2684, %v3025
      %s3028 = scalar_lea.vmem [#allocation2], 96
      %v3029 = vld [vmem:[%s3028] sm:$0xff]
      %v3030 = vld [vmem:[%s3028 + $0x8] sm:$0xf]
      %v3031 = vld [vmem:[%s3028 + $0xc] sm:$0xff]
      %v3032 = vld [vmem:[%s3028 + $0x14] sm:$0xf]
      %v3033 = vunpack.c.l.bf16 %v3029
      %v3034 = vunpack.c.h.bf16 %v3029
      %v3035 = vunpack.c.l.bf16 %v3030
      %v3036 = vunpack.c.l.bf16 %v3031
      %v3037 = vunpack.c.h.bf16 %v3031
      %v3038 = vunpack.c.l.bf16 %v3032
      %3039 = vmatprep.subr.bf16.mxu0 %v1354
      %3040 = vmatpush1.bf16.msra.mxu0 %v1353
      %3041 = vmatprep.subr.bf16.mxu0 %v1351
      %3042 = vmatpush1.bf16.msra.mxu0 %v1350
      %3043 = vmatprep.subr.bf16.mxu0 %v1348
      %3044 = vmatpush1.bf16.msra.mxu0 %v1347
      %3045 = vmatprep.subr.bf16.mxu0 %v1345
      %3046 = vmatpush1.bf16.msra.mxu0 %v1344
      %3047 = vmatprep.subr.bf16.mxu0 %v1342
      %3048 = vmatpush1.bf16.msra.mxu0 %v1341
      %3049 = vmatprep.subr.bf16.mxu0 %v1339
      %3050 = vmatpush1.bf16.msra.mxu0 %v1338
      %3051 = vmatprep.subr.bf16.mxu0 %v1336
      %3052 = vmatpush1.bf16.msra.mxu0 %v1335
      %3053 = vmatprep.subr.bf16.mxu0 %v1333
      %3054 = vmatpush1.bf16.msra.mxu0 %v1332
      %3055 = vmatprep.subr.bf16.mxu0 0
      %3056 = vmatpush2.bf16.msra.mxu0 0
      %3057 = vmatprep.subr.bf16.mxu0 0
      %3058 = vmatpush2.bf16.msra.mxu0 0
      %3059 = vmatprep.subr.bf16.mxu0 0
      %3060 = vmatpush2.bf16.msra.mxu0 0
      %3061 = vmatprep.subr.bf16.mxu0 0
      %3062 = vmatpush2.bf16.msra.mxu0 0
      %3063 = vmatprep.subr.bf16.mxu0 0
      %3064 = vmatpush2.bf16.msra.mxu0 0
      %3065 = vmatprep.subr.bf16.mxu0 0
      %3066 = vmatpush2.bf16.msra.mxu0 0
      %3067 = vmatprep.subr.bf16.mxu0 0
      %3068 = vmatpush2.bf16.msra.mxu0 0
      %3069 = vmatprep.subr.bf16.mxu0 0
      %3070 = vmatpush2.bf16.msra.mxu0 0
      %3071 = vmatprep.mubr.bf16.mxu0 0
      %3072 = vmatmul.mubr.bf16.gmra.mxu0 %v2814
      %v3073 = vpop.f32.mrf.mxu0
      %v3074 = vadd.f32 %v1240, %v3073
      %v3075 = vpop.f32.mrf.mxu0
      %v3076 = vadd.f32 %v1244, %v3075
      %v3077 = vpop.f32.mrf.mxu0
      %v3078 = vadd.f32 %v1240, %v3077
      %v3079 = vpop.f32.mrf.mxu0
      %v3080 = vadd.f32 %v1244, %v3079
      %3081 = vdwg.mxu0
      %3082 = vmatprep.subr.bf16.mxu0 0
      %3083 = vmatpush1.bf16.msra.mxu0 %v1355
      %3084 = vmatprep.subr.bf16.mxu0 0
      %3085 = vmatpush1.bf16.msra.mxu0 %v1352
      %3086 = vmatprep.subr.bf16.mxu0 0
      %3087 = vmatpush1.bf16.msra.mxu0 %v1349
      %3088 = vmatprep.subr.bf16.mxu0 0
      %3089 = vmatpush1.bf16.msra.mxu0 %v1346
      %3090 = vmatprep.subr.bf16.mxu0 0
      %3091 = vmatpush1.bf16.msra.mxu0 %v1343
      %3092 = vmatprep.subr.bf16.mxu0 0
      %3093 = vmatpush1.bf16.msra.mxu0 %v1340
      %3094 = vmatprep.subr.bf16.mxu0 0
      %3095 = vmatpush1.bf16.msra.mxu0 %v1337
      %3096 = vmatprep.subr.bf16.mxu0 0
      %3097 = vmatpush1.bf16.msra.mxu0 %v1334
      %3098 = vmatprep.subr.bf16.mxu0 0
      %3099 = vmatpush2.bf16.msra.mxu0 0
      %3100 = vmatprep.subr.bf16.mxu0 0
      %3101 = vmatpush2.bf16.msra.mxu0 0
      %3102 = vmatprep.subr.bf16.mxu0 0
      %3103 = vmatpush2.bf16.msra.mxu0 0
      %3104 = vmatprep.subr.bf16.mxu0 0
      %3105 = vmatpush2.bf16.msra.mxu0 0
      %3106 = vmatprep.subr.bf16.mxu0 0
      %3107 = vmatpush2.bf16.msra.mxu0 0
      %3108 = vmatprep.subr.bf16.mxu0 0
      %3109 = vmatpush2.bf16.msra.mxu0 0
      %3110 = vmatprep.subr.bf16.mxu0 0
      %3111 = vmatpush2.bf16.msra.mxu0 0
      %3112 = vmatprep.subr.bf16.mxu0 0
      %3113 = vmatpush2.bf16.msra.mxu0 0
      %3114 = vmatprep.mubr.bf16.mxu0 0
      %3115 = vmatmul.mubr.bf16.gmra.mxu0 %v2814
      %v3116 = vpop.f32.mrf.mxu0
      %v3117 = vadd.f32 %v1248, %v3116
      %v3118 = vpop.f32.mrf.mxu0
      %v3119 = vpop.f32.mrf.mxu0
      %v3120 = vadd.f32 %v1248, %v3119
      %v3121 = vpop.f32.mrf.mxu0
      %3122 = vdwg.mxu0
      %v3123 = vadd.f32 %v3033, %v3074
      %v3124 = vadd.f32 %v3036, %v3078
      %v3125 = vmul.f32 %v3123, 0.5
      %v3126 = vmul.f32 %v3124, 0.5
      %v3127 = vtanh.pop %v3125
      %v3128 = vtanh.pop %v3126
      %v3129 = vadd.f32 %v3127, 1.0
      %v3130 = vadd.f32 %v3128, 1.0
      %v3131 = vmul.f32 %v3129, 0.5
      %v3132 = vmul.f32 %v3130, 0.5
      %v3133 = vadd.f32 %v3034, %v3076
      %v3134 = vadd.f32 %v3037, %v3080
      %v3135 = vmul.f32 %v3133, 0.5
      %v3136 = vmul.f32 %v3134, 0.5
      %v3137 = vtanh.pop %v3135
      %v3138 = vtanh.pop %v3136
      %v3139 = vadd.f32 %v3137, 1.0
      %v3140 = vadd.f32 %v3138, 1.0
      %v3141 = vmul.f32 %v3139, 0.5
      %v3142 = vmul.f32 %v3140, 0.5
      %v3143 = vmul.f32 %v3131, %v3117
      %v3144 = vmul.f32 %v3132, %v3120
      %v3145 = vadd.f32 %v3035, %v3143
      %v3146 = vadd.f32 %v3038, %v3144
      %v3147 = vtanh.pop %v3145
      %v3148 = vtanh.pop %v3146
      %v3149 = vsub.f32 1.0, %v3141
      %v3150 = vsub.f32 1.0, %v3142
      %v3151 = vmul.f32 %v3149, %v3147
      %v3152 = vmul.f32 %v3150, %v3148
      %v3153 = vmul.f32 %v3141, %v2812
      %v3154 = vmul.f32 %v3142, %v2813
      %v3155 = vadd.f32 %v3151, %v3153
      %v3156 = vadd.f32 %v3152, %v3154
      %v3157 = vpack.c.bf16 %v3156, %v3155
      %3158 = vmatprep.subr.bf16.mxu0 %v1617
      %3159 = vmatpush1.bf16.msra.mxu0 %v1616
      %3160 = vmatprep.subr.bf16.mxu0 %v1614
      %3161 = vmatpush1.bf16.msra.mxu0 %v1613
      %3162 = vmatprep.subr.bf16.mxu0 %v1611
      %3163 = vmatpush1.bf16.msra.mxu0 %v1610
      %3164 = vmatprep.subr.bf16.mxu0 %v1608
      %3165 = vmatpush1.bf16.msra.mxu0 %v1607
      %3166 = vmatprep.subr.bf16.mxu0 %v1605
      %3167 = vmatpush1.bf16.msra.mxu0 %v1604
      %3168 = vmatprep.subr.bf16.mxu0 %v1602
      %3169 = vmatpush1.bf16.msra.mxu0 %v1601
      %3170 = vmatprep.subr.bf16.mxu0 %v1599
      %3171 = vmatpush1.bf16.msra.mxu0 %v1598
      %3172 = vmatprep.subr.bf16.mxu0 %v1596
      %3173 = vmatpush1.bf16.msra.mxu0 %v1595
      %3174 = vmatprep.subr.bf16.mxu0 0
      %3175 = vmatpush2.bf16.msra.mxu0 0
      %3176 = vmatprep.subr.bf16.mxu0 0
      %3177 = vmatpush2.bf16.msra.mxu0 0
      %3178 = vmatprep.subr.bf16.mxu0 0
      %3179 = vmatpush2.bf16.msra.mxu0 0
      %3180 = vmatprep.subr.bf16.mxu0 0
      %3181 = vmatpush2.bf16.msra.mxu0 0
      %3182 = vmatprep.subr.bf16.mxu0 0
      %3183 = vmatpush2.bf16.msra.mxu0 0
      %3184 = vmatprep.subr.bf16.mxu0 0
      %3185 = vmatpush2.bf16.msra.mxu0 0
      %3186 = vmatprep.subr.bf16.mxu0 0
      %3187 = vmatpush2.bf16.msra.mxu0 0
      %3188 = vmatprep.subr.bf16.mxu0 0
      %3189 = vmatpush2.bf16.msra.mxu0 0
      %3190 = vmatprep.mubr.bf16.mxu0 0
      %3191 = vmatmul.mubr.bf16.gmra.mxu0 %v3157
      %v3192 = vpop.f32.mrf.mxu0
      %v3193 = vadd.f32 %v1503, %v3192
      %v3194 = vpop.f32.mrf.mxu0
      %v3195 = vadd.f32 %v1507, %v3194
      %v3196 = vpop.f32.mrf.mxu0
      %v3197 = vadd.f32 %v1503, %v3196
      %v3198 = vpop.f32.mrf.mxu0
      %v3199 = vadd.f32 %v1507, %v3198
      %3200 = vdwg.mxu0
      %3201 = vmatprep.subr.bf16.mxu0 0
      %3202 = vmatpush1.bf16.msra.mxu0 %v1618
      %3203 = vmatprep.subr.bf16.mxu0 0
      %3204 = vmatpush1.bf16.msra.mxu0 %v1615
      %3205 = vmatprep.subr.bf16.mxu0 0
      %3206 = vmatpush1.bf16.msra.mxu0 %v1612
      %3207 = vmatprep.subr.bf16.mxu0 0
      %3208 = vmatpush1.bf16.msra.mxu0 %v1609
      %3209 = vmatprep.subr.bf16.mxu0 0
      %3210 = vmatpush1.bf16.msra.mxu0 %v1606
      %3211 = vmatprep.subr.bf16.mxu0 0
      %3212 = vmatpush1.bf16.msra.mxu0 %v1603
      %3213 = vmatprep.subr.bf16.mxu0 0
      %3214 = vmatpush1.bf16.msra.mxu0 %v1600
      %3215 = vmatprep.subr.bf16.mxu0 0
      %3216 = vmatpush1.bf16.msra.mxu0 %v1597
      %3217 = vmatprep.subr.bf16.mxu0 0
      %3218 = vmatpush2.bf16.msra.mxu0 0
      %3219 = vmatprep.subr.bf16.mxu0 0
      %3220 = vmatpush2.bf16.msra.mxu0 0
      %3221 = vmatprep.subr.bf16.mxu0 0
      %3222 = vmatpush2.bf16.msra.mxu0 0
      %3223 = vmatprep.subr.bf16.mxu0 0
      %3224 = vmatpush2.bf16.msra.mxu0 0
      %3225 = vmatprep.subr.bf16.mxu0 0
      %3226 = vmatpush2.bf16.msra.mxu0 0
      %3227 = vmatprep.subr.bf16.mxu0 0
      %3228 = vmatpush2.bf16.msra.mxu0 0
      %3229 = vmatprep.subr.bf16.mxu0 0
      %3230 = vmatpush2.bf16.msra.mxu0 0
      %3231 = vmatprep.subr.bf16.mxu0 0
      %3232 = vmatpush2.bf16.msra.mxu0 0
      %3233 = vmatprep.mubr.bf16.mxu0 0
      %3234 = vmatmul.mubr.bf16.gmra.mxu0 %v3157
      %v3235 = vpop.f32.mrf.mxu0
      %v3236 = vadd.f32 %v1511, %v3235
      %v3237 = vpop.f32.mrf.mxu0
      %v3238 = vpop.f32.mrf.mxu0
      %v3239 = vadd.f32 %v1511, %v3238
      %v3240 = vpop.f32.mrf.mxu0
      %3241 = vdwg.mxu0
      %v3242 = vpack.c.bf16 %v3017, %v3016
      %3243 = vmatprep.subr.bf16.mxu0 %v1845
      %3244 = vmatpush1.bf16.msra.mxu0 %v1844
      %3245 = vmatprep.subr.bf16.mxu0 %v1842
      %3246 = vmatpush1.bf16.msra.mxu0 %v1841
      %3247 = vmatprep.subr.bf16.mxu0 %v1839
      %3248 = vmatpush1.bf16.msra.mxu0 %v1838
      %3249 = vmatprep.subr.bf16.mxu0 %v1836
      %3250 = vmatpush1.bf16.msra.mxu0 %v1835
      %3251 = vmatprep.subr.bf16.mxu0 %v1833
      %3252 = vmatpush1.bf16.msra.mxu0 %v1832
      %3253 = vmatprep.subr.bf16.mxu0 %v1830
      %3254 = vmatpush1.bf16.msra.mxu0 %v1829
      %3255 = vmatprep.subr.bf16.mxu0 %v1827
      %3256 = vmatpush1.bf16.msra.mxu0 %v1826
      %3257 = vmatprep.subr.bf16.mxu0 %v1824
      %3258 = vmatpush1.bf16.msra.mxu0 %v1823
      %3259 = vmatprep.subr.bf16.mxu0 0
      %3260 = vmatpush2.bf16.msra.mxu0 0
      %3261 = vmatprep.subr.bf16.mxu0 0
      %3262 = vmatpush2.bf16.msra.mxu0 0
      %3263 = vmatprep.subr.bf16.mxu0 0
      %3264 = vmatpush2.bf16.msra.mxu0 0
      %3265 = vmatprep.subr.bf16.mxu0 0
      %3266 = vmatpush2.bf16.msra.mxu0 0
      %3267 = vmatprep.subr.bf16.mxu0 0
      %3268 = vmatpush2.bf16.msra.mxu0 0
      %3269 = vmatprep.subr.bf16.mxu0 0
      %3270 = vmatpush2.bf16.msra.mxu0 0
      %3271 = vmatprep.subr.bf16.mxu0 0
      %3272 = vmatpush2.bf16.msra.mxu0 0
      %3273 = vmatprep.subr.bf16.mxu0 0
      %3274 = vmatpush2.bf16.msra.mxu0 0
      %3275 = vmatprep.mubr.bf16.mxu0 0
      %3276 = vmatmul.mubr.bf16.gmra.mxu0 %v3242
      %v3277 = vpop.f32.mrf.mxu0
      %v3278 = vadd.f32 %v1731, %v3277
      %v3279 = vpop.f32.mrf.mxu0
      %v3280 = vadd.f32 %v1735, %v3279
      %v3281 = vpop.f32.mrf.mxu0
      %v3282 = vadd.f32 %v1731, %v3281
      %v3283 = vpop.f32.mrf.mxu0
      %v3284 = vadd.f32 %v1735, %v3283
      %3285 = vdwg.mxu0
      %3286 = vmatprep.subr.bf16.mxu0 0
      %3287 = vmatpush1.bf16.msra.mxu0 %v1846
      %3288 = vmatprep.subr.bf16.mxu0 0
      %3289 = vmatpush1.bf16.msra.mxu0 %v1843
      %3290 = vmatprep.subr.bf16.mxu0 0
      %3291 = vmatpush1.bf16.msra.mxu0 %v1840
      %3292 = vmatprep.subr.bf16.mxu0 0
      %3293 = vmatpush1.bf16.msra.mxu0 %v1837
      %3294 = vmatprep.subr.bf16.mxu0 0
      %3295 = vmatpush1.bf16.msra.mxu0 %v1834
      %3296 = vmatprep.subr.bf16.mxu0 0
      %3297 = vmatpush1.bf16.msra.mxu0 %v1831
      %3298 = vmatprep.subr.bf16.mxu0 0
      %3299 = vmatpush1.bf16.msra.mxu0 %v1828
      %3300 = vmatprep.subr.bf16.mxu0 0
      %3301 = vmatpush1.bf16.msra.mxu0 %v1825
      %3302 = vmatprep.subr.bf16.mxu0 0
      %3303 = vmatpush2.bf16.msra.mxu0 0
      %3304 = vmatprep.subr.bf16.mxu0 0
      %3305 = vmatpush2.bf16.msra.mxu0 0
      %3306 = vmatprep.subr.bf16.mxu0 0
      %3307 = vmatpush2.bf16.msra.mxu0 0
      %3308 = vmatprep.subr.bf16.mxu0 0
      %3309 = vmatpush2.bf16.msra.mxu0 0
      %3310 = vmatprep.subr.bf16.mxu0 0
      %3311 = vmatpush2.bf16.msra.mxu0 0
      %3312 = vmatprep.subr.bf16.mxu0 0
      %3313 = vmatpush2.bf16.msra.mxu0 0
      %3314 = vmatprep.subr.bf16.mxu0 0
      %3315 = vmatpush2.bf16.msra.mxu0 0
      %3316 = vmatprep.subr.bf16.mxu0 0
      %3317 = vmatpush2.bf16.msra.mxu0 0
      %3318 = vmatprep.mubr.bf16.mxu0 0
      %3319 = vmatmul.mubr.bf16.gmra.mxu0 %v3242
      %v3320 = vpop.f32.mrf.mxu0
      %v3321 = vadd.f32 %v1739, %v3320
      %v3322 = vpop.f32.mrf.mxu0
      %v3323 = vpop.f32.mrf.mxu0
      %v3324 = vadd.f32 %v1739, %v3323
      %v3325 = vpop.f32.mrf.mxu0
      %3326 = vdwg.mxu0
      %v3327 = vadd.f32 %v3193, %v3278
      %v3328 = vadd.f32 %v3197, %v3282
      %v3329 = vmul.f32 %v3327, 0.5
      %v3330 = vmul.f32 %v3328, 0.5
      %v3331 = vtanh.pop %v3329
      %v3332 = vtanh.pop %v3330
      %v3333 = vadd.f32 %v3331, 1.0
      %v3334 = vadd.f32 %v3332, 1.0
      %v3335 = vmul.f32 %v3333, 0.5
      %v3336 = vmul.f32 %v3334, 0.5
      %v3337 = vadd.f32 %v3195, %v3280
      %v3338 = vadd.f32 %v3199, %v3284
      %v3339 = vmul.f32 %v3337, 0.5
      %v3340 = vmul.f32 %v3338, 0.5
      %v3341 = vtanh.pop %v3339
      %v3342 = vtanh.pop %v3340
      %v3343 = vadd.f32 %v3341, 1.0
      %v3344 = vadd.f32 %v3342, 1.0
      %v3345 = vmul.f32 %v3343, 0.5
      %v3346 = vmul.f32 %v3344, 0.5
      %v3347 = vmul.f32 %v3335, %v3321
      %v3348 = vmul.f32 %v3336, %v3324
      %v3349 = vadd.f32 %v3236, %v3347
      %v3350 = vadd.f32 %v3239, %v3348
      %v3351 = vtanh.pop %v3349
      %v3352 = vtanh.pop %v3350
      %v3353 = vsub.f32 1.0, %v3345
      %v3354 = vsub.f32 1.0, %v3346
      %v3355 = vmul.f32 %v3353, %v3351
      %v3356 = vmul.f32 %v3354, %v3352
      %v3357 = vmul.f32 %v3345, %v3016
      %v3358 = vmul.f32 %v3346, %v3017
      %v3359 = vadd.f32 %v3355, %v3357
      %v3360 = vadd.f32 %v3356, %v3358
      %vm3361 = vcmp.gt.s32.totalorder %v356, 4
      %vm3362 = vcmp.gt.s32.totalorder %v369, 4
      %v3363 = vsel %vm3361, 1, 0
      %v3364 = vsel %vm3362, 1, 0
      %vm3365 = vcmp.eq.s32.totalorder %v3363, 1
      %vm3366 = vcmp.eq.s32.totalorder %v3364, 1
      %v3367 = vsel %vm3365, %v3359, 0.0
      %v3368 = vsel %vm3366, %v3360, 0.0
      %v3369 = vadd.f32 %v3026, %v3367
      %v3370 = vadd.f32 %v3027, %v3368
      %s3371 = scalar_lea.vmem [#allocation2], 120
      %v3372 = vld [vmem:[%s3371] sm:$0xff]
      %v3373 = vld [vmem:[%s3371 + $0x8] sm:$0xf]
      %v3374 = vld [vmem:[%s3371 + $0xc] sm:$0xff]
      %v3375 = vld [vmem:[%s3371 + $0x14] sm:$0xf]
      %v3376 = vunpack.c.l.bf16 %v3372
      %v3377 = vunpack.c.h.bf16 %v3372
      %v3378 = vunpack.c.l.bf16 %v3373
      %v3379 = vunpack.c.l.bf16 %v3374
      %v3380 = vunpack.c.h.bf16 %v3374
      %v3381 = vunpack.c.l.bf16 %v3375
      %3382 = vmatprep.subr.bf16.mxu0 %v1354
      %3383 = vmatpush1.bf16.msra.mxu0 %v1353
      %3384 = vmatprep.subr.bf16.mxu0 %v1351
      %3385 = vmatpush1.bf16.msra.mxu0 %v1350
      %3386 = vmatprep.subr.bf16.mxu0 %v1348
      %3387 = vmatpush1.bf16.msra.mxu0 %v1347
      %3388 = vmatprep.subr.bf16.mxu0 %v1345
      %3389 = vmatpush1.bf16.msra.mxu0 %v1344
      %3390 = vmatprep.subr.bf16.mxu0 %v1342
      %3391 = vmatpush1.bf16.msra.mxu0 %v1341
      %3392 = vmatprep.subr.bf16.mxu0 %v1339
      %3393 = vmatpush1.bf16.msra.mxu0 %v1338
      %3394 = vmatprep.subr.bf16.mxu0 %v1336
      %3395 = vmatpush1.bf16.msra.mxu0 %v1335
      %3396 = vmatprep.subr.bf16.mxu0 %v1333
      %3397 = vmatpush1.bf16.msra.mxu0 %v1332
      %3398 = vmatprep.subr.bf16.mxu0 0
      %3399 = vmatpush2.bf16.msra.mxu0 0
      %3400 = vmatprep.subr.bf16.mxu0 0
      %3401 = vmatpush2.bf16.msra.mxu0 0
      %3402 = vmatprep.subr.bf16.mxu0 0
      %3403 = vmatpush2.bf16.msra.mxu0 0
      %3404 = vmatprep.subr.bf16.mxu0 0
      %3405 = vmatpush2.bf16.msra.mxu0 0
      %3406 = vmatprep.subr.bf16.mxu0 0
      %3407 = vmatpush2.bf16.msra.mxu0 0
      %3408 = vmatprep.subr.bf16.mxu0 0
      %3409 = vmatpush2.bf16.msra.mxu0 0
      %3410 = vmatprep.subr.bf16.mxu0 0
      %3411 = vmatpush2.bf16.msra.mxu0 0
      %3412 = vmatprep.subr.bf16.mxu0 0
      %3413 = vmatpush2.bf16.msra.mxu0 0
      %3414 = vmatprep.mubr.bf16.mxu0 0
      %3415 = vmatmul.mubr.bf16.gmra.mxu0 %v3157
      %v3416 = vpop.f32.mrf.mxu0
      %v3417 = vadd.f32 %v1240, %v3416
      %v3418 = vpop.f32.mrf.mxu0
      %v3419 = vadd.f32 %v1244, %v3418
      %v3420 = vpop.f32.mrf.mxu0
      %v3421 = vadd.f32 %v1240, %v3420
      %v3422 = vpop.f32.mrf.mxu0
      %v3423 = vadd.f32 %v1244, %v3422
      %3424 = vdwg.mxu0
      %3425 = vmatprep.subr.bf16.mxu0 0
      %3426 = vmatpush1.bf16.msra.mxu0 %v1355
      %3427 = vmatprep.subr.bf16.mxu0 0
      %3428 = vmatpush1.bf16.msra.mxu0 %v1352
      %3429 = vmatprep.subr.bf16.mxu0 0
      %3430 = vmatpush1.bf16.msra.mxu0 %v1349
      %3431 = vmatprep.subr.bf16.mxu0 0
      %3432 = vmatpush1.bf16.msra.mxu0 %v1346
      %3433 = vmatprep.subr.bf16.mxu0 0
      %3434 = vmatpush1.bf16.msra.mxu0 %v1343
      %3435 = vmatprep.subr.bf16.mxu0 0
      %3436 = vmatpush1.bf16.msra.mxu0 %v1340
      %3437 = vmatprep.subr.bf16.mxu0 0
      %3438 = vmatpush1.bf16.msra.mxu0 %v1337
      %3439 = vmatprep.subr.bf16.mxu0 0
      %3440 = vmatpush1.bf16.msra.mxu0 %v1334
      %3441 = vmatprep.subr.bf16.mxu0 0
      %3442 = vmatpush2.bf16.msra.mxu0 0
      %3443 = vmatprep.subr.bf16.mxu0 0
      %3444 = vmatpush2.bf16.msra.mxu0 0
      %3445 = vmatprep.subr.bf16.mxu0 0
      %3446 = vmatpush2.bf16.msra.mxu0 0
      %3447 = vmatprep.subr.bf16.mxu0 0
      %3448 = vmatpush2.bf16.msra.mxu0 0
      %3449 = vmatprep.subr.bf16.mxu0 0
      %3450 = vmatpush2.bf16.msra.mxu0 0
      %3451 = vmatprep.subr.bf16.mxu0 0
      %3452 = vmatpush2.bf16.msra.mxu0 0
      %3453 = vmatprep.subr.bf16.mxu0 0
      %3454 = vmatpush2.bf16.msra.mxu0 0
      %3455 = vmatprep.subr.bf16.mxu0 0
      %3456 = vmatpush2.bf16.msra.mxu0 0
      %3457 = vmatprep.mubr.bf16.mxu0 0
      %3458 = vmatmul.mubr.bf16.gmra.mxu0 %v3157
      %v3459 = vpop.f32.mrf.mxu0
      %v3460 = vadd.f32 %v1248, %v3459
      %v3461 = vpop.f32.mrf.mxu0
      %v3462 = vpop.f32.mrf.mxu0
      %v3463 = vadd.f32 %v1248, %v3462
      %v3464 = vpop.f32.mrf.mxu0
      %3465 = vdwg.mxu0
      %v3466 = vadd.f32 %v3376, %v3417
      %v3467 = vadd.f32 %v3379, %v3421
      %v3468 = vmul.f32 %v3466, 0.5
      %v3469 = vmul.f32 %v3467, 0.5
      %v3470 = vtanh.pop %v3468
      %v3471 = vtanh.pop %v3469
      %v3472 = vadd.f32 %v3470, 1.0
      %v3473 = vadd.f32 %v3471, 1.0
      %v3474 = vmul.f32 %v3472, 0.5
      %v3475 = vmul.f32 %v3473, 0.5
      %v3476 = vadd.f32 %v3377, %v3419
      %v3477 = vadd.f32 %v3380, %v3423
      %v3478 = vmul.f32 %v3476, 0.5
      %v3479 = vmul.f32 %v3477, 0.5
      %v3480 = vtanh.pop %v3478
      %v3481 = vtanh.pop %v3479
      %v3482 = vadd.f32 %v3480, 1.0
      %v3483 = vadd.f32 %v3481, 1.0
      %v3484 = vmul.f32 %v3482, 0.5
      %v3485 = vmul.f32 %v3483, 0.5
      %v3486 = vmul.f32 %v3474, %v3460
      %v3487 = vmul.f32 %v3475, %v3463
      %v3488 = vadd.f32 %v3378, %v3486
      %v3489 = vadd.f32 %v3381, %v3487
      %v3490 = vtanh.pop %v3488
      %v3491 = vtanh.pop %v3489
      %v3492 = vsub.f32 1.0, %v3484
      %v3493 = vsub.f32 1.0, %v3485
      %v3494 = vmul.f32 %v3492, %v3490
      %v3495 = vmul.f32 %v3493, %v3491
      %v3496 = vmul.f32 %v3484, %v3155
      %v3497 = vmul.f32 %v3485, %v3156
      %v3498 = vadd.f32 %v3494, %v3496
      %v3499 = vadd.f32 %v3495, %v3497
      %v3500 = vpack.c.bf16 %v3499, %v3498
      %3501 = vmatprep.subr.bf16.mxu0 %v1617
      %3502 = vmatpush1.bf16.msra.mxu0 %v1616
      %3503 = vmatprep.subr.bf16.mxu0 %v1614
      %3504 = vmatpush1.bf16.msra.mxu0 %v1613
      %3505 = vmatprep.subr.bf16.mxu0 %v1611
      %3506 = vmatpush1.bf16.msra.mxu0 %v1610
      %3507 = vmatprep.subr.bf16.mxu0 %v1608
      %3508 = vmatpush1.bf16.msra.mxu0 %v1607
      %3509 = vmatprep.subr.bf16.mxu0 %v1605
      %3510 = vmatpush1.bf16.msra.mxu0 %v1604
      %3511 = vmatprep.subr.bf16.mxu0 %v1602
      %3512 = vmatpush1.bf16.msra.mxu0 %v1601
      %3513 = vmatprep.subr.bf16.mxu0 %v1599
      %3514 = vmatpush1.bf16.msra.mxu0 %v1598
      %3515 = vmatprep.subr.bf16.mxu0 %v1596
      %3516 = vmatpush1.bf16.msra.mxu0 %v1595
      %3517 = vmatprep.subr.bf16.mxu0 0
      %3518 = vmatpush2.bf16.msra.mxu0 0
      %3519 = vmatprep.subr.bf16.mxu0 0
      %3520 = vmatpush2.bf16.msra.mxu0 0
      %3521 = vmatprep.subr.bf16.mxu0 0
      %3522 = vmatpush2.bf16.msra.mxu0 0
      %3523 = vmatprep.subr.bf16.mxu0 0
      %3524 = vmatpush2.bf16.msra.mxu0 0
      %3525 = vmatprep.subr.bf16.mxu0 0
      %3526 = vmatpush2.bf16.msra.mxu0 0
      %3527 = vmatprep.subr.bf16.mxu0 0
      %3528 = vmatpush2.bf16.msra.mxu0 0
      %3529 = vmatprep.subr.bf16.mxu0 0
      %3530 = vmatpush2.bf16.msra.mxu0 0
      %3531 = vmatprep.subr.bf16.mxu0 0
      %3532 = vmatpush2.bf16.msra.mxu0 0
      %3533 = vmatprep.mubr.bf16.mxu0 0
      %3534 = vmatmul.mubr.bf16.gmra.mxu0 %v3500
      %v3535 = vpop.f32.mrf.mxu0
      %v3536 = vadd.f32 %v1503, %v3535
      %v3537 = vpop.f32.mrf.mxu0
      %v3538 = vadd.f32 %v1507, %v3537
      %v3539 = vpop.f32.mrf.mxu0
      %v3540 = vadd.f32 %v1503, %v3539
      %v3541 = vpop.f32.mrf.mxu0
      %v3542 = vadd.f32 %v1507, %v3541
      %3543 = vdwg.mxu0
      %3544 = vmatprep.subr.bf16.mxu0 0
      %3545 = vmatpush1.bf16.msra.mxu0 %v1618
      %3546 = vmatprep.subr.bf16.mxu0 0
      %3547 = vmatpush1.bf16.msra.mxu0 %v1615
      %3548 = vmatprep.subr.bf16.mxu0 0
      %3549 = vmatpush1.bf16.msra.mxu0 %v1612
      %3550 = vmatprep.subr.bf16.mxu0 0
      %3551 = vmatpush1.bf16.msra.mxu0 %v1609
      %3552 = vmatprep.subr.bf16.mxu0 0
      %3553 = vmatpush1.bf16.msra.mxu0 %v1606
      %3554 = vmatprep.subr.bf16.mxu0 0
      %3555 = vmatpush1.bf16.msra.mxu0 %v1603
      %3556 = vmatprep.subr.bf16.mxu0 0
      %3557 = vmatpush1.bf16.msra.mxu0 %v1600
      %3558 = vmatprep.subr.bf16.mxu0 0
      %3559 = vmatpush1.bf16.msra.mxu0 %v1597
      %3560 = vmatprep.subr.bf16.mxu0 0
      %3561 = vmatpush2.bf16.msra.mxu0 0
      %3562 = vmatprep.subr.bf16.mxu0 0
      %3563 = vmatpush2.bf16.msra.mxu0 0
      %3564 = vmatprep.subr.bf16.mxu0 0
      %3565 = vmatpush2.bf16.msra.mxu0 0
      %3566 = vmatprep.subr.bf16.mxu0 0
      %3567 = vmatpush2.bf16.msra.mxu0 0
      %3568 = vmatprep.subr.bf16.mxu0 0
      %3569 = vmatpush2.bf16.msra.mxu0 0
      %3570 = vmatprep.subr.bf16.mxu0 0
      %3571 = vmatpush2.bf16.msra.mxu0 0
      %3572 = vmatprep.subr.bf16.mxu0 0
      %3573 = vmatpush2.bf16.msra.mxu0 0
      %3574 = vmatprep.subr.bf16.mxu0 0
      %3575 = vmatpush2.bf16.msra.mxu0 0
      %3576 = vmatprep.mubr.bf16.mxu0 0
      %3577 = vmatmul.mubr.bf16.gmra.mxu0 %v3500
      %v3578 = vpop.f32.mrf.mxu0
      %v3579 = vadd.f32 %v1511, %v3578
      %v3580 = vpop.f32.mrf.mxu0
      %v3581 = vpop.f32.mrf.mxu0
      %v3582 = vadd.f32 %v1511, %v3581
      %v3583 = vpop.f32.mrf.mxu0
      %3584 = vdwg.mxu0
      %v3585 = vpack.c.bf16 %v3360, %v3359
      %3586 = vmatprep.subr.bf16.mxu0 %v1845
      %3587 = vmatpush1.bf16.msra.mxu0 %v1844
      %3588 = vmatprep.subr.bf16.mxu0 %v1842
      %3589 = vmatpush1.bf16.msra.mxu0 %v1841
      %3590 = vmatprep.subr.bf16.mxu0 %v1839
      %3591 = vmatpush1.bf16.msra.mxu0 %v1838
      %3592 = vmatprep.subr.bf16.mxu0 %v1836
      %3593 = vmatpush1.bf16.msra.mxu0 %v1835
      %3594 = vmatprep.subr.bf16.mxu0 %v1833
      %3595 = vmatpush1.bf16.msra.mxu0 %v1832
      %3596 = vmatprep.subr.bf16.mxu0 %v1830
      %3597 = vmatpush1.bf16.msra.mxu0 %v1829
      %3598 = vmatprep.subr.bf16.mxu0 %v1827
      %3599 = vmatpush1.bf16.msra.mxu0 %v1826
      %3600 = vmatprep.subr.bf16.mxu0 %v1824
      %3601 = vmatpush1.bf16.msra.mxu0 %v1823
      %3602 = vmatprep.subr.bf16.mxu0 0
      %3603 = vmatpush2.bf16.msra.mxu0 0
      %3604 = vmatprep.subr.bf16.mxu0 0
      %3605 = vmatpush2.bf16.msra.mxu0 0
      %3606 = vmatprep.subr.bf16.mxu0 0
      %3607 = vmatpush2.bf16.msra.mxu0 0
      %3608 = vmatprep.subr.bf16.mxu0 0
      %3609 = vmatpush2.bf16.msra.mxu0 0
      %3610 = vmatprep.subr.bf16.mxu0 0
      %3611 = vmatpush2.bf16.msra.mxu0 0
      %3612 = vmatprep.subr.bf16.mxu0 0
      %3613 = vmatpush2.bf16.msra.mxu0 0
      %3614 = vmatprep.subr.bf16.mxu0 0
      %3615 = vmatpush2.bf16.msra.mxu0 0
      %3616 = vmatprep.subr.bf16.mxu0 0
      %3617 = vmatpush2.bf16.msra.mxu0 0
      %3618 = vmatprep.mubr.bf16.mxu0 0
      %3619 = vmatmul.mubr.bf16.gmra.mxu0 %v3585
      %v3620 = vpop.f32.mrf.mxu0
      %v3621 = vadd.f32 %v1731, %v3620
      %v3622 = vpop.f32.mrf.mxu0
      %v3623 = vadd.f32 %v1735, %v3622
      %v3624 = vpop.f32.mrf.mxu0
      %v3625 = vadd.f32 %v1731, %v3624
      %v3626 = vpop.f32.mrf.mxu0
      %v3627 = vadd.f32 %v1735, %v3626
      %3628 = vdwg.mxu0
      %3629 = vmatprep.subr.bf16.mxu0 0
      %3630 = vmatpush1.bf16.msra.mxu0 %v1846
      %3631 = vmatprep.subr.bf16.mxu0 0
      %3632 = vmatpush1.bf16.msra.mxu0 %v1843
      %3633 = vmatprep.subr.bf16.mxu0 0
      %3634 = vmatpush1.bf16.msra.mxu0 %v1840
      %3635 = vmatprep.subr.bf16.mxu0 0
      %3636 = vmatpush1.bf16.msra.mxu0 %v1837
      %3637 = vmatprep.subr.bf16.mxu0 0
      %3638 = vmatpush1.bf16.msra.mxu0 %v1834
      %3639 = vmatprep.subr.bf16.mxu0 0
      %3640 = vmatpush1.bf16.msra.mxu0 %v1831
      %3641 = vmatprep.subr.bf16.mxu0 0
      %3642 = vmatpush1.bf16.msra.mxu0 %v1828
      %3643 = vmatprep.subr.bf16.mxu0 0
      %3644 = vmatpush1.bf16.msra.mxu0 %v1825
      %3645 = vmatprep.subr.bf16.mxu0 0
      %3646 = vmatpush2.bf16.msra.mxu0 0
      %3647 = vmatprep.subr.bf16.mxu0 0
      %3648 = vmatpush2.bf16.msra.mxu0 0
      %3649 = vmatprep.subr.bf16.mxu0 0
      %3650 = vmatpush2.bf16.msra.mxu0 0
      %3651 = vmatprep.subr.bf16.mxu0 0
      %3652 = vmatpush2.bf16.msra.mxu0 0
      %3653 = vmatprep.subr.bf16.mxu0 0
      %3654 = vmatpush2.bf16.msra.mxu0 0
      %3655 = vmatprep.subr.bf16.mxu0 0
      %3656 = vmatpush2.bf16.msra.mxu0 0
      %3657 = vmatprep.subr.bf16.mxu0 0
      %3658 = vmatpush2.bf16.msra.mxu0 0
      %3659 = vmatprep.subr.bf16.mxu0 0
      %3660 = vmatpush2.bf16.msra.mxu0 0
      %3661 = vmatprep.mubr.bf16.mxu0 0
      %3662 = vmatmul.mubr.bf16.gmra.mxu0 %v3585
      %v3663 = vpop.f32.mrf.mxu0
      %v3664 = vadd.f32 %v1739, %v3663
      %v3665 = vpop.f32.mrf.mxu0
      %v3666 = vpop.f32.mrf.mxu0
      %v3667 = vadd.f32 %v1739, %v3666
      %v3668 = vpop.f32.mrf.mxu0
      %3669 = vdwg.mxu0
      %v3670 = vadd.f32 %v3536, %v3621
      %v3671 = vadd.f32 %v3540, %v3625
      %v3672 = vmul.f32 %v3670, 0.5
      %v3673 = vmul.f32 %v3671, 0.5
      %v3674 = vtanh.pop %v3672
      %v3675 = vtanh.pop %v3673
      %v3676 = vadd.f32 %v3674, 1.0
      %v3677 = vadd.f32 %v3675, 1.0
      %v3678 = vmul.f32 %v3676, 0.5
      %v3679 = vmul.f32 %v3677, 0.5
      %v3680 = vadd.f32 %v3538, %v3623
      %v3681 = vadd.f32 %v3542, %v3627
      %v3682 = vmul.f32 %v3680, 0.5
      %v3683 = vmul.f32 %v3681, 0.5
      %v3684 = vtanh.pop %v3682
      %v3685 = vtanh.pop %v3683
      %v3686 = vadd.f32 %v3684, 1.0
      %v3687 = vadd.f32 %v3685, 1.0
      %v3688 = vmul.f32 %v3686, 0.5
      %v3689 = vmul.f32 %v3687, 0.5
      %v3690 = vmul.f32 %v3678, %v3664
      %v3691 = vmul.f32 %v3679, %v3667
      %v3692 = vadd.f32 %v3579, %v3690
      %v3693 = vadd.f32 %v3582, %v3691
      %v3694 = vtanh.pop %v3692
      %v3695 = vtanh.pop %v3693
      %v3696 = vsub.f32 1.0, %v3688
      %v3697 = vsub.f32 1.0, %v3689
      %v3698 = vmul.f32 %v3696, %v3694
      %v3699 = vmul.f32 %v3697, %v3695
      %v3700 = vmul.f32 %v3688, %v3359
      %v3701 = vmul.f32 %v3689, %v3360
      %v3702 = vadd.f32 %v3698, %v3700
      %v3703 = vadd.f32 %v3699, %v3701
      %vm3704 = vcmp.gt.s32.totalorder %v356, 5
      %vm3705 = vcmp.gt.s32.totalorder %v369, 5
      %v3706 = vsel %vm3704, 1, 0
      %v3707 = vsel %vm3705, 1, 0
      %vm3708 = vcmp.eq.s32.totalorder %v3706, 1
      %vm3709 = vcmp.eq.s32.totalorder %v3707, 1
      %v3710 = vsel %vm3708, %v3702, 0.0
      %v3711 = vsel %vm3709, %v3703, 0.0
      %v3712 = vadd.f32 %v3369, %v3710
      %v3713 = vadd.f32 %v3370, %v3711
      %s3714 = scalar_lea.vmem [#allocation2], 144
      %v3715 = vld [vmem:[%s3714] sm:$0xff]
      %v3716 = vld [vmem:[%s3714 + $0x8] sm:$0xf]
      %v3717 = vld [vmem:[%s3714 + $0xc] sm:$0xff]
      %v3718 = vld [vmem:[%s3714 + $0x14] sm:$0xf]
      %v3719 = vunpack.c.l.bf16 %v3715
      %v3720 = vunpack.c.h.bf16 %v3715
      %v3721 = vunpack.c.l.bf16 %v3716
      %v3722 = vunpack.c.l.bf16 %v3717
      %v3723 = vunpack.c.h.bf16 %v3717
      %v3724 = vunpack.c.l.bf16 %v3718
      %3725 = vmatprep.subr.bf16.mxu0 %v1354
      %3726 = vmatpush1.bf16.msra.mxu0 %v1353
      %3727 = vmatprep.subr.bf16.mxu0 %v1351
      %3728 = vmatpush1.bf16.msra.mxu0 %v1350
      %3729 = vmatprep.subr.bf16.mxu0 %v1348
      %3730 = vmatpush1.bf16.msra.mxu0 %v1347
      %3731 = vmatprep.subr.bf16.mxu0 %v1345
      %3732 = vmatpush1.bf16.msra.mxu0 %v1344
      %3733 = vmatprep.subr.bf16.mxu0 %v1342
      %3734 = vmatpush1.bf16.msra.mxu0 %v1341
      %3735 = vmatprep.subr.bf16.mxu0 %v1339
      %3736 = vmatpush1.bf16.msra.mxu0 %v1338
      %3737 = vmatprep.subr.bf16.mxu0 %v1336
      %3738 = vmatpush1.bf16.msra.mxu0 %v1335
      %3739 = vmatprep.subr.bf16.mxu0 %v1333
      %3740 = vmatpush1.bf16.msra.mxu0 %v1332
      %3741 = vmatprep.subr.bf16.mxu0 0
      %3742 = vmatpush2.bf16.msra.mxu0 0
      %3743 = vmatprep.subr.bf16.mxu0 0
      %3744 = vmatpush2.bf16.msra.mxu0 0
      %3745 = vmatprep.subr.bf16.mxu0 0
      %3746 = vmatpush2.bf16.msra.mxu0 0
      %3747 = vmatprep.subr.bf16.mxu0 0
      %3748 = vmatpush2.bf16.msra.mxu0 0
      %3749 = vmatprep.subr.bf16.mxu0 0
      %3750 = vmatpush2.bf16.msra.mxu0 0
      %3751 = vmatprep.subr.bf16.mxu0 0
      %3752 = vmatpush2.bf16.msra.mxu0 0
      %3753 = vmatprep.subr.bf16.mxu0 0
      %3754 = vmatpush2.bf16.msra.mxu0 0
      %3755 = vmatprep.subr.bf16.mxu0 0
      %3756 = vmatpush2.bf16.msra.mxu0 0
      %3757 = vmatprep.mubr.bf16.mxu0 0
      %3758 = vmatmul.mubr.bf16.gmra.mxu0 %v3500
      %v3759 = vpop.f32.mrf.mxu0
      %v3760 = vadd.f32 %v1240, %v3759
      %v3761 = vpop.f32.mrf.mxu0
      %v3762 = vadd.f32 %v1244, %v3761
      %v3763 = vpop.f32.mrf.mxu0
      %v3764 = vadd.f32 %v1240, %v3763
      %v3765 = vpop.f32.mrf.mxu0
      %v3766 = vadd.f32 %v1244, %v3765
      %3767 = vdwg.mxu0
      %3768 = vmatprep.subr.bf16.mxu0 0
      %3769 = vmatpush1.bf16.msra.mxu0 %v1355
      %3770 = vmatprep.subr.bf16.mxu0 0
      %3771 = vmatpush1.bf16.msra.mxu0 %v1352
      %3772 = vmatprep.subr.bf16.mxu0 0
      %3773 = vmatpush1.bf16.msra.mxu0 %v1349
      %3774 = vmatprep.subr.bf16.mxu0 0
      %3775 = vmatpush1.bf16.msra.mxu0 %v1346
      %3776 = vmatprep.subr.bf16.mxu0 0
      %3777 = vmatpush1.bf16.msra.mxu0 %v1343
      %3778 = vmatprep.subr.bf16.mxu0 0
      %3779 = vmatpush1.bf16.msra.mxu0 %v1340
      %3780 = vmatprep.subr.bf16.mxu0 0
      %3781 = vmatpush1.bf16.msra.mxu0 %v1337
      %3782 = vmatprep.subr.bf16.mxu0 0
      %3783 = vmatpush1.bf16.msra.mxu0 %v1334
      %3784 = vmatprep.subr.bf16.mxu0 0
      %3785 = vmatpush2.bf16.msra.mxu0 0
      %3786 = vmatprep.subr.bf16.mxu0 0
      %3787 = vmatpush2.bf16.msra.mxu0 0
      %3788 = vmatprep.subr.bf16.mxu0 0
      %3789 = vmatpush2.bf16.msra.mxu0 0
      %3790 = vmatprep.subr.bf16.mxu0 0
      %3791 = vmatpush2.bf16.msra.mxu0 0
      %3792 = vmatprep.subr.bf16.mxu0 0
      %3793 = vmatpush2.bf16.msra.mxu0 0
      %3794 = vmatprep.subr.bf16.mxu0 0
      %3795 = vmatpush2.bf16.msra.mxu0 0
      %3796 = vmatprep.subr.bf16.mxu0 0
      %3797 = vmatpush2.bf16.msra.mxu0 0
      %3798 = vmatprep.subr.bf16.mxu0 0
      %3799 = vmatpush2.bf16.msra.mxu0 0
      %3800 = vmatprep.mubr.bf16.mxu0 0
      %3801 = vmatmul.mubr.bf16.gmra.mxu0 %v3500
      %v3802 = vpop.f32.mrf.mxu0
      %v3803 = vadd.f32 %v1248, %v3802
      %v3804 = vpop.f32.mrf.mxu0
      %v3805 = vpop.f32.mrf.mxu0
      %v3806 = vadd.f32 %v1248, %v3805
      %v3807 = vpop.f32.mrf.mxu0
      %3808 = vdwg.mxu0
      %v3809 = vadd.f32 %v3719, %v3760
      %v3810 = vadd.f32 %v3722, %v3764
      %v3811 = vmul.f32 %v3809, 0.5
      %v3812 = vmul.f32 %v3810, 0.5
      %v3813 = vtanh.pop %v3811
      %v3814 = vtanh.pop %v3812
      %v3815 = vadd.f32 %v3813, 1.0
      %v3816 = vadd.f32 %v3814, 1.0
      %v3817 = vmul.f32 %v3815, 0.5
      %v3818 = vmul.f32 %v3816, 0.5
      %v3819 = vadd.f32 %v3720, %v3762
      %v3820 = vadd.f32 %v3723, %v3766
      %v3821 = vmul.f32 %v3819, 0.5
      %v3822 = vmul.f32 %v3820, 0.5
      %v3823 = vtanh.pop %v3821
      %v3824 = vtanh.pop %v3822
      %v3825 = vadd.f32 %v3823, 1.0
      %v3826 = vadd.f32 %v3824, 1.0
      %v3827 = vmul.f32 %v3825, 0.5
      %v3828 = vmul.f32 %v3826, 0.5
      %v3829 = vmul.f32 %v3817, %v3803
      %v3830 = vmul.f32 %v3818, %v3806
      %v3831 = vadd.f32 %v3721, %v3829
      %v3832 = vadd.f32 %v3724, %v3830
      %v3833 = vtanh.pop %v3831
      %v3834 = vtanh.pop %v3832
      %v3835 = vsub.f32 1.0, %v3827
      %v3836 = vsub.f32 1.0, %v3828
      %v3837 = vmul.f32 %v3835, %v3833
      %v3838 = vmul.f32 %v3836, %v3834
      %v3839 = vmul.f32 %v3827, %v3498
      %v3840 = vmul.f32 %v3828, %v3499
      %v3841 = vadd.f32 %v3837, %v3839
      %v3842 = vadd.f32 %v3838, %v3840
      %v3843 = vpack.c.bf16 %v3842, %v3841
      %3844 = vmatprep.subr.bf16.mxu0 %v1617
      %3845 = vmatpush1.bf16.msra.mxu0 %v1616
      %3846 = vmatprep.subr.bf16.mxu0 %v1614
      %3847 = vmatpush1.bf16.msra.mxu0 %v1613
      %3848 = vmatprep.subr.bf16.mxu0 %v1611
      %3849 = vmatpush1.bf16.msra.mxu0 %v1610
      %3850 = vmatprep.subr.bf16.mxu0 %v1608
      %3851 = vmatpush1.bf16.msra.mxu0 %v1607
      %3852 = vmatprep.subr.bf16.mxu0 %v1605
      %3853 = vmatpush1.bf16.msra.mxu0 %v1604
      %3854 = vmatprep.subr.bf16.mxu0 %v1602
      %3855 = vmatpush1.bf16.msra.mxu0 %v1601
      %3856 = vmatprep.subr.bf16.mxu0 %v1599
      %3857 = vmatpush1.bf16.msra.mxu0 %v1598
      %3858 = vmatprep.subr.bf16.mxu0 %v1596
      %3859 = vmatpush1.bf16.msra.mxu0 %v1595
      %3860 = vmatprep.subr.bf16.mxu0 0
      %3861 = vmatpush2.bf16.msra.mxu0 0
      %3862 = vmatprep.subr.bf16.mxu0 0
      %3863 = vmatpush2.bf16.msra.mxu0 0
      %3864 = vmatprep.subr.bf16.mxu0 0
      %3865 = vmatpush2.bf16.msra.mxu0 0
      %3866 = vmatprep.subr.bf16.mxu0 0
      %3867 = vmatpush2.bf16.msra.mxu0 0
      %3868 = vmatprep.subr.bf16.mxu0 0
      %3869 = vmatpush2.bf16.msra.mxu0 0
      %3870 = vmatprep.subr.bf16.mxu0 0
      %3871 = vmatpush2.bf16.msra.mxu0 0
      %3872 = vmatprep.subr.bf16.mxu0 0
      %3873 = vmatpush2.bf16.msra.mxu0 0
      %3874 = vmatprep.subr.bf16.mxu0 0
      %3875 = vmatpush2.bf16.msra.mxu0 0
      %3876 = vmatprep.mubr.bf16.mxu0 0
      %3877 = vmatmul.mubr.bf16.gmra.mxu0 %v3843
      %v3878 = vpop.f32.mrf.mxu0
      %v3879 = vadd.f32 %v1503, %v3878
      %v3880 = vpop.f32.mrf.mxu0
      %v3881 = vadd.f32 %v1507, %v3880
      %v3882 = vpop.f32.mrf.mxu0
      %v3883 = vadd.f32 %v1503, %v3882
      %v3884 = vpop.f32.mrf.mxu0
      %v3885 = vadd.f32 %v1507, %v3884
      %3886 = vdwg.mxu0
      %3887 = vmatprep.subr.bf16.mxu0 0
      %3888 = vmatpush1.bf16.msra.mxu0 %v1618
      %3889 = vmatprep.subr.bf16.mxu0 0
      %3890 = vmatpush1.bf16.msra.mxu0 %v1615
      %3891 = vmatprep.subr.bf16.mxu0 0
      %3892 = vmatpush1.bf16.msra.mxu0 %v1612
      %3893 = vmatprep.subr.bf16.mxu0 0
      %3894 = vmatpush1.bf16.msra.mxu0 %v1609
      %3895 = vmatprep.subr.bf16.mxu0 0
      %3896 = vmatpush1.bf16.msra.mxu0 %v1606
      %3897 = vmatprep.subr.bf16.mxu0 0
      %3898 = vmatpush1.bf16.msra.mxu0 %v1603
      %3899 = vmatprep.subr.bf16.mxu0 0
      %3900 = vmatpush1.bf16.msra.mxu0 %v1600
      %3901 = vmatprep.subr.bf16.mxu0 0
      %3902 = vmatpush1.bf16.msra.mxu0 %v1597
      %3903 = vmatprep.subr.bf16.mxu0 0
      %3904 = vmatpush2.bf16.msra.mxu0 0
      %3905 = vmatprep.subr.bf16.mxu0 0
      %3906 = vmatpush2.bf16.msra.mxu0 0
      %3907 = vmatprep.subr.bf16.mxu0 0
      %3908 = vmatpush2.bf16.msra.mxu0 0
      %3909 = vmatprep.subr.bf16.mxu0 0
      %3910 = vmatpush2.bf16.msra.mxu0 0
      %3911 = vmatprep.subr.bf16.mxu0 0
      %3912 = vmatpush2.bf16.msra.mxu0 0
      %3913 = vmatprep.subr.bf16.mxu0 0
      %3914 = vmatpush2.bf16.msra.mxu0 0
      %3915 = vmatprep.subr.bf16.mxu0 0
      %3916 = vmatpush2.bf16.msra.mxu0 0
      %3917 = vmatprep.subr.bf16.mxu0 0
      %3918 = vmatpush2.bf16.msra.mxu0 0
      %3919 = vmatprep.mubr.bf16.mxu0 0
      %3920 = vmatmul.mubr.bf16.gmra.mxu0 %v3843
      %v3921 = vpop.f32.mrf.mxu0
      %v3922 = vadd.f32 %v1511, %v3921
      %v3923 = vpop.f32.mrf.mxu0
      %v3924 = vpop.f32.mrf.mxu0
      %v3925 = vadd.f32 %v1511, %v3924
      %v3926 = vpop.f32.mrf.mxu0
      %3927 = vdwg.mxu0
      %v3928 = vpack.c.bf16 %v3703, %v3702
      %3929 = vmatprep.subr.bf16.mxu0 %v1845
      %3930 = vmatpush1.bf16.msra.mxu0 %v1844
      %3931 = vmatprep.subr.bf16.mxu0 %v1842
      %3932 = vmatpush1.bf16.msra.mxu0 %v1841
      %3933 = vmatprep.subr.bf16.mxu0 %v1839
      %3934 = vmatpush1.bf16.msra.mxu0 %v1838
      %3935 = vmatprep.subr.bf16.mxu0 %v1836
      %3936 = vmatpush1.bf16.msra.mxu0 %v1835
      %3937 = vmatprep.subr.bf16.mxu0 %v1833
      %3938 = vmatpush1.bf16.msra.mxu0 %v1832
      %3939 = vmatprep.subr.bf16.mxu0 %v1830
      %3940 = vmatpush1.bf16.msra.mxu0 %v1829
      %3941 = vmatprep.subr.bf16.mxu0 %v1827
      %3942 = vmatpush1.bf16.msra.mxu0 %v1826
      %3943 = vmatprep.subr.bf16.mxu0 %v1824
      %3944 = vmatpush1.bf16.msra.mxu0 %v1823
      %3945 = vmatprep.subr.bf16.mxu0 0
      %3946 = vmatpush2.bf16.msra.mxu0 0
      %3947 = vmatprep.subr.bf16.mxu0 0
      %3948 = vmatpush2.bf16.msra.mxu0 0
      %3949 = vmatprep.subr.bf16.mxu0 0
      %3950 = vmatpush2.bf16.msra.mxu0 0
      %3951 = vmatprep.subr.bf16.mxu0 0
      %3952 = vmatpush2.bf16.msra.mxu0 0
      %3953 = vmatprep.subr.bf16.mxu0 0
      %3954 = vmatpush2.bf16.msra.mxu0 0
      %3955 = vmatprep.subr.bf16.mxu0 0
      %3956 = vmatpush2.bf16.msra.mxu0 0
      %3957 = vmatprep.subr.bf16.mxu0 0
      %3958 = vmatpush2.bf16.msra.mxu0 0
      %3959 = vmatprep.subr.bf16.mxu0 0
      %3960 = vmatpush2.bf16.msra.mxu0 0
      %3961 = vmatprep.mubr.bf16.mxu0 0
      %3962 = vmatmul.mubr.bf16.gmra.mxu0 %v3928
      %v3963 = vpop.f32.mrf.mxu0
      %v3964 = vadd.f32 %v1731, %v3963
      %v3965 = vpop.f32.mrf.mxu0
      %v3966 = vadd.f32 %v1735, %v3965
      %v3967 = vpop.f32.mrf.mxu0
      %v3968 = vadd.f32 %v1731, %v3967
      %v3969 = vpop.f32.mrf.mxu0
      %v3970 = vadd.f32 %v1735, %v3969
      %3971 = vdwg.mxu0
      %3972 = vmatprep.subr.bf16.mxu0 0
      %3973 = vmatpush1.bf16.msra.mxu0 %v1846
      %3974 = vmatprep.subr.bf16.mxu0 0
      %3975 = vmatpush1.bf16.msra.mxu0 %v1843
      %3976 = vmatprep.subr.bf16.mxu0 0
      %3977 = vmatpush1.bf16.msra.mxu0 %v1840
      %3978 = vmatprep.subr.bf16.mxu0 0
      %3979 = vmatpush1.bf16.msra.mxu0 %v1837
      %3980 = vmatprep.subr.bf16.mxu0 0
      %3981 = vmatpush1.bf16.msra.mxu0 %v1834
      %3982 = vmatprep.subr.bf16.mxu0 0
      %3983 = vmatpush1.bf16.msra.mxu0 %v1831
      %3984 = vmatprep.subr.bf16.mxu0 0
      %3985 = vmatpush1.bf16.msra.mxu0 %v1828
      %3986 = vmatprep.subr.bf16.mxu0 0
      %3987 = vmatpush1.bf16.msra.mxu0 %v1825
      %3988 = vmatprep.subr.bf16.mxu0 0
      %3989 = vmatpush2.bf16.msra.mxu0 0
      %3990 = vmatprep.subr.bf16.mxu0 0
      %3991 = vmatpush2.bf16.msra.mxu0 0
      %3992 = vmatprep.subr.bf16.mxu0 0
      %3993 = vmatpush2.bf16.msra.mxu0 0
      %3994 = vmatprep.subr.bf16.mxu0 0
      %3995 = vmatpush2.bf16.msra.mxu0 0
      %3996 = vmatprep.subr.bf16.mxu0 0
      %3997 = vmatpush2.bf16.msra.mxu0 0
      %3998 = vmatprep.subr.bf16.mxu0 0
      %3999 = vmatpush2.bf16.msra.mxu0 0
      %4000 = vmatprep.subr.bf16.mxu0 0
      %4001 = vmatpush2.bf16.msra.mxu0 0
      %4002 = vmatprep.subr.bf16.mxu0 0
      %4003 = vmatpush2.bf16.msra.mxu0 0
      %4004 = vmatprep.mubr.bf16.mxu0 0
      %4005 = vmatmul.mubr.bf16.gmra.mxu0 %v3928
      %v4006 = vpop.f32.mrf.mxu0
      %v4007 = vadd.f32 %v1739, %v4006
      %v4008 = vpop.f32.mrf.mxu0
      %v4009 = vpop.f32.mrf.mxu0
      %v4010 = vadd.f32 %v1739, %v4009
      %v4011 = vpop.f32.mrf.mxu0
      %4012 = vdwg.mxu0
      %v4013 = vadd.f32 %v3879, %v3964
      %v4014 = vadd.f32 %v3883, %v3968
      %v4015 = vmul.f32 %v4013, 0.5
      %v4016 = vmul.f32 %v4014, 0.5
      %v4017 = vtanh.pop %v4015
      %v4018 = vtanh.pop %v4016
      %v4019 = vadd.f32 %v4017, 1.0
      %v4020 = vadd.f32 %v4018, 1.0
      %v4021 = vmul.f32 %v4019, 0.5
      %v4022 = vmul.f32 %v4020, 0.5
      %v4023 = vadd.f32 %v3881, %v3966
      %v4024 = vadd.f32 %v3885, %v3970
      %v4025 = vmul.f32 %v4023, 0.5
      %v4026 = vmul.f32 %v4024, 0.5
      %v4027 = vtanh.pop %v4025
      %v4028 = vtanh.pop %v4026
      %v4029 = vadd.f32 %v4027, 1.0
      %v4030 = vadd.f32 %v4028, 1.0
      %v4031 = vmul.f32 %v4029, 0.5
      %v4032 = vmul.f32 %v4030, 0.5
      %v4033 = vmul.f32 %v4021, %v4007
      %v4034 = vmul.f32 %v4022, %v4010
      %v4035 = vadd.f32 %v3922, %v4033
      %v4036 = vadd.f32 %v3925, %v4034
      %v4037 = vtanh.pop %v4035
      %v4038 = vtanh.pop %v4036
      %v4039 = vsub.f32 1.0, %v4031
      %v4040 = vsub.f32 1.0, %v4032
      %v4041 = vmul.f32 %v4039, %v4037
      %v4042 = vmul.f32 %v4040, %v4038
      %v4043 = vmul.f32 %v4031, %v3702
      %v4044 = vmul.f32 %v4032, %v3703
      %v4045 = vadd.f32 %v4041, %v4043
      %v4046 = vadd.f32 %v4042, %v4044
      %vm4047 = vcmp.gt.s32.totalorder %v356, 6
      %vm4048 = vcmp.gt.s32.totalorder %v369, 6
      %v4049 = vsel %vm4047, 1, 0
      %v4050 = vsel %vm4048, 1, 0
      %vm4051 = vcmp.eq.s32.totalorder %v4049, 1
      %vm4052 = vcmp.eq.s32.totalorder %v4050, 1
      %v4053 = vsel %vm4051, %v4045, 0.0
      %v4054 = vsel %vm4052, %v4046, 0.0
      %v4055 = vadd.f32 %v3712, %v4053
      %v4056 = vadd.f32 %v3713, %v4054
      %s4057 = scalar_lea.vmem [#allocation2], 168
      %v4058 = vld [vmem:[%s4057] sm:$0xff]
      %v4059 = vld [vmem:[%s4057 + $0x8] sm:$0xf]
      %v4060 = vld [vmem:[%s4057 + $0xc] sm:$0xff]
      %v4061 = vld [vmem:[%s4057 + $0x14] sm:$0xf]
      %v4062 = vunpack.c.l.bf16 %v4058
      %v4063 = vunpack.c.h.bf16 %v4058
      %v4064 = vunpack.c.l.bf16 %v4059
      %v4065 = vunpack.c.l.bf16 %v4060
      %v4066 = vunpack.c.h.bf16 %v4060
      %v4067 = vunpack.c.l.bf16 %v4061
      %4068 = vmatprep.subr.bf16.mxu0 %v1354
      %4069 = vmatpush1.bf16.msra.mxu0 %v1353
      %4070 = vmatprep.subr.bf16.mxu0 %v1351
      %4071 = vmatpush1.bf16.msra.mxu0 %v1350
      %4072 = vmatprep.subr.bf16.mxu0 %v1348
      %4073 = vmatpush1.bf16.msra.mxu0 %v1347
      %4074 = vmatprep.subr.bf16.mxu0 %v1345
      %4075 = vmatpush1.bf16.msra.mxu0 %v1344
      %4076 = vmatprep.subr.bf16.mxu0 %v1342
      %4077 = vmatpush1.bf16.msra.mxu0 %v1341
      %4078 = vmatprep.subr.bf16.mxu0 %v1339
      %4079 = vmatpush1.bf16.msra.mxu0 %v1338
      %4080 = vmatprep.subr.bf16.mxu0 %v1336
      %4081 = vmatpush1.bf16.msra.mxu0 %v1335
      %4082 = vmatprep.subr.bf16.mxu0 %v1333
      %4083 = vmatpush1.bf16.msra.mxu0 %v1332
      %4084 = vmatprep.subr.bf16.mxu0 0
      %4085 = vmatpush2.bf16.msra.mxu0 0
      %4086 = vmatprep.subr.bf16.mxu0 0
      %4087 = vmatpush2.bf16.msra.mxu0 0
      %4088 = vmatprep.subr.bf16.mxu0 0
      %4089 = vmatpush2.bf16.msra.mxu0 0
      %4090 = vmatprep.subr.bf16.mxu0 0
      %4091 = vmatpush2.bf16.msra.mxu0 0
      %4092 = vmatprep.subr.bf16.mxu0 0
      %4093 = vmatpush2.bf16.msra.mxu0 0
      %4094 = vmatprep.subr.bf16.mxu0 0
      %4095 = vmatpush2.bf16.msra.mxu0 0
      %4096 = vmatprep.subr.bf16.mxu0 0
      %4097 = vmatpush2.bf16.msra.mxu0 0
      %4098 = vmatprep.subr.bf16.mxu0 0
      %4099 = vmatpush2.bf16.msra.mxu0 0
      %4100 = vmatprep.mubr.bf16.mxu0 0
      %4101 = vmatmul.mubr.bf16.gmra.mxu0 %v3843
      %v4102 = vpop.f32.mrf.mxu0
      %v4103 = vadd.f32 %v1240, %v4102
      %v4104 = vpop.f32.mrf.mxu0
      %v4105 = vadd.f32 %v1244, %v4104
      %v4106 = vpop.f32.mrf.mxu0
      %v4107 = vadd.f32 %v1240, %v4106
      %v4108 = vpop.f32.mrf.mxu0
      %v4109 = vadd.f32 %v1244, %v4108
      %4110 = vdwg.mxu0
      %4111 = vmatprep.subr.bf16.mxu0 0
      %4112 = vmatpush1.bf16.msra.mxu0 %v1355
      %4113 = vmatprep.subr.bf16.mxu0 0
      %4114 = vmatpush1.bf16.msra.mxu0 %v1352
      %4115 = vmatprep.subr.bf16.mxu0 0
      %4116 = vmatpush1.bf16.msra.mxu0 %v1349
      %4117 = vmatprep.subr.bf16.mxu0 0
      %4118 = vmatpush1.bf16.msra.mxu0 %v1346
      %4119 = vmatprep.subr.bf16.mxu0 0
      %4120 = vmatpush1.bf16.msra.mxu0 %v1343
      %4121 = vmatprep.subr.bf16.mxu0 0
      %4122 = vmatpush1.bf16.msra.mxu0 %v1340
      %4123 = vmatprep.subr.bf16.mxu0 0
      %4124 = vmatpush1.bf16.msra.mxu0 %v1337
      %4125 = vmatprep.subr.bf16.mxu0 0
      %4126 = vmatpush1.bf16.msra.mxu0 %v1334
      %4127 = vmatprep.subr.bf16.mxu0 0
      %4128 = vmatpush2.bf16.msra.mxu0 0
      %4129 = vmatprep.subr.bf16.mxu0 0
      %4130 = vmatpush2.bf16.msra.mxu0 0
      %4131 = vmatprep.subr.bf16.mxu0 0
      %4132 = vmatpush2.bf16.msra.mxu0 0
      %4133 = vmatprep.subr.bf16.mxu0 0
      %4134 = vmatpush2.bf16.msra.mxu0 0
      %4135 = vmatprep.subr.bf16.mxu0 0
      %4136 = vmatpush2.bf16.msra.mxu0 0
      %4137 = vmatprep.subr.bf16.mxu0 0
      %4138 = vmatpush2.bf16.msra.mxu0 0
      %4139 = vmatprep.subr.bf16.mxu0 0
      %4140 = vmatpush2.bf16.msra.mxu0 0
      %4141 = vmatprep.subr.bf16.mxu0 0
      %4142 = vmatpush2.bf16.msra.mxu0 0
      %4143 = vmatprep.mubr.bf16.mxu0 0
      %4144 = vmatmul.mubr.bf16.gmra.mxu0 %v3843
      %v4145 = vpop.f32.mrf.mxu0
      %v4146 = vadd.f32 %v1248, %v4145
      %v4147 = vpop.f32.mrf.mxu0
      %v4148 = vpop.f32.mrf.mxu0
      %v4149 = vadd.f32 %v1248, %v4148
      %v4150 = vpop.f32.mrf.mxu0
      %4151 = vdwg.mxu0
      %v4152 = vadd.f32 %v4062, %v4103
      %v4153 = vadd.f32 %v4065, %v4107
      %v4154 = vmul.f32 %v4152, 0.5
      %v4155 = vmul.f32 %v4153, 0.5
      %v4156 = vtanh.pop %v4154
      %v4157 = vtanh.pop %v4155
      %v4158 = vadd.f32 %v4156, 1.0
      %v4159 = vadd.f32 %v4157, 1.0
      %v4160 = vmul.f32 %v4158, 0.5
      %v4161 = vmul.f32 %v4159, 0.5
      %v4162 = vadd.f32 %v4063, %v4105
      %v4163 = vadd.f32 %v4066, %v4109
      %v4164 = vmul.f32 %v4162, 0.5
      %v4165 = vmul.f32 %v4163, 0.5
      %v4166 = vtanh.pop %v4164
      %v4167 = vtanh.pop %v4165
      %v4168 = vadd.f32 %v4166, 1.0
      %v4169 = vadd.f32 %v4167, 1.0
      %v4170 = vmul.f32 %v4168, 0.5
      %v4171 = vmul.f32 %v4169, 0.5
      %v4172 = vmul.f32 %v4160, %v4146
      %v4173 = vmul.f32 %v4161, %v4149
      %v4174 = vadd.f32 %v4064, %v4172
      %v4175 = vadd.f32 %v4067, %v4173
      %v4176 = vtanh.pop %v4174
      %v4177 = vtanh.pop %v4175
      %v4178 = vsub.f32 1.0, %v4170
      %v4179 = vsub.f32 1.0, %v4171
      %v4180 = vmul.f32 %v4178, %v4176
      %v4181 = vmul.f32 %v4179, %v4177
      %v4182 = vmul.f32 %v4170, %v3841
      %v4183 = vmul.f32 %v4171, %v3842
      %v4184 = vadd.f32 %v4180, %v4182
      %v4185 = vadd.f32 %v4181, %v4183
      %v4186 = vpack.c.bf16 %v4185, %v4184
      %4187 = vmatprep.subr.bf16.mxu0 %v1617
      %4188 = vmatpush1.bf16.msra.mxu0 %v1616
      %4189 = vmatprep.subr.bf16.mxu0 %v1614
      %4190 = vmatpush1.bf16.msra.mxu0 %v1613
      %4191 = vmatprep.subr.bf16.mxu0 %v1611
      %4192 = vmatpush1.bf16.msra.mxu0 %v1610
      %4193 = vmatprep.subr.bf16.mxu0 %v1608
      %4194 = vmatpush1.bf16.msra.mxu0 %v1607
      %4195 = vmatprep.subr.bf16.mxu0 %v1605
      %4196 = vmatpush1.bf16.msra.mxu0 %v1604
      %4197 = vmatprep.subr.bf16.mxu0 %v1602
      %4198 = vmatpush1.bf16.msra.mxu0 %v1601
      %4199 = vmatprep.subr.bf16.mxu0 %v1599
      %4200 = vmatpush1.bf16.msra.mxu0 %v1598
      %4201 = vmatprep.subr.bf16.mxu0 %v1596
      %4202 = vmatpush1.bf16.msra.mxu0 %v1595
      %4203 = vmatprep.subr.bf16.mxu0 0
      %4204 = vmatpush2.bf16.msra.mxu0 0
      %4205 = vmatprep.subr.bf16.mxu0 0
      %4206 = vmatpush2.bf16.msra.mxu0 0
      %4207 = vmatprep.subr.bf16.mxu0 0
      %4208 = vmatpush2.bf16.msra.mxu0 0
      %4209 = vmatprep.subr.bf16.mxu0 0
      %4210 = vmatpush2.bf16.msra.mxu0 0
      %4211 = vmatprep.subr.bf16.mxu0 0
      %4212 = vmatpush2.bf16.msra.mxu0 0
      %4213 = vmatprep.subr.bf16.mxu0 0
      %4214 = vmatpush2.bf16.msra.mxu0 0
      %4215 = vmatprep.subr.bf16.mxu0 0
      %4216 = vmatpush2.bf16.msra.mxu0 0
      %4217 = vmatprep.subr.bf16.mxu0 0
      %4218 = vmatpush2.bf16.msra.mxu0 0
      %4219 = vmatprep.mubr.bf16.mxu0 0
      %4220 = vmatmul.mubr.bf16.gmra.mxu0 %v4186
      %v4221 = vpop.f32.mrf.mxu0
      %v4222 = vadd.f32 %v1503, %v4221
      %v4223 = vpop.f32.mrf.mxu0
      %v4224 = vadd.f32 %v1507, %v4223
      %v4225 = vpop.f32.mrf.mxu0
      %v4226 = vadd.f32 %v1503, %v4225
      %v4227 = vpop.f32.mrf.mxu0
      %v4228 = vadd.f32 %v1507, %v4227
      %4229 = vdwg.mxu0
      %4230 = vmatprep.subr.bf16.mxu0 0
      %4231 = vmatpush1.bf16.msra.mxu0 %v1618
      %4232 = vmatprep.subr.bf16.mxu0 0
      %4233 = vmatpush1.bf16.msra.mxu0 %v1615
      %4234 = vmatprep.subr.bf16.mxu0 0
      %4235 = vmatpush1.bf16.msra.mxu0 %v1612
      %4236 = vmatprep.subr.bf16.mxu0 0
      %4237 = vmatpush1.bf16.msra.mxu0 %v1609
      %4238 = vmatprep.subr.bf16.mxu0 0
      %4239 = vmatpush1.bf16.msra.mxu0 %v1606
      %4240 = vmatprep.subr.bf16.mxu0 0
      %4241 = vmatpush1.bf16.msra.mxu0 %v1603
      %4242 = vmatprep.subr.bf16.mxu0 0
      %4243 = vmatpush1.bf16.msra.mxu0 %v1600
      %4244 = vmatprep.subr.bf16.mxu0 0
      %4245 = vmatpush1.bf16.msra.mxu0 %v1597
      %4246 = vmatprep.subr.bf16.mxu0 0
      %4247 = vmatpush2.bf16.msra.mxu0 0
      %4248 = vmatprep.subr.bf16.mxu0 0
      %4249 = vmatpush2.bf16.msra.mxu0 0
      %4250 = vmatprep.subr.bf16.mxu0 0
      %4251 = vmatpush2.bf16.msra.mxu0 0
      %4252 = vmatprep.subr.bf16.mxu0 0
      %4253 = vmatpush2.bf16.msra.mxu0 0
      %4254 = vmatprep.subr.bf16.mxu0 0
      %4255 = vmatpush2.bf16.msra.mxu0 0
      %4256 = vmatprep.subr.bf16.mxu0 0
      %4257 = vmatpush2.bf16.msra.mxu0 0
      %4258 = vmatprep.subr.bf16.mxu0 0
      %4259 = vmatpush2.bf16.msra.mxu0 0
      %4260 = vmatprep.subr.bf16.mxu0 0
      %4261 = vmatpush2.bf16.msra.mxu0 0
      %4262 = vmatprep.mubr.bf16.mxu0 0
      %4263 = vmatmul.mubr.bf16.gmra.mxu0 %v4186
      %v4264 = vpop.f32.mrf.mxu0
      %v4265 = vadd.f32 %v1511, %v4264
      %v4266 = vpop.f32.mrf.mxu0
      %v4267 = vpop.f32.mrf.mxu0
      %v4268 = vadd.f32 %v1511, %v4267
      %v4269 = vpop.f32.mrf.mxu0
      %4270 = vdwg.mxu0
      %v4271 = vpack.c.bf16 %v4046, %v4045
      %4272 = vmatprep.subr.bf16.mxu0 %v1845
      %4273 = vmatpush1.bf16.msra.mxu0 %v1844
      %4274 = vmatprep.subr.bf16.mxu0 %v1842
      %4275 = vmatpush1.bf16.msra.mxu0 %v1841
      %4276 = vmatprep.subr.bf16.mxu0 %v1839
      %4277 = vmatpush1.bf16.msra.mxu0 %v1838
      %4278 = vmatprep.subr.bf16.mxu0 %v1836
      %4279 = vmatpush1.bf16.msra.mxu0 %v1835
      %4280 = vmatprep.subr.bf16.mxu0 %v1833
      %4281 = vmatpush1.bf16.msra.mxu0 %v1832
      %4282 = vmatprep.subr.bf16.mxu0 %v1830
      %4283 = vmatpush1.bf16.msra.mxu0 %v1829
      %4284 = vmatprep.subr.bf16.mxu0 %v1827
      %4285 = vmatpush1.bf16.msra.mxu0 %v1826
      %4286 = vmatprep.subr.bf16.mxu0 %v1824
      %4287 = vmatpush1.bf16.msra.mxu0 %v1823
      %4288 = vmatprep.subr.bf16.mxu0 0
      %4289 = vmatpush2.bf16.msra.mxu0 0
      %4290 = vmatprep.subr.bf16.mxu0 0
      %4291 = vmatpush2.bf16.msra.mxu0 0
      %4292 = vmatprep.subr.bf16.mxu0 0
      %4293 = vmatpush2.bf16.msra.mxu0 0
      %4294 = vmatprep.subr.bf16.mxu0 0
      %4295 = vmatpush2.bf16.msra.mxu0 0
      %4296 = vmatprep.subr.bf16.mxu0 0
      %4297 = vmatpush2.bf16.msra.mxu0 0
      %4298 = vmatprep.subr.bf16.mxu0 0
      %4299 = vmatpush2.bf16.msra.mxu0 0
      %4300 = vmatprep.subr.bf16.mxu0 0
      %4301 = vmatpush2.bf16.msra.mxu0 0
      %4302 = vmatprep.subr.bf16.mxu0 0
      %4303 = vmatpush2.bf16.msra.mxu0 0
      %4304 = vmatprep.mubr.bf16.mxu0 0
      %4305 = vmatmul.mubr.bf16.gmra.mxu0 %v4271
      %v4306 = vpop.f32.mrf.mxu0
      %v4307 = vadd.f32 %v1731, %v4306
      %v4308 = vpop.f32.mrf.mxu0
      %v4309 = vadd.f32 %v1735, %v4308
      %v4310 = vpop.f32.mrf.mxu0
      %v4311 = vadd.f32 %v1731, %v4310
      %v4312 = vpop.f32.mrf.mxu0
      %v4313 = vadd.f32 %v1735, %v4312
      %4314 = vdwg.mxu0
      %4315 = vmatprep.subr.bf16.mxu0 0
      %4316 = vmatpush1.bf16.msra.mxu0 %v1846
      %4317 = vmatprep.subr.bf16.mxu0 0
      %4318 = vmatpush1.bf16.msra.mxu0 %v1843
      %4319 = vmatprep.subr.bf16.mxu0 0
      %4320 = vmatpush1.bf16.msra.mxu0 %v1840
      %4321 = vmatprep.subr.bf16.mxu0 0
      %4322 = vmatpush1.bf16.msra.mxu0 %v1837
      %4323 = vmatprep.subr.bf16.mxu0 0
      %4324 = vmatpush1.bf16.msra.mxu0 %v1834
      %4325 = vmatprep.subr.bf16.mxu0 0
      %4326 = vmatpush1.bf16.msra.mxu0 %v1831
      %4327 = vmatprep.subr.bf16.mxu0 0
      %4328 = vmatpush1.bf16.msra.mxu0 %v1828
      %4329 = vmatprep.subr.bf16.mxu0 0
      %4330 = vmatpush1.bf16.msra.mxu0 %v1825
      %4331 = vmatprep.subr.bf16.mxu0 0
      %4332 = vmatpush2.bf16.msra.mxu0 0
      %4333 = vmatprep.subr.bf16.mxu0 0
      %4334 = vmatpush2.bf16.msra.mxu0 0
      %4335 = vmatprep.subr.bf16.mxu0 0
      %4336 = vmatpush2.bf16.msra.mxu0 0
      %4337 = vmatprep.subr.bf16.mxu0 0
      %4338 = vmatpush2.bf16.msra.mxu0 0
      %4339 = vmatprep.subr.bf16.mxu0 0
      %4340 = vmatpush2.bf16.msra.mxu0 0
      %4341 = vmatprep.subr.bf16.mxu0 0
      %4342 = vmatpush2.bf16.msra.mxu0 0
      %4343 = vmatprep.subr.bf16.mxu0 0
      %4344 = vmatpush2.bf16.msra.mxu0 0
      %4345 = vmatprep.subr.bf16.mxu0 0
      %4346 = vmatpush2.bf16.msra.mxu0 0
      %4347 = vmatprep.mubr.bf16.mxu0 0
      %4348 = vmatmul.mubr.bf16.gmra.mxu0 %v4271
      %v4349 = vpop.f32.mrf.mxu0
      %v4350 = vadd.f32 %v1739, %v4349
      %v4351 = vpop.f32.mrf.mxu0
      %v4352 = vpop.f32.mrf.mxu0
      %v4353 = vadd.f32 %v1739, %v4352
      %v4354 = vpop.f32.mrf.mxu0
      %4355 = vdwg.mxu0
      %v4356 = vadd.f32 %v4222, %v4307
      %v4357 = vadd.f32 %v4226, %v4311
      %v4358 = vmul.f32 %v4356, 0.5
      %v4359 = vmul.f32 %v4357, 0.5
      %v4360 = vtanh.pop %v4358
      %v4361 = vtanh.pop %v4359
      %v4362 = vadd.f32 %v4360, 1.0
      %v4363 = vadd.f32 %v4361, 1.0
      %v4364 = vmul.f32 %v4362, 0.5
      %v4365 = vmul.f32 %v4363, 0.5
      %v4366 = vadd.f32 %v4224, %v4309
      %v4367 = vadd.f32 %v4228, %v4313
      %v4368 = vmul.f32 %v4366, 0.5
      %v4369 = vmul.f32 %v4367, 0.5
      %v4370 = vtanh.pop %v4368
      %v4371 = vtanh.pop %v4369
      %v4372 = vadd.f32 %v4370, 1.0
      %v4373 = vadd.f32 %v4371, 1.0
      %v4374 = vmul.f32 %v4372, 0.5
      %v4375 = vmul.f32 %v4373, 0.5
      %v4376 = vmul.f32 %v4364, %v4350
      %v4377 = vmul.f32 %v4365, %v4353
      %v4378 = vadd.f32 %v4265, %v4376
      %v4379 = vadd.f32 %v4268, %v4377
      %v4380 = vtanh.pop %v4378
      %v4381 = vtanh.pop %v4379
      %v4382 = vsub.f32 1.0, %v4374
      %v4383 = vsub.f32 1.0, %v4375
      %v4384 = vmul.f32 %v4382, %v4380
      %v4385 = vmul.f32 %v4383, %v4381
      %v4386 = vmul.f32 %v4374, %v4045
      %v4387 = vmul.f32 %v4375, %v4046
      %v4388 = vadd.f32 %v4384, %v4386
      %v4389 = vadd.f32 %v4385, %v4387
      %vm4390 = vcmp.gt.s32.totalorder %v356, 7
      %vm4391 = vcmp.gt.s32.totalorder %v369, 7
      %v4392 = vsel %vm4390, 1, 0
      %v4393 = vsel %vm4391, 1, 0
      %vm4394 = vcmp.eq.s32.totalorder %v4392, 1
      %vm4395 = vcmp.eq.s32.totalorder %v4393, 1
      %v4396 = vsel %vm4394, %v4388, 0.0
      %v4397 = vsel %vm4395, %v4389, 0.0
      %v4398 = vadd.f32 %v4055, %v4396
      %v4399 = vadd.f32 %v4056, %v4397
      %v4400 = vcvt.s32.f32 %v356
      %v4401 = vcvt.s32.f32 %v369
      %v4402 = vmax.f32 %v4400, 1.0
      %v4403 = vmax.f32 %v4401, 1.0
      %v4404 = vrcp.pop %v4402
      %v4405 = vmul.f32 %v4398, %v4404
      %v4406 = vrcp.pop %v4403
      %v4407 = vmul.f32 %v4399, %v4406
      %4408 = vst [vmem:[%s334] sm:$0xff] %v4405
      %4409 = vst [vmem:[%s334 + $0x8] sm:$0xff] %v4407
      %s4410 = smul.u32 2, %s20
      %p4411 = scmp.lt.s32.totalorder %s4410, 3
      %s4412 = scalar_select %p4411, %s4410, 3
      %s4413 = smul.addr %s4412, 8
      %s4414 = scalar_lea.vmem %s9, %s4413
      // Predicated region
      $region57: #{forward.2} parent=55 // pred_check
        %p4415 = pneg %p232
      $region58: #{forward.2} parent=55 // pred_check_branch
        %4417 = sbr.rel (%p4415) target = $region60
      $region59: #{forward.2} parent=55 // pred_region
        %s4418 = smul.u32 2, %s20
      $region60: #{forward.2} parent=55 // pred_fallthru
        _
    $region56: #{forward.2} parent=5 // pred_fallthru
      _
    %p4419 = scmp.le.s32.totalorder 2, %s15
    // Predicated region
    $region61: #{forward.2} parent=5 // pred_check
      %p4420 = pneg %p4419
    $region62: #{forward.2} parent=5 // pred_check_branch
      %4422 = sbr.rel (%p4420) target = $region64
    $region63: #{forward.2} parent=5 // pred_region
      %s4423 = ssub.s32 %s15, 2
      // Predicated region
      $region65: #{forward.2} parent=63 // pred_check
        %p4424 = pneg %p238
      $region66: #{forward.2} parent=63 // pred_check_branch
        %4426 = sbr.rel (%p4424) target = $region68
      $region67: #{forward.2} parent=63 // pred_region
        %s4427 = smul.u32 2, %s21
        %p4428 = scmp.lt.s32.totalorder %s4427, 3
        %s4429 = scalar_select %p4428, %s4427, 3
        %s4430 = smul.addr %s4429, 8
        %s4431 = scalar_lea.vmem %s9, %s4430
      $region68: #{forward.2} parent=63 // pred_fallthru
        _
    $region64: #{forward.2} parent=5 // pred_fallthru
      _
  $region6: #{forward.2} parent=0 // loop_footer
    %s19 = sadd.s32 1, %s15
  $region7: #{forward.2} parent=0 // loop_footer_branch
    %14 = sbr.rel target = $region3
  $region8: #{forward.2} parent=0 // loop_exit
    _

</llo_original>
